<compile_context>
chip_gen: v6e
topology: v6e:2x2x1
jax: 0.10.0
libtpu: 0.0.40
codegen_flags: <defaults>
</compile_context>

<pallas_src>
import functools

import jax
import jax.numpy as jnp
from jax import lax
from jax.experimental import pallas as pl
from jax.experimental.pallas import tpu as pltpu

K = 4  # conv-transpose kernel size used by every spatial layer


# ---------------------------------------------------------------------------
# Pallas kernels: bf16 matmul with f32 accumulation (+ optional shift / ReLU)
# ---------------------------------------------------------------------------
def _matmul_kernel(x_ref, w_ref, o_ref, *, act):
    y = jnp.dot(x_ref[...], w_ref[...], preferred_element_type=jnp.float32)
    if act == "relu":
        y = jnp.maximum(y, 0.0)
    o_ref[...] = y.astype(o_ref.dtype)


def _matmul_shift_act_kernel(x_ref, w_ref, t_ref, o_ref, *, act):
    y = jnp.dot(x_ref[...], w_ref[...], preferred_element_type=jnp.float32)
    y = y + t_ref[...]          # folded (bias * bn_scale + bn_shift), f32
    if act == "relu":
        y = jnp.maximum(y, 0.0)
    o_ref[...] = y.astype(o_ref.dtype)


def _pick_block_m(m):
    # Largest row tile (<=1024) that divides M while keeping >=2 grid steps
    # (so v7x can shard across its two TensorCores).  Fall back to the full M.
    for bm in (1024, 512, 256, 128, 64, 32, 16, 8):
        if m % bm == 0 and m // bm >= 2:
            return bm
    return m


def fused_matmul(x, w, shift=None, act=None, out_dtype=jnp.float32):
    """y = act(x @ w [+ shift]); x/w fed to the MXU in bf16, f32 accumulation."""
    m, kd = x.shape
    n = w.shape[1]
    bm = _pick_block_m(m)
    grid = (m // bm,)

    in_specs = [
        pl.BlockSpec((bm, kd), lambda i: (i, 0)),
        pl.BlockSpec((kd, n), lambda i: (0, 0)),
    ]
    args = [x.astype(jnp.bfloat16), w.astype(jnp.bfloat16)]
    if shift is not None:
        kernel = functools.partial(_matmul_shift_act_kernel, act=act)
        in_specs.append(pl.BlockSpec((1, n), lambda i: (0, 0)))
        args.append(shift.reshape(1, n).astype(jnp.float32))
    else:
        kernel = functools.partial(_matmul_kernel, act=act)

    bytes_out = m * n * jnp.dtype(out_dtype).itemsize
    cost = pl.CostEstimate(
        flops=2 * m * kd * n,
        transcendentals=0,
        bytes_accessed=m * kd * 2 + kd * n * 2 + bytes_out
        + (n * 4 if shift is not None else 0),
    )

    return pl.pallas_call(
        kernel,
        out_shape=jax.ShapeDtypeStruct((m, n), out_dtype),
        grid=grid,
        in_specs=in_specs,
        out_specs=pl.BlockSpec((bm, n), lambda i: (i, 0)),
        compiler_params=pltpu.CompilerParams(dimension_semantics=("parallel",)),
        cost_estimate=cost,
    )(*args)


# ---------------------------------------------------------------------------
# ConvTranspose2d(k=4, s=2, p=1): Pallas patch matmul + JAX overlap-add epilogue
# ---------------------------------------------------------------------------
def _overlap_add_2x(patches, B, Hin, Win, Cout):
    """col2im for k=4, stride=2, pad=1: patches (B*Hin*Win, 16*Cout) -> (B, 2Hin, 2Win, Cout).

    Output row p = 2*i + ky - 1, so:
      even rows 2m   <- ky=1 @ i=m  and ky=3 @ i=m-1
      odd  rows 2m+1 <- ky=2 @ i=m  and ky=0 @ i=m+1
    (same decomposition along columns / kx).
    """
    y = patches.reshape(B, Hin, Win, K, K, Cout)

    zrow = jnp.zeros((B, 1, Win, K, Cout), y.dtype)
    even = y[:, :, :, 1] + jnp.concatenate([zrow, y[:, :-1, :, 3]], axis=1)
    odd = y[:, :, :, 2] + jnp.concatenate([y[:, 1:, :, 0], zrow], axis=1)
    rows = jnp.stack([even, odd], axis=2).reshape(B, 2 * Hin, Win, K, Cout)

    zcol = jnp.zeros((B, 2 * Hin, 1, Cout), rows.dtype)
    even_c = rows[:, :, :, 1] + jnp.concatenate([zcol, rows[:, :, :-1, 3]], axis=2)
    odd_c = rows[:, :, :, 2] + jnp.concatenate([rows[:, :, 1:, 0], zcol], axis=2)
    return jnp.stack([even_c, odd_c], axis=3).reshape(B, 2 * Hin, 2 * Win, Cout)


def conv_transpose_s2_p1(x_nhwc, w_t, bias, bn_scale, bn_shift, act, out_dtype=jnp.bfloat16):
    """x_nhwc: (B, Hin, Win, Cin); w_t: PyTorch ConvTranspose2d weight (Cin, Cout, 4, 4)."""
    B, Hin, Win, Cin = x_nhwc.shape
    Cout = w_t.shape[1]

    # Fold BN scale into the (unflipped) transposed-conv weight; column order (ky, kx, cout).
    wm = jnp.transpose(w_t * bn_scale[None, :, None, None], (0, 2, 3, 1)).reshape(Cin, K * K * Cout)

    # Hot path in Pallas: X(B*Hin*Win, Cin) @ W(Cin, 16*Cout), lane-dense output.
    x2d = x_nhwc.reshape(B * Hin * Win, Cin)
    patches = fused_matmul(x2d, wm)  # f32 (B*Hin*Win, 16*Cout)

    # Layout glue in JAX: overlap-add the 4x4 / stride-2 patches, then shift + activation.
    out = _overlap_add_2x(patches, B, Hin, Win, Cout)
    out = out + (bias * bn_scale + bn_shift)
    if act == "relu":
        out = jnp.maximum(out, 0.0)
    elif act == "sigmoid":
        out = jax.nn.sigmoid(out)
    return out.astype(out_dtype)


def bn_affine(gamma, beta, mean, var, eps=1e-5):
    scale = gamma / jnp.sqrt(var + eps)
    shift = beta - mean * scale
    return scale, shift


# ---------------------------------------------------------------------------
# Full decoder forward (Pallas path)
# ---------------------------------------------------------------------------
def conv_decoder_forward(z, params):
    B = z.shape[0]

    # ReshapeBlock([D,1,1]) + ConvTranspose2d(D,128,1x1) == dense; BN/bias folded, ReLU in-kernel.
    s1, t1 = bn_affine(*params["bn1"])
    w1 = params["w1"][:, :, 0, 0] * s1[None, :]
    h = fused_matmul(z, w1, params["b1"] * s1 + t1, act="relu", out_dtype=jnp.bfloat16)  # (B,128)

    # ConvTranspose2d(128,64,4x4,s1) on a 1x1 map == dense to all 16 output positions.
    s2, t2 = bn_affine(*params["bn2"])
    w2 = jnp.transpose(params["w2"] * s2[None, :, None, None], (0, 2, 3, 1)).reshape(128, K * K * 64)
    h = fused_matmul(h, w2, jnp.tile(params["b2"] * s2 + t2, K * K), act="relu",
                     out_dtype=jnp.bfloat16).reshape(B, 4, 4, 64)

    # Three ConvTranspose2d(k4,s2,p1) + BN + ReLU blocks.
    s3, t3 = bn_affine(*params["bn3"])
    h = conv_transpose_s2_p1(h, params["w3"], params["b3"], s3, t3, "relu")   # (B, 8, 8, 32)
    s4, t4 = bn_affine(*params["bn4"])
    h = conv_transpose_s2_p1(h, params["w4"], params["b4"], s4, t4, "relu")   # (B,16,16,32)
    s5, t5 = bn_affine(*params["bn5"])
    h = conv_transpose_s2_p1(h, params["w5"], params["b5"], s5, t5, "relu")   # (B,32,32,32)

    # Final ConvTranspose2d(k4,s2,p1) + Sigmoid (no BN -> scale=1, shift=0).
    cout = params["w6"].shape[1]
    ones = jnp.ones((cout,), jnp.float32)
    zeros = jnp.zeros((cout,), jnp.float32)
    h = conv_transpose_s2_p1(h, params["w6"], params["b6"], ones, zeros, "sigmoid",
                             out_dtype=jnp.float32)                           # (B,64,64,out)

    return jnp.transpose(h, (0, 3, 1, 2))  # back to PyTorch NCHW


# ---------------------------------------------------------------------------
# Pure-JAX reference (XLA convs, f32 HIGHEST) for correctness checking
# ---------------------------------------------------------------------------
def conv_decoder_reference(z, params):
    def bn_relu(x, bn):
        s, t = bn_affine(*bn)
        return jnp.maximum(x * s + t, 0.0)

    h = jnp.dot(z, params["w1"][:, :, 0, 0], precision=lax.Precision.HIGHEST) + params["b1"]
    h = bn_relu(h, params["bn1"])
    h = jnp.einsum("bi,iohw->bhwo", h, params["w2"], precision=lax.Precision.HIGHEST) + params["b2"]
    h = bn_relu(h, params["bn2"])

    def ct(x, w, b):
        wf = jnp.transpose(w, (2, 3, 0, 1))[::-1, ::-1]
        y = lax.conv_general_dilated(
            x, wf, window_strides=(1, 1), padding=((2, 2), (2, 2)),
            lhs_dilation=(2, 2), dimension_numbers=("NHWC", "HWIO", "NHWC"),
            precision=lax.Precision.HIGHEST)
        return y + b

    h = bn_relu(ct(h, params["w3"], params["b3"]), params["bn3"])
    h = bn_relu(ct(h, params["w4"], params["b4"]), params["bn4"])
    h = bn_relu(ct(h, params["w5"], params["b5"]), params["bn5"])
    h = jax.nn.sigmoid(ct(h, params["w6"], params["b6"]))
    return jnp.transpose(h, (0, 3, 1, 2))


# ---------------------------------------------------------------------------
# Deterministic parameter init (shapes from the module's __init__)
# ---------------------------------------------------------------------------
def init_params(key, input_dim, output_dim):
    keys = iter(jax.random.split(key, 40))

    def wconv(cin, cout, k):
        fan = cin * k * k
        return jax.random.normal(next(keys), (cin, cout, k, k), jnp.float32) * (0.5 / fan ** 0.5)

    def bias(c):
        return jax.random.normal(next(keys), (c,), jnp.float32) * 0.02

    def bn(c):
        gamma = 1.0 + 0.1 * jax.random.normal(next(keys), (c,), jnp.float32)
        beta = 0.1 * jax.random.normal(next(keys), (c,), jnp.float32)
        mean = 0.1 * jax.random.normal(next(keys), (c,), jnp.float32)
        var = jax.random.uniform(next(keys), (c,), jnp.float32, 0.5, 1.5)
        return (gamma, beta, mean, var)

    p = {}
    p["w1"], p["b1"], p["bn1"] = wconv(input_dim, 128, 1), bias(128), bn(128)
    p["w2"], p["b2"], p["bn2"] = wconv(128, 64, 4), bias(64), bn(64)
    p["w3"], p["b3"], p["bn3"] = wconv(64, 32, 4), bias(32), bn(32)
    p["w4"], p["b4"], p["bn4"] = wconv(32, 32, 4), bias(32), bn(32)
    p["w5"], p["b5"], p["bn5"] = wconv(32, 32, 4), bias(32), bn(32)
    p["w6"], p["b6"] = wconv(32, output_dim, 4), bias(output_dim)
    return p


if __name__ == "__main__":
    input_dim, output_dim, batch = 64, 3, 2
    key = jax.random.PRNGKey(0)
    kz, kp = jax.random.split(key)
    params = init_params(kp, input_dim, output_dim)
    z = jax.random.normal(kz, (batch, input_dim), jnp.float32)

    out = jax.jit(conv_decoder_forward)(z, params)
    out = jax.block_until_ready(out)

    assert out.shape == (batch, output_dim, 64, 64), out.shape

    ref = conv_decoder_reference(z, params)
    err = float(jnp.max(jnp.abs(out - ref)))
    assert err < 1e-2, f"max abs err too large: {err}"

    print("KERNEL_OK")
</pallas_src>

<mosaic_0001>
module attributes {stable_mosaic.version = 11 : i64} {
  func.func @_matmul_shift_act_kernel(%arg0: i32, %arg1: memref<2x64xbf16, #tpu.memory_space<vmem>>, %arg2: memref<64x128xbf16, #tpu.memory_space<vmem>>, %arg3: memref<1x128xf32, #tpu.memory_space<vmem>>, %arg4: memref<2x128xbf16, #tpu.memory_space<vmem>>) attributes {dimension_semantics = [#tpu.dimension_semantics<parallel>], iteration_bounds = array<i64: 1>, scalar_prefetch = 0 : i64, scratch_operands = 0 : i64, tpu.core_type = #tpu.core_type<tc>, window_params = [{transform_indices = @transform_0, window_bounds = array<i64: 2, 64>}, {pipeline_mode = #tpu.pipeline_mode<synchronous>, transform_indices = @transform_1, window_bounds = array<i64: 64, 128>}, {pipeline_mode = #tpu.pipeline_mode<synchronous>, transform_indices = @transform_2, window_bounds = array<i64: 1, 128>}, {transform_indices = @transform_3, window_bounds = array<i64: 2, 128>}]} {
    %c0 = arith.constant 0 : index
    %c0_0 = arith.constant 0 : index
    %0 = vector.load %arg1[%c0, %c0_0] : memref<2x64xbf16, #tpu.memory_space<vmem>>, vector<2x64xbf16>
    %c0_1 = arith.constant 0 : index
    %c0_2 = arith.constant 0 : index
    %1 = vector.load %arg2[%c0_1, %c0_2] : memref<64x128xbf16, #tpu.memory_space<vmem>>, vector<64x128xbf16>
    %cst = arith.constant dense<0.000000e+00> : vector<2x128xf32>
    %2 = tpu.matmul %0, %1, %cst {dimension_numbers = #tpu.dot_dimension_numbers<[1], [0], [0], [1], [0, 0, 1, 1], [], []>} : vector<2x64xbf16>, vector<64x128xbf16>, vector<2x128xf32> -> vector<2x128xf32>
    %c0_3 = arith.constant 0 : index
    %c0_4 = arith.constant 0 : index
    %3 = vector.load %arg3[%c0_3, %c0_4] : memref<1x128xf32, #tpu.memory_space<vmem>>, vector<1x128xf32>
    %4 = vector.broadcast %3 : vector<1x128xf32> to vector<2x128xf32>
    %5 = arith.addf %2, %4 : vector<2x128xf32>
    %cst_5 = arith.constant 0.000000e+00 : f32
    %6 = vector.broadcast %cst_5 : f32 to vector<2x128xf32>
    %7 = arith.maximumf %5, %6 : vector<2x128xf32>
    %8 = arith.truncf %7 : vector<2x128xf32> to vector<2x128xbf16>
    %c0_6 = arith.constant 0 : index
    %c0_7 = arith.constant 0 : index
    %9 = vector.load %arg4[%c0_6, %c0_7] : memref<2x128xbf16, #tpu.memory_space<vmem>>, vector<2x128xbf16>
    tpu.vector_store %arg4[%c0_6, %c0_7], %8 {strides = array<i32>} : memref<2x128xbf16, #tpu.memory_space<vmem>>, vector<2x128xbf16>,
    return
  }
  func.func @transform_0(%arg0: i32) -> (i32, i32) {
    %c0_i32 = arith.constant 0 : i32
    %c0_i32_0 = arith.constant 0 : i32
    return %arg0, %c0_i32 : i32, i32
  }
  func.func @transform_1(%arg0: i32) -> (i32, i32) {
    %c0_i32 = arith.constant 0 : i32
    %c0_i32_0 = arith.constant 0 : i32
    %c0_i32_1 = arith.constant 0 : i32
    return %c0_i32, %c0_i32_0 : i32, i32
  }
  func.func @transform_2(%arg0: i32) -> (i32, i32) {
    %c0_i32 = arith.constant 0 : i32
    %c0_i32_0 = arith.constant 0 : i32
    %c0_i32_1 = arith.constant 0 : i32
    return %c0_i32, %c0_i32_0 : i32, i32
  }
  func.func @transform_3(%arg0: i32) -> (i32, i32) {
    %c0_i32 = arith.constant 0 : i32
    %c0_i32_0 = arith.constant 0 : i32
    return %arg0, %c0_i32 : i32, i32
  }
}

module attributes {stable_mosaic.version = 11 : i64} {
  func.func @_matmul_shift_act_kernel(%arg0: i32, %arg1: memref<2x128xbf16, #tpu.memory_space<vmem>>, %arg2: memref<128x1024xbf16, #tpu.memory_space<vmem>>, %arg3: memref<1x1024xf32, #tpu.memory_space<vmem>>, %arg4: memref<2x1024xbf16, #tpu.memory_space<vmem>>) attributes {dimension_semantics = [#tpu.dimension_semantics<parallel>], iteration_bounds = array<i64: 1>, scalar_prefetch = 0 : i64, scratch_operands = 0 : i64, tpu.core_type = #tpu.core_type<tc>, window_params = [{transform_indices = @transform_0, window_bounds = array<i64: 2, 128>}, {pipeline_mode = #tpu.pipeline_mode<synchronous>, transform_indices = @transform_1, window_bounds = array<i64: 128, 1024>}, {pipeline_mode = #tpu.pipeline_mode<synchronous>, transform_indices = @transform_2, window_bounds = array<i64: 1, 1024>}, {transform_indices = @transform_3, window_bounds = array<i64: 2, 1024>}]} {
    %c0 = arith.constant 0 : index
    %c0_0 = arith.constant 0 : index
    %0 = vector.load %arg1[%c0, %c0_0] : memref<2x128xbf16, #tpu.memory_space<vmem>>, vector<2x128xbf16>
    %c0_1 = arith.constant 0 : index
    %c0_2 = arith.constant 0 : index
    %1 = vector.load %arg2[%c0_1, %c0_2] : memref<128x1024xbf16, #tpu.memory_space<vmem>>, vector<128x1024xbf16>
    %cst = arith.constant dense<0.000000e+00> : vector<2x1024xf32>
    %2 = tpu.matmul %0, %1, %cst {dimension_numbers = #tpu.dot_dimension_numbers<[1], [0], [0], [1], [0, 0, 1, 1], [], []>} : vector<2x128xbf16>, vector<128x1024xbf16>, vector<2x1024xf32> -> vector<2x1024xf32>
    %c0_3 = arith.constant 0 : index
    %c0_4 = arith.constant 0 : index
    %3 = vector.load %arg3[%c0_3, %c0_4] : memref<1x1024xf32, #tpu.memory_space<vmem>>, vector<1x1024xf32>
    %4 = vector.broadcast %3 : vector<1x1024xf32> to vector<2x1024xf32>
    %5 = arith.addf %2, %4 : vector<2x1024xf32>
    %cst_5 = arith.constant 0.000000e+00 : f32
    %6 = vector.broadcast %cst_5 : f32 to vector<2x1024xf32>
    %7 = arith.maximumf %5, %6 : vector<2x1024xf32>
    %8 = arith.truncf %7 : vector<2x1024xf32> to vector<2x1024xbf16>
    %c0_6 = arith.constant 0 : index
    %c0_7 = arith.constant 0 : index
    %9 = vector.load %arg4[%c0_6, %c0_7] : memref<2x1024xbf16, #tpu.memory_space<vmem>>, vector<2x1024xbf16>
    tpu.vector_store %arg4[%c0_6, %c0_7], %8 {strides = array<i32>} : memref<2x1024xbf16, #tpu.memory_space<vmem>>, vector<2x1024xbf16>,
    return
  }
  func.func @transform_0(%arg0: i32) -> (i32, i32) {
    %c0_i32 = arith.constant 0 : i32
    %c0_i32_0 = arith.constant 0 : i32
    return %arg0, %c0_i32 : i32, i32
  }
  func.func @transform_1(%arg0: i32) -> (i32, i32) {
    %c0_i32 = arith.constant 0 : i32
    %c0_i32_0 = arith.constant 0 : i32
    %c0_i32_1 = arith.constant 0 : i32
    return %c0_i32, %c0_i32_0 : i32, i32
  }
  func.func @transform_2(%arg0: i32) -> (i32, i32) {
    %c0_i32 = arith.constant 0 : i32
    %c0_i32_0 = arith.constant 0 : i32
    %c0_i32_1 = arith.constant 0 : i32
    return %c0_i32, %c0_i32_0 : i32, i32
  }
  func.func @transform_3(%arg0: i32) -> (i32, i32) {
    %c0_i32 = arith.constant 0 : i32
    %c0_i32_0 = arith.constant 0 : i32
    return %arg0, %c0_i32 : i32, i32
  }
}

module attributes {stable_mosaic.version = 11 : i64} {
  func.func @_matmul_kernel(%arg0: i32, %arg1: memref<16x64xbf16, #tpu.memory_space<vmem>>, %arg2: memref<64x512xbf16, #tpu.memory_space<vmem>>, %arg3: memref<16x512xf32, #tpu.memory_space<vmem>>) attributes {dimension_semantics = [#tpu.dimension_semantics<parallel>], iteration_bounds = array<i64: 2>, scalar_prefetch = 0 : i64, scratch_operands = 0 : i64, tpu.core_type = #tpu.core_type<tc>, window_params = [{transform_indices = @transform_0, window_bounds = array<i64: 16, 64>}, {pipeline_mode = #tpu.pipeline_mode<synchronous>, transform_indices = @transform_1, window_bounds = array<i64: 64, 512>}, {transform_indices = @transform_2, window_bounds = array<i64: 16, 512>}]} {
    %c0 = arith.constant 0 : index
    %c0_0 = arith.constant 0 : index
    %0 = vector.load %arg1[%c0, %c0_0] : memref<16x64xbf16, #tpu.memory_space<vmem>>, vector<16x64xbf16>
    %c0_1 = arith.constant 0 : index
    %c0_2 = arith.constant 0 : index
    %1 = vector.load %arg2[%c0_1, %c0_2] : memref<64x512xbf16, #tpu.memory_space<vmem>>, vector<64x512xbf16>
    %cst = arith.constant dense<0.000000e+00> : vector<16x512xf32>
    %2 = tpu.matmul %0, %1, %cst {dimension_numbers = #tpu.dot_dimension_numbers<[1], [0], [0], [1], [0, 0, 1, 1], [], []>} : vector<16x64xbf16>, vector<64x512xbf16>, vector<16x512xf32> -> vector<16x512xf32>
    %c0_3 = arith.constant 0 : index
    %c0_4 = arith.constant 0 : index
    %3 = vector.load %arg3[%c0_3, %c0_4] : memref<16x512xf32, #tpu.memory_space<vmem>>, vector<16x512xf32>
    tpu.vector_store %arg3[%c0_3, %c0_4], %2 {strides = array<i32>} : memref<16x512xf32, #tpu.memory_space<vmem>>, vector<16x512xf32>,
    return
  }
  func.func @transform_0(%arg0: i32) -> (i32, i32) {
    %c0_i32 = arith.constant 0 : i32
    %c0_i32_0 = arith.constant 0 : i32
    return %arg0, %c0_i32 : i32, i32
  }
  func.func @transform_1(%arg0: i32) -> (i32, i32) {
    %c0_i32 = arith.constant 0 : i32
    %c0_i32_0 = arith.constant 0 : i32
    %c0_i32_1 = arith.constant 0 : i32
    return %c0_i32, %c0_i32_0 : i32, i32
  }
  func.func @transform_2(%arg0: i32) -> (i32, i32) {
    %c0_i32 = arith.constant 0 : i32
    %c0_i32_0 = arith.constant 0 : i32
    return %arg0, %c0_i32 : i32, i32
  }
}

module attributes {stable_mosaic.version = 11 : i64} {
  func.func @_matmul_kernel(%arg0: i32, %arg1: memref<64x32xbf16, #tpu.memory_space<vmem>>, %arg2: memref<32x512xbf16, #tpu.memory_space<vmem>>, %arg3: memref<64x512xf32, #tpu.memory_space<vmem>>) attributes {dimension_semantics = [#tpu.dimension_semantics<parallel>], iteration_bounds = array<i64: 2>, scalar_prefetch = 0 : i64, scratch_operands = 0 : i64, tpu.core_type = #tpu.core_type<tc>, window_params = [{transform_indices = @transform_0, window_bounds = array<i64: 64, 32>}, {pipeline_mode = #tpu.pipeline_mode<synchronous>, transform_indices = @transform_1, window_bounds = array<i64: 32, 512>}, {transform_indices = @transform_2, window_bounds = array<i64: 64, 512>}]} {
    %c0 = arith.constant 0 : index
    %c0_0 = arith.constant 0 : index
    %0 = vector.load %arg1[%c0, %c0_0] : memref<64x32xbf16, #tpu.memory_space<vmem>>, vector<64x32xbf16>
    %c0_1 = arith.constant 0 : index
    %c0_2 = arith.constant 0 : index
    %1 = vector.load %arg2[%c0_1, %c0_2] : memref<32x512xbf16, #tpu.memory_space<vmem>>, vector<32x512xbf16>
    %cst = arith.constant dense<0.000000e+00> : vector<64x512xf32>
    %2 = tpu.matmul %0, %1, %cst {dimension_numbers = #tpu.dot_dimension_numbers<[1], [0], [0], [1], [0, 0, 1, 1], [], []>} : vector<64x32xbf16>, vector<32x512xbf16>, vector<64x512xf32> -> vector<64x512xf32>
    %c0_3 = arith.constant 0 : index
    %c0_4 = arith.constant 0 : index
    %3 = vector.load %arg3[%c0_3, %c0_4] : memref<64x512xf32, #tpu.memory_space<vmem>>, vector<64x512xf32>
    tpu.vector_store %arg3[%c0_3, %c0_4], %2 {strides = array<i32>} : memref<64x512xf32, #tpu.memory_space<vmem>>, vector<64x512xf32>,
    return
  }
  func.func @transform_0(%arg0: i32) -> (i32, i32) {
    %c0_i32 = arith.constant 0 : i32
    %c0_i32_0 = arith.constant 0 : i32
    return %arg0, %c0_i32 : i32, i32
  }
  func.func @transform_1(%arg0: i32) -> (i32, i32) {
    %c0_i32 = arith.constant 0 : i32
    %c0_i32_0 = arith.constant 0 : i32
    %c0_i32_1 = arith.constant 0 : i32
    return %c0_i32, %c0_i32_0 : i32, i32
  }
  func.func @transform_2(%arg0: i32) -> (i32, i32) {
    %c0_i32 = arith.constant 0 : i32
    %c0_i32_0 = arith.constant 0 : i32
    return %arg0, %c0_i32 : i32, i32
  }
}

module attributes {stable_mosaic.version = 11 : i64} {
  func.func @_matmul_kernel(%arg0: i32, %arg1: memref<256x32xbf16, #tpu.memory_space<vmem>>, %arg2: memref<32x512xbf16, #tpu.memory_space<vmem>>, %arg3: memref<256x512xf32, #tpu.memory_space<vmem>>) attributes {dimension_semantics = [#tpu.dimension_semantics<parallel>], iteration_bounds = array<i64: 2>, scalar_prefetch = 0 : i64, scratch_operands = 0 : i64, tpu.core_type = #tpu.core_type<tc>, window_params = [{transform_indices = @transform_0, window_bounds = array<i64: 256, 32>}, {pipeline_mode = #tpu.pipeline_mode<synchronous>, transform_indices = @transform_1, window_bounds = array<i64: 32, 512>}, {transform_indices = @transform_2, window_bounds = array<i64: 256, 512>}]} {
    %c0 = arith.constant 0 : index
    %c0_0 = arith.constant 0 : index
    %0 = vector.load %arg1[%c0, %c0_0] : memref<256x32xbf16, #tpu.memory_space<vmem>>, vector<256x32xbf16>
    %c0_1 = arith.constant 0 : index
    %c0_2 = arith.constant 0 : index
    %1 = vector.load %arg2[%c0_1, %c0_2] : memref<32x512xbf16, #tpu.memory_space<vmem>>, vector<32x512xbf16>
    %cst = arith.constant dense<0.000000e+00> : vector<256x512xf32>
    %2 = tpu.matmul %0, %1, %cst {dimension_numbers = #tpu.dot_dimension_numbers<[1], [0], [0], [1], [0, 0, 1, 1], [], []>} : vector<256x32xbf16>, vector<32x512xbf16>, vector<256x512xf32> -> vector<256x512xf32>
    %c0_3 = arith.constant 0 : index
    %c0_4 = arith.constant 0 : index
    %3 = vector.load %arg3[%c0_3, %c0_4] : memref<256x512xf32, #tpu.memory_space<vmem>>, vector<256x512xf32>
    tpu.vector_store %arg3[%c0_3, %c0_4], %2 {strides = array<i32>} : memref<256x512xf32, #tpu.memory_space<vmem>>, vector<256x512xf32>,
    return
  }
  func.func @transform_0(%arg0: i32) -> (i32, i32) {
    %c0_i32 = arith.constant 0 : i32
    %c0_i32_0 = arith.constant 0 : i32
    return %arg0, %c0_i32 : i32, i32
  }
  func.func @transform_1(%arg0: i32) -> (i32, i32) {
    %c0_i32 = arith.constant 0 : i32
    %c0_i32_0 = arith.constant 0 : i32
    %c0_i32_1 = arith.constant 0 : i32
    return %c0_i32, %c0_i32_0 : i32, i32
  }
  func.func @transform_2(%arg0: i32) -> (i32, i32) {
    %c0_i32 = arith.constant 0 : i32
    %c0_i32_0 = arith.constant 0 : i32
    return %arg0, %c0_i32 : i32, i32
  }
}

module attributes {stable_mosaic.version = 11 : i64} {
  func.func @_matmul_kernel(%arg0: i32, %arg1: memref<1024x32xbf16, #tpu.memory_space<vmem>>, %arg2: memref<32x48xbf16, #tpu.memory_space<vmem>>, %arg3: memref<1024x48xf32, #tpu.memory_space<vmem>>) attributes {dimension_semantics = [#tpu.dimension_semantics<parallel>], iteration_bounds = array<i64: 2>, scalar_prefetch = 0 : i64, scratch_operands = 0 : i64, tpu.core_type = #tpu.core_type<tc>, window_params = [{transform_indices = @transform_0, window_bounds = array<i64: 1024, 32>}, {pipeline_mode = #tpu.pipeline_mode<synchronous>, transform_indices = @transform_1, window_bounds = array<i64: 32, 48>}, {transform_indices = @transform_2, window_bounds = array<i64: 1024, 48>}]} {
    %c0 = arith.constant 0 : index
    %c0_0 = arith.constant 0 : index
    %0 = vector.load %arg1[%c0, %c0_0] : memref<1024x32xbf16, #tpu.memory_space<vmem>>, vector<1024x32xbf16>
    %c0_1 = arith.constant 0 : index
    %c0_2 = arith.constant 0 : index
    %1 = vector.load %arg2[%c0_1, %c0_2] : memref<32x48xbf16, #tpu.memory_space<vmem>>, vector<32x48xbf16>
    %cst = arith.constant dense<0.000000e+00> : vector<1024x48xf32>
    %2 = tpu.matmul %0, %1, %cst {dimension_numbers = #tpu.dot_dimension_numbers<[1], [0], [0], [1], [0, 0, 1, 1], [], []>} : vector<1024x32xbf16>, vector<32x48xbf16>, vector<1024x48xf32> -> vector<1024x48xf32>
    %c0_3 = arith.constant 0 : index
    %c0_4 = arith.constant 0 : index
    %3 = vector.load %arg3[%c0_3, %c0_4] : memref<1024x48xf32, #tpu.memory_space<vmem>>, vector<1024x48xf32>
    tpu.vector_store %arg3[%c0_3, %c0_4], %2 {strides = array<i32>} : memref<1024x48xf32, #tpu.memory_space<vmem>>, vector<1024x48xf32>,
    return
  }
  func.func @transform_0(%arg0: i32) -> (i32, i32) {
    %c0_i32 = arith.constant 0 : i32
    %c0_i32_0 = arith.constant 0 : i32
    return %arg0, %c0_i32 : i32, i32
  }
  func.func @transform_1(%arg0: i32) -> (i32, i32) {
    %c0_i32 = arith.constant 0 : i32
    %c0_i32_0 = arith.constant 0 : i32
    %c0_i32_1 = arith.constant 0 : i32
    return %c0_i32, %c0_i32_0 : i32, i32
  }
  func.func @transform_2(%arg0: i32) -> (i32, i32) {
    %c0_i32 = arith.constant 0 : i32
    %c0_i32_0 = arith.constant 0 : i32
    return %arg0, %c0_i32 : i32, i32
  }
}

</mosaic_0001>

<llo_original>
// kernel: tile.8
$region0: #{tile.8}
  #allocation0 [shape = 's32[1]{0}', space=sflag, size = 0x4, scoped, tag = 'scoped memory for tile.8']
  %s0 = inlined_call_operand.vmem [shape: f32[64], index: 0, kind: input, shape index: {}]
  %s1 = inlined_call_operand.vmem [shape: f32[16,64], index: 1, kind: output, shape index: {}]
  // Predicated region
  $region2: #{tile.8} parent=0 // pred_check
    _
  $region3: #{tile.8} parent=0 // pred_check_branch
    %3 = sbr.rel (0) target = $region5
  $region4: #{tile.8} parent=0 // pred_region
    _
  $region5: #{tile.8} parent=0 // pred_fallthru
    _
  %v4 = vld [vmem:[%s0] ss:$0 sm:$0xff]
  %5 = vst [vmem:[%s1] sm:$0xff] %v4
  %s6 = scalar_lea.vmem %s1, 8
  %7 = vst [vmem:[%s6] sm:$0xff] %v4

// kernel: tile.9
$region0: #{tile.9}
  %s0 = inlined_call_operand.vmem [shape: f32[16,64], index: 0, kind: input, shape index: {}]
  %s1 = inlined_call_operand.vmem [shape: f32[1,1024], index: 1, kind: output, shape index: {}]
  $region1: #{tile.9} parent=0
    #allocation0 [shape = 'u8[32768]{0}', space=vmem, size = 0x8000, scoped, tag = 'scoped mem for output reshape']
    %v2 = vld [vmem:[%s0] ss:$2 sm:$0xff]
    %vm3 = vcmask 523264
    %4 = vst.msk [vmem:[#allocation0] ss:$8 sm:$0xf] %vm3, %v2
    %5 = vst.msk [vmem:[#allocation0] ss:$8 sm:$0xf0] %vm3, %v2
    %s6 = scalar_lea.vmem %s0, 1
    %v7 = vld [vmem:[%s6] ss:$2 sm:$0xff]
    %8 = vrot.lane.b32.xlu0 %v7, 64
    %v9 = vpop.permute.xlu0 %8
    %vm10 = vcmask 1048064
    %11 = vst.msk [vmem:[#allocation0] ss:$8 sm:$0xf] %vm10, %v9
    %12 = vst.msk [vmem:[#allocation0] ss:$8 sm:$0xf0] %vm10, %v9
    %s14 = sshll.u32 1, 1
    %s15 = ssub.s32 %s14, 1
    %v17 = vld [vmem:[#allocation0] sm:%s15]
    %s18 = sshll.u32 1, 1
    %s19 = ssub.s32 %s18, 1
    %20 = vst [vmem:[%s1] sm:%s19] %v17
    %s21 = scalar_lea.vmem [#allocation0], 8
    %v22 = vld [vmem:[%s21] sm:%s15]
    %s23 = sshll.u32 1, 1
    %s24 = ssub.s32 %s23, 1
    %s25 = scalar_lea.vmem %s1, 1
    %26 = vst [vmem:[%s25] sm:%s24] %v22
    %s27 = scalar_lea.vmem [#allocation0], 16
    %v28 = vld [vmem:[%s27] sm:%s15]
    %s29 = sshll.u32 1, 1
    %s30 = ssub.s32 %s29, 1
    %s31 = smul.addr 1, 2
    %s32 = scalar_lea.vmem %s1, %s31
    %33 = vst [vmem:[%s32] sm:%s30] %v28
    %s34 = scalar_lea.vmem [#allocation0], 24
    %v35 = vld [vmem:[%s34] sm:%s15]
    %s36 = sshll.u32 1, 1
    %s37 = ssub.s32 %s36, 1
    %s38 = smul.addr 1, 3
    %s39 = scalar_lea.vmem %s1, %s38
    %40 = vst [vmem:[%s39] sm:%s37] %v35
    %s41 = scalar_lea.vmem [#allocation0], 32
    %v42 = vld [vmem:[%s41] sm:%s15]
    %s43 = sshll.u32 1, 1
    %s44 = ssub.s32 %s43, 1
    %s45 = smul.addr 1, 4
    %s46 = scalar_lea.vmem %s1, %s45
    %47 = vst [vmem:[%s46] sm:%s44] %v42
    %s48 = scalar_lea.vmem [#allocation0], 40
    %v49 = vld [vmem:[%s48] sm:%s15]
    %s50 = sshll.u32 1, 1
    %s51 = ssub.s32 %s50, 1
    %s52 = smul.addr 1, 5
    %s53 = scalar_lea.vmem %s1, %s52
    %54 = vst [vmem:[%s53] sm:%s51] %v49
    %s55 = scalar_lea.vmem [#allocation0], 48
    %v56 = vld [vmem:[%s55] sm:%s15]
    %s57 = sshll.u32 1, 1
    %s58 = ssub.s32 %s57, 1
    %s59 = smul.addr 1, 6
    %s60 = scalar_lea.vmem %s1, %s59
    %61 = vst [vmem:[%s60] sm:%s58] %v56
    %s62 = scalar_lea.vmem [#allocation0], 56
    %v63 = vld [vmem:[%s62] sm:%s15]
    %s64 = sshll.u32 1, 1
    %s65 = ssub.s32 %s64, 1
    %s66 = smul.addr 1, 7
    %s67 = scalar_lea.vmem %s1, %s66
    %68 = vst [vmem:[%s67] sm:%s65] %v63

// kernel: conv_decoder_forward.6
$region0: #{conv_decoder_forward.6}
  #allocation0 [shape = 'u32[]', space=smem, size = 0x4, offset = 0x4, fixed_abs, tag = 'smem constant byte address 0x4 - core index']
  #allocation1 [shape = 'u32[144,128]{1,0:T(1,128)}', space=vmem, size = 0x12000, scoped, tag = 'internal scratch']
  %s0 = inlined_call_operand.vmem [shape: bf16[2,64], index: 0, kind: input, shape index: {}]
  %s1 = inlined_call_operand.vmem [shape: bf16[64,128], index: 1, kind: input, shape index: {}]
  %s2 = inlined_call_operand.vmem [shape: f32[1,128], index: 2, kind: input, shape index: {}]
  %s3 = inlined_call_operand.vmem [shape: bf16[2,128], index: 3, kind: output, shape index: {}]
  %s4 = sld [smem:[#allocation0]]
  $region22: #{conv_decoder_forward.6} parent=0
    _
  %s6 = ssub.s32 1, %s4
  %s7 = scalar_select 0, %s6, %s4
  // Predicated region
  $region2: #{conv_decoder_forward.6} parent=0 // pred_check
    _
  $region3: #{conv_decoder_forward.6} parent=0 // pred_check_branch
    %9 = sbr.rel (0) target = $region5
  $region4: #{conv_decoder_forward.6} parent=0 // pred_region
    _
  $region5: #{conv_decoder_forward.6} parent=0 // pred_fallthru
    _
  // Predicated region
  $region6: #{conv_decoder_forward.6} parent=0 // pred_check
    _
  $region7: #{conv_decoder_forward.6} parent=0 // pred_check_branch
    %11 = sbr.rel (0) target = $region9
  $region8: #{conv_decoder_forward.6} parent=0 // pred_region
    _
  $region9: #{conv_decoder_forward.6} parent=0 // pred_fallthru
    _
  // Predicated region
  $region10: #{conv_decoder_forward.6} parent=0 // pred_check
    _
  $region11: #{conv_decoder_forward.6} parent=0 // pred_check_branch
    %13 = sbr.rel (0) target = $region13
  $region12: #{conv_decoder_forward.6} parent=0 // pred_region
    _
  $region13: #{conv_decoder_forward.6} parent=0 // pred_fallthru
    _
  %v15 = vld [vmem:[%s0] sm:$0x1]
  %v16 = vld [vmem:[%s1] sm:$0xf]
  %v17 = vld [vmem:[%s1 + $0x4] sm:$0xf]
  %v18 = vld [vmem:[%s1 + $0x8] sm:$0xf]
  %v19 = vld [vmem:[%s1 + $0xc] sm:$0xf]
  %v20 = vld [vmem:[%s1 + $0x10] sm:$0xf]
  %v21 = vld [vmem:[%s1 + $0x14] sm:$0xf]
  %v22 = vld [vmem:[%s1 + $0x18] sm:$0xf]
  %v23 = vld [vmem:[%s1 + $0x1c] sm:$0xf]
  %v24 = vld [vmem:[%s2] sm:$0x1]
  %v26 = vlaneseq
  %v27 = vshrl.u32 %v26, 7
  %v28 = vsub.s32 0, %v27
  %v29 = vrot.slane %v24, %v28
  %v39 = vunpack.c.l.b16 %v16
  %v40 = vunpack.c.l.b16 %v17
  %v41 = vunpack.c.l.b16 %v18
  %v42 = vunpack.c.l.b16 %v19
  %v43 = vunpack.c.l.b16 %v20
  %v44 = vunpack.c.l.b16 %v21
  %v45 = vunpack.c.l.b16 %v22
  %v46 = vunpack.c.l.b16 %v23
  %v47 = vpack.c.b16 %v40, %v39
  %v48 = vpack.c.b16 %v42, %v41
  %v49 = vpack.c.b16 %v44, %v43
  %v50 = vpack.c.b16 %v46, %v45
  %vm55 = vcmask 523264
  %v57 = vsel %vm55, %v15, 0
  %59 = vmatprep.subr.bf16.mxu0 0
  %60 = vmatpush1.bf16.msra.mxu0 0
  %61 = vmatprep.subr.bf16.mxu0 0
  %62 = vmatpush1.bf16.msra.mxu0 0
  %63 = vmatprep.subr.bf16.mxu0 0
  %64 = vmatpush1.bf16.msra.mxu0 0
  %65 = vmatprep.subr.bf16.mxu0 0
  %66 = vmatpush1.bf16.msra.mxu0 0
  %67 = vmatprep.subr.bf16.mxu0 0
  %68 = vmatpush1.bf16.msra.mxu0 %v50
  %69 = vmatprep.subr.bf16.mxu0 0
  %70 = vmatpush1.bf16.msra.mxu0 %v49
  %71 = vmatprep.subr.bf16.mxu0 0
  %72 = vmatpush1.bf16.msra.mxu0 %v48
  %73 = vmatprep.subr.bf16.mxu0 0
  %74 = vmatpush1.bf16.msra.mxu0 %v47
  %75 = vmatprep.subr.bf16.mxu0 0
  %76 = vmatpush2.bf16.msra.mxu0 0
  %77 = vmatprep.subr.bf16.mxu0 0
  %78 = vmatpush2.bf16.msra.mxu0 0
  %79 = vmatprep.subr.bf16.mxu0 0
  %80 = vmatpush2.bf16.msra.mxu0 0
  %81 = vmatprep.subr.bf16.mxu0 0
  %82 = vmatpush2.bf16.msra.mxu0 0
  %83 = vmatprep.subr.bf16.mxu0 0
  %84 = vmatpush2.bf16.msra.mxu0 0
  %85 = vmatprep.subr.bf16.mxu0 0
  %86 = vmatpush2.bf16.msra.mxu0 0
  %87 = vmatprep.subr.bf16.mxu0 0
  %88 = vmatpush2.bf16.msra.mxu0 0
  %89 = vmatprep.subr.bf16.mxu0 0
  %90 = vmatpush2.bf16.msra.mxu0 0
  %91 = vmatprep.mubr.bf16.mxu0 0
  %92 = vmatmul.mubr.bf16.gmra.mxu0 %v57
  %v93 = vpop.f32.mrf.mxu0
  %v94 = vadd.f32 %v29, %v93
  %v95 = vpop.f32.mrf.mxu0
  %v96 = vpop.f32.mrf.mxu0
  %v97 = vpop.f32.mrf.mxu0
  %98 = vdwg.mxu0
  %v99 = vmax.f32 %v94, 0.0
  %v100 = vpack.c.bf16 %v99, %v99
  %101 = vst [vmem:[%s3] sm:$0x1] %v100
  // Predicated region
  $region14: #{conv_decoder_forward.6} parent=0 // pred_check
    _
  $region15: #{conv_decoder_forward.6} parent=0 // pred_check_branch
    %103 = sbr.rel (0) target = $region17
  $region16: #{conv_decoder_forward.6} parent=0 // pred_region
    _
  $region17: #{conv_decoder_forward.6} parent=0 // pred_fallthru
    _
  // Predicated region
  $region18: #{conv_decoder_forward.6} parent=0 // pred_check
    _
  $region19: #{conv_decoder_forward.6} parent=0 // pred_check_branch
    %105 = sbr.rel (0) target = $region21
  $region20: #{conv_decoder_forward.6} parent=0 // pred_region
    _
  $region21: #{conv_decoder_forward.6} parent=0 // pred_fallthru
    _

// kernel: conv_decoder_forward.7
$region0: #{conv_decoder_forward.7}
  #allocation0 [shape = 'u32[]', space=smem, size = 0x4, offset = 0x4, fixed_abs, tag = 'smem constant byte address 0x4 - core index']
  #allocation1 [shape = 'u32[144,128]{1,0:T(1,128)}', space=vmem, size = 0x12000, scoped, tag = 'internal scratch']
  %s0 = inlined_call_operand.vmem [shape: bf16[2,128], index: 0, kind: input, shape index: {}]
  %s1 = inlined_call_operand.vmem [shape: bf16[128,1024], index: 1, kind: input, shape index: {}]
  %s2 = inlined_call_operand.vmem [shape: f32[1,1024], index: 2, kind: input, shape index: {}]
  %s3 = inlined_call_operand.vmem [shape: bf16[2,1024], index: 3, kind: output, shape index: {}]
  %s4 = sld [smem:[#allocation0]]
  $region22: #{conv_decoder_forward.7} parent=0
    _
  %s6 = ssub.s32 1, %s4
  %s7 = scalar_select 0, %s6, %s4
  // Predicated region
  $region2: #{conv_decoder_forward.7} parent=0 // pred_check
    _
  $region3: #{conv_decoder_forward.7} parent=0 // pred_check_branch
    %9 = sbr.rel (0) target = $region5
  $region4: #{conv_decoder_forward.7} parent=0 // pred_region
    _
  $region5: #{conv_decoder_forward.7} parent=0 // pred_fallthru
    _
  // Predicated region
  $region6: #{conv_decoder_forward.7} parent=0 // pred_check
    _
  $region7: #{conv_decoder_forward.7} parent=0 // pred_check_branch
    %11 = sbr.rel (0) target = $region9
  $region8: #{conv_decoder_forward.7} parent=0 // pred_region
    _
  $region9: #{conv_decoder_forward.7} parent=0 // pred_fallthru
    _
  // Predicated region
  $region10: #{conv_decoder_forward.7} parent=0 // pred_check
    _
  $region11: #{conv_decoder_forward.7} parent=0 // pred_check_branch
    %13 = sbr.rel (0) target = $region13
  $region12: #{conv_decoder_forward.7} parent=0 // pred_region
    _
  $region13: #{conv_decoder_forward.7} parent=0 // pred_fallthru
    _
  %v15 = vld [vmem:[%s0] sm:$0x1]
  %v16 = vld [vmem:[%s1] sm:$0xff]
  %v17 = vld [vmem:[%s1 + $0x8] sm:$0xff]
  %v18 = vld [vmem:[%s1 + $0x10] sm:$0xff]
  %v19 = vld [vmem:[%s1 + $0x18] sm:$0xff]
  %v20 = vld [vmem:[%s1 + $0x20] sm:$0xff]
  %v21 = vld [vmem:[%s1 + $0x28] sm:$0xff]
  %v22 = vld [vmem:[%s1 + $0x30] sm:$0xff]
  %v23 = vld [vmem:[%s1 + $0x38] sm:$0xff]
  %v24 = vld [vmem:[%s1 + $0x40] sm:$0xff]
  %v25 = vld [vmem:[%s1 + $0x48] sm:$0xff]
  %v26 = vld [vmem:[%s1 + $0x50] sm:$0xff]
  %v27 = vld [vmem:[%s1 + $0x58] sm:$0xff]
  %v28 = vld [vmem:[%s1 + $0x60] sm:$0xff]
  %v29 = vld [vmem:[%s1 + $0x68] sm:$0xff]
  %v30 = vld [vmem:[%s1 + $0x70] sm:$0xff]
  %v31 = vld [vmem:[%s1 + $0x78] sm:$0xff]
  %v32 = vld [vmem:[%s1 + $0x80] sm:$0xff]
  %v33 = vld [vmem:[%s1 + $0x88] sm:$0xff]
  %v34 = vld [vmem:[%s1 + $0x90] sm:$0xff]
  %v35 = vld [vmem:[%s1 + $0x98] sm:$0xff]
  %v36 = vld [vmem:[%s1 + $0xa0] sm:$0xff]
  %v37 = vld [vmem:[%s1 + $0xa8] sm:$0xff]
  %v38 = vld [vmem:[%s1 + $0xb0] sm:$0xff]
  %v39 = vld [vmem:[%s1 + $0xb8] sm:$0xff]
  %v40 = vld [vmem:[%s1 + $0xc0] sm:$0xff]
  %v41 = vld [vmem:[%s1 + $0xc8] sm:$0xff]
  %v42 = vld [vmem:[%s1 + $0xd0] sm:$0xff]
  %v43 = vld [vmem:[%s1 + $0xd8] sm:$0xff]
  %v44 = vld [vmem:[%s1 + $0xe0] sm:$0xff]
  %v45 = vld [vmem:[%s1 + $0xe8] sm:$0xff]
  %v46 = vld [vmem:[%s1 + $0xf0] sm:$0xff]
  %v47 = vld [vmem:[%s1 + $0xf8] sm:$0xff]
  %v48 = vld [vmem:[%s1 + $0x100] sm:$0xff]
  %v49 = vld [vmem:[%s1 + $0x108] sm:$0xff]
  %v50 = vld [vmem:[%s1 + $0x110] sm:$0xff]
  %v51 = vld [vmem:[%s1 + $0x118] sm:$0xff]
  %v52 = vld [vmem:[%s1 + $0x120] sm:$0xff]
  %v53 = vld [vmem:[%s1 + $0x128] sm:$0xff]
  %v54 = vld [vmem:[%s1 + $0x130] sm:$0xff]
  %v55 = vld [vmem:[%s1 + $0x138] sm:$0xff]
  %v56 = vld [vmem:[%s1 + $0x140] sm:$0xff]
  %v57 = vld [vmem:[%s1 + $0x148] sm:$0xff]
  %v58 = vld [vmem:[%s1 + $0x150] sm:$0xff]
  %v59 = vld [vmem:[%s1 + $0x158] sm:$0xff]
  %v60 = vld [vmem:[%s1 + $0x160] sm:$0xff]
  %v61 = vld [vmem:[%s1 + $0x168] sm:$0xff]
  %v62 = vld [vmem:[%s1 + $0x170] sm:$0xff]
  %v63 = vld [vmem:[%s1 + $0x178] sm:$0xff]
  %v64 = vld [vmem:[%s1 + $0x180] sm:$0xff]
  %v65 = vld [vmem:[%s1 + $0x188] sm:$0xff]
  %v66 = vld [vmem:[%s1 + $0x190] sm:$0xff]
  %v67 = vld [vmem:[%s1 + $0x198] sm:$0xff]
  %v68 = vld [vmem:[%s1 + $0x1a0] sm:$0xff]
  %v69 = vld [vmem:[%s1 + $0x1a8] sm:$0xff]
  %v70 = vld [vmem:[%s1 + $0x1b0] sm:$0xff]
  %v71 = vld [vmem:[%s1 + $0x1b8] sm:$0xff]
  %v72 = vld [vmem:[%s1 + $0x1c0] sm:$0xff]
  %v73 = vld [vmem:[%s1 + $0x1c8] sm:$0xff]
  %v74 = vld [vmem:[%s1 + $0x1d0] sm:$0xff]
  %v75 = vld [vmem:[%s1 + $0x1d8] sm:$0xff]
  %v76 = vld [vmem:[%s1 + $0x1e0] sm:$0xff]
  %v77 = vld [vmem:[%s1 + $0x1e8] sm:$0xff]
  %v78 = vld [vmem:[%s1 + $0x1f0] sm:$0xff]
  %v79 = vld [vmem:[%s1 + $0x1f8] sm:$0xff]
  %v80 = vld [vmem:[%s2] sm:$0xff]
  %v82 = vlaneseq
  %v83 = vshrl.u32 %v82, 7
  %v84 = vsub.s32 0, %v83
  %v85 = vrot.slane %v80, %v84
  %v86 = vlaneseq
  %v87 = vshrl.u32 %v86, 7
  %v88 = vsub.s32 1, %v87
  %v89 = vrot.slane %v80, %v88
  %v90 = vlaneseq
  %v91 = vshrl.u32 %v90, 7
  %v92 = vsub.s32 2, %v91
  %v93 = vrot.slane %v80, %v92
  %v94 = vlaneseq
  %v95 = vshrl.u32 %v94, 7
  %v96 = vsub.s32 3, %v95
  %v97 = vrot.slane %v80, %v96
  %v98 = vlaneseq
  %v99 = vshrl.u32 %v98, 7
  %v100 = vsub.s32 4, %v99
  %v101 = vrot.slane %v80, %v100
  %v102 = vlaneseq
  %v103 = vshrl.u32 %v102, 7
  %v104 = vsub.s32 5, %v103
  %v105 = vrot.slane %v80, %v104
  %v106 = vlaneseq
  %v107 = vshrl.u32 %v106, 7
  %v108 = vsub.s32 6, %v107
  %v109 = vrot.slane %v80, %v108
  %v110 = vlaneseq
  %v111 = vshrl.u32 %v110, 7
  %v112 = vsub.s32 7, %v111
  %v113 = vrot.slane %v80, %v112
  %v186 = vunpack.c.l.b16 %v16
  %v187 = vunpack.c.h.b16 %v16
  %v188 = vunpack.c.l.b16 %v17
  %v189 = vunpack.c.h.b16 %v17
  %v190 = vunpack.c.l.b16 %v18
  %v191 = vunpack.c.h.b16 %v18
  %v192 = vunpack.c.l.b16 %v19
  %v193 = vunpack.c.h.b16 %v19
  %v194 = vunpack.c.l.b16 %v20
  %v195 = vunpack.c.h.b16 %v20
  %v196 = vunpack.c.l.b16 %v21
  %v197 = vunpack.c.h.b16 %v21
  %v198 = vunpack.c.l.b16 %v22
  %v199 = vunpack.c.h.b16 %v22
  %v200 = vunpack.c.l.b16 %v23
  %v201 = vunpack.c.h.b16 %v23
  %v202 = vunpack.c.l.b16 %v24
  %v203 = vunpack.c.h.b16 %v24
  %v204 = vunpack.c.l.b16 %v25
  %v205 = vunpack.c.h.b16 %v25
  %v206 = vunpack.c.l.b16 %v26
  %v207 = vunpack.c.h.b16 %v26
  %v208 = vunpack.c.l.b16 %v27
  %v209 = vunpack.c.h.b16 %v27
  %v210 = vunpack.c.l.b16 %v28
  %v211 = vunpack.c.h.b16 %v28
  %v212 = vunpack.c.l.b16 %v29
  %v213 = vunpack.c.h.b16 %v29
  %v214 = vunpack.c.l.b16 %v30
  %v215 = vunpack.c.h.b16 %v30
  %v216 = vunpack.c.l.b16 %v31
  %v217 = vunpack.c.h.b16 %v31
  %v218 = vunpack.c.l.b16 %v32
  %v219 = vunpack.c.h.b16 %v32
  %v220 = vunpack.c.l.b16 %v33
  %v221 = vunpack.c.h.b16 %v33
  %v222 = vunpack.c.l.b16 %v34
  %v223 = vunpack.c.h.b16 %v34
  %v224 = vunpack.c.l.b16 %v35
  %v225 = vunpack.c.h.b16 %v35
  %v226 = vunpack.c.l.b16 %v36
  %v227 = vunpack.c.h.b16 %v36
  %v228 = vunpack.c.l.b16 %v37
  %v229 = vunpack.c.h.b16 %v37
  %v230 = vunpack.c.l.b16 %v38
  %v231 = vunpack.c.h.b16 %v38
  %v232 = vunpack.c.l.b16 %v39
  %v233 = vunpack.c.h.b16 %v39
  %v234 = vunpack.c.l.b16 %v40
  %v235 = vunpack.c.h.b16 %v40
  %v236 = vunpack.c.l.b16 %v41
  %v237 = vunpack.c.h.b16 %v41
  %v238 = vunpack.c.l.b16 %v42
  %v239 = vunpack.c.h.b16 %v42
  %v240 = vunpack.c.l.b16 %v43
  %v241 = vunpack.c.h.b16 %v43
  %v242 = vunpack.c.l.b16 %v44
  %v243 = vunpack.c.h.b16 %v44
  %v244 = vunpack.c.l.b16 %v45
  %v245 = vunpack.c.h.b16 %v45
  %v246 = vunpack.c.l.b16 %v46
  %v247 = vunpack.c.h.b16 %v46
  %v248 = vunpack.c.l.b16 %v47
  %v249 = vunpack.c.h.b16 %v47
  %v250 = vunpack.c.l.b16 %v48
  %v251 = vunpack.c.h.b16 %v48
  %v252 = vunpack.c.l.b16 %v49
  %v253 = vunpack.c.h.b16 %v49
  %v254 = vunpack.c.l.b16 %v50
  %v255 = vunpack.c.h.b16 %v50
  %v256 = vunpack.c.l.b16 %v51
  %v257 = vunpack.c.h.b16 %v51
  %v258 = vunpack.c.l.b16 %v52
  %v259 = vunpack.c.h.b16 %v52
  %v260 = vunpack.c.l.b16 %v53
  %v261 = vunpack.c.h.b16 %v53
  %v262 = vunpack.c.l.b16 %v54
  %v263 = vunpack.c.h.b16 %v54
  %v264 = vunpack.c.l.b16 %v55
  %v265 = vunpack.c.h.b16 %v55
  %v266 = vunpack.c.l.b16 %v56
  %v267 = vunpack.c.h.b16 %v56
  %v268 = vunpack.c.l.b16 %v57
  %v269 = vunpack.c.h.b16 %v57
  %v270 = vunpack.c.l.b16 %v58
  %v271 = vunpack.c.h.b16 %v58
  %v272 = vunpack.c.l.b16 %v59
  %v273 = vunpack.c.h.b16 %v59
  %v274 = vunpack.c.l.b16 %v60
  %v275 = vunpack.c.h.b16 %v60
  %v276 = vunpack.c.l.b16 %v61
  %v277 = vunpack.c.h.b16 %v61
  %v278 = vunpack.c.l.b16 %v62
  %v279 = vunpack.c.h.b16 %v62
  %v280 = vunpack.c.l.b16 %v63
  %v281 = vunpack.c.h.b16 %v63
  %v282 = vunpack.c.l.b16 %v64
  %v283 = vunpack.c.h.b16 %v64
  %v284 = vunpack.c.l.b16 %v65
  %v285 = vunpack.c.h.b16 %v65
  %v286 = vunpack.c.l.b16 %v66
  %v287 = vunpack.c.h.b16 %v66
  %v288 = vunpack.c.l.b16 %v67
  %v289 = vunpack.c.h.b16 %v67
  %v290 = vunpack.c.l.b16 %v68
  %v291 = vunpack.c.h.b16 %v68
  %v292 = vunpack.c.l.b16 %v69
  %v293 = vunpack.c.h.b16 %v69
  %v294 = vunpack.c.l.b16 %v70
  %v295 = vunpack.c.h.b16 %v70
  %v296 = vunpack.c.l.b16 %v71
  %v297 = vunpack.c.h.b16 %v71
  %v298 = vunpack.c.l.b16 %v72
  %v299 = vunpack.c.h.b16 %v72
  %v300 = vunpack.c.l.b16 %v73
  %v301 = vunpack.c.h.b16 %v73
  %v302 = vunpack.c.l.b16 %v74
  %v303 = vunpack.c.h.b16 %v74
  %v304 = vunpack.c.l.b16 %v75
  %v305 = vunpack.c.h.b16 %v75
  %v306 = vunpack.c.l.b16 %v76
  %v307 = vunpack.c.h.b16 %v76
  %v308 = vunpack.c.l.b16 %v77
  %v309 = vunpack.c.h.b16 %v77
  %v310 = vunpack.c.l.b16 %v78
  %v311 = vunpack.c.h.b16 %v78
  %v312 = vunpack.c.l.b16 %v79
  %v313 = vunpack.c.h.b16 %v79
  %v314 = vpack.c.b16 %v194, %v186
  %v315 = vpack.c.b16 %v195, %v187
  %v316 = vpack.c.b16 %v196, %v188
  %v317 = vpack.c.b16 %v197, %v189
  %v318 = vpack.c.b16 %v198, %v190
  %v319 = vpack.c.b16 %v199, %v191
  %v320 = vpack.c.b16 %v200, %v192
  %v321 = vpack.c.b16 %v201, %v193
  %v322 = vpack.c.b16 %v210, %v202
  %v323 = vpack.c.b16 %v211, %v203
  %v324 = vpack.c.b16 %v212, %v204
  %v325 = vpack.c.b16 %v213, %v205
  %v326 = vpack.c.b16 %v214, %v206
  %v327 = vpack.c.b16 %v215, %v207
  %v328 = vpack.c.b16 %v216, %v208
  %v329 = vpack.c.b16 %v217, %v209
  %v330 = vpack.c.b16 %v226, %v218
  %v331 = vpack.c.b16 %v227, %v219
  %v332 = vpack.c.b16 %v228, %v220
  %v333 = vpack.c.b16 %v229, %v221
  %v334 = vpack.c.b16 %v230, %v222
  %v335 = vpack.c.b16 %v231, %v223
  %v336 = vpack.c.b16 %v232, %v224
  %v337 = vpack.c.b16 %v233, %v225
  %v338 = vpack.c.b16 %v242, %v234
  %v339 = vpack.c.b16 %v243, %v235
  %v340 = vpack.c.b16 %v244, %v236
  %v341 = vpack.c.b16 %v245, %v237
  %v342 = vpack.c.b16 %v246, %v238
  %v343 = vpack.c.b16 %v247, %v239
  %v344 = vpack.c.b16 %v248, %v240
  %v345 = vpack.c.b16 %v249, %v241
  %v346 = vpack.c.b16 %v258, %v250
  %v347 = vpack.c.b16 %v259, %v251
  %v348 = vpack.c.b16 %v260, %v252
  %v349 = vpack.c.b16 %v261, %v253
  %v350 = vpack.c.b16 %v262, %v254
  %v351 = vpack.c.b16 %v263, %v255
  %v352 = vpack.c.b16 %v264, %v256
  %v353 = vpack.c.b16 %v265, %v257
  %v354 = vpack.c.b16 %v274, %v266
  %v355 = vpack.c.b16 %v275, %v267
  %v356 = vpack.c.b16 %v276, %v268
  %v357 = vpack.c.b16 %v277, %v269
  %v358 = vpack.c.b16 %v278, %v270
  %v359 = vpack.c.b16 %v279, %v271
  %v360 = vpack.c.b16 %v280, %v272
  %v361 = vpack.c.b16 %v281, %v273
  %v362 = vpack.c.b16 %v290, %v282
  %v363 = vpack.c.b16 %v291, %v283
  %v364 = vpack.c.b16 %v292, %v284
  %v365 = vpack.c.b16 %v293, %v285
  %v366 = vpack.c.b16 %v294, %v286
  %v367 = vpack.c.b16 %v295, %v287
  %v368 = vpack.c.b16 %v296, %v288
  %v369 = vpack.c.b16 %v297, %v289
  %v370 = vpack.c.b16 %v306, %v298
  %v371 = vpack.c.b16 %v307, %v299
  %v372 = vpack.c.b16 %v308, %v300
  %v373 = vpack.c.b16 %v309, %v301
  %v374 = vpack.c.b16 %v310, %v302
  %v375 = vpack.c.b16 %v311, %v303
  %v376 = vpack.c.b16 %v312, %v304
  %v377 = vpack.c.b16 %v313, %v305
  %442 = vmatprep.subr.bf16.mxu0 %v371
  %443 = vmatpush1.bf16.msra.mxu0 %v370
  %444 = vmatprep.subr.bf16.mxu0 %v363
  %445 = vmatpush1.bf16.msra.mxu0 %v362
  %446 = vmatprep.subr.bf16.mxu0 %v355
  %447 = vmatpush1.bf16.msra.mxu0 %v354
  %448 = vmatprep.subr.bf16.mxu0 %v347
  %449 = vmatpush1.bf16.msra.mxu0 %v346
  %450 = vmatprep.subr.bf16.mxu0 %v339
  %451 = vmatpush1.bf16.msra.mxu0 %v338
  %452 = vmatprep.subr.bf16.mxu0 %v331
  %453 = vmatpush1.bf16.msra.mxu0 %v330
  %454 = vmatprep.subr.bf16.mxu0 %v323
  %455 = vmatpush1.bf16.msra.mxu0 %v322
  %456 = vmatprep.subr.bf16.mxu0 %v315
  %457 = vmatpush1.bf16.msra.mxu0 %v314
  %458 = vmatprep.subr.bf16.mxu0 0
  %459 = vmatpush2.bf16.msra.mxu0 0
  %460 = vmatprep.subr.bf16.mxu0 0
  %461 = vmatpush2.bf16.msra.mxu0 0
  %462 = vmatprep.subr.bf16.mxu0 0
  %463 = vmatpush2.bf16.msra.mxu0 0
  %464 = vmatprep.subr.bf16.mxu0 0
  %465 = vmatpush2.bf16.msra.mxu0 0
  %466 = vmatprep.subr.bf16.mxu0 0
  %467 = vmatpush2.bf16.msra.mxu0 0
  %468 = vmatprep.subr.bf16.mxu0 0
  %469 = vmatpush2.bf16.msra.mxu0 0
  %470 = vmatprep.subr.bf16.mxu0 0
  %471 = vmatpush2.bf16.msra.mxu0 0
  %472 = vmatprep.subr.bf16.mxu0 0
  %473 = vmatpush2.bf16.msra.mxu0 0
  %474 = vmatprep.mubr.bf16.mxu0 0
  %475 = vmatmul.mubr.bf16.gmra.mxu0 %v15
  %v476 = vpop.f32.mrf.mxu0
  %v477 = vadd.f32 %v85, %v476
  %v478 = vpop.f32.mrf.mxu0
  %v479 = vadd.f32 %v89, %v478
  %v480 = vpop.f32.mrf.mxu0
  %v481 = vpop.f32.mrf.mxu0
  %482 = vdwg.mxu0
  %483 = vmatprep.subr.bf16.mxu0 %v373
  %484 = vmatpush1.bf16.msra.mxu0 %v372
  %485 = vmatprep.subr.bf16.mxu0 %v365
  %486 = vmatpush1.bf16.msra.mxu0 %v364
  %487 = vmatprep.subr.bf16.mxu0 %v357
  %488 = vmatpush1.bf16.msra.mxu0 %v356
  %489 = vmatprep.subr.bf16.mxu0 %v349
  %490 = vmatpush1.bf16.msra.mxu0 %v348
  %491 = vmatprep.subr.bf16.mxu0 %v341
  %492 = vmatpush1.bf16.msra.mxu0 %v340
  %493 = vmatprep.subr.bf16.mxu0 %v333
  %494 = vmatpush1.bf16.msra.mxu0 %v332
  %495 = vmatprep.subr.bf16.mxu0 %v325
  %496 = vmatpush1.bf16.msra.mxu0 %v324
  %497 = vmatprep.subr.bf16.mxu0 %v317
  %498 = vmatpush1.bf16.msra.mxu0 %v316
  %499 = vmatprep.subr.bf16.mxu0 0
  %500 = vmatpush2.bf16.msra.mxu0 0
  %501 = vmatprep.subr.bf16.mxu0 0
  %502 = vmatpush2.bf16.msra.mxu0 0
  %503 = vmatprep.subr.bf16.mxu0 0
  %504 = vmatpush2.bf16.msra.mxu0 0
  %505 = vmatprep.subr.bf16.mxu0 0
  %506 = vmatpush2.bf16.msra.mxu0 0
  %507 = vmatprep.subr.bf16.mxu0 0
  %508 = vmatpush2.bf16.msra.mxu0 0
  %509 = vmatprep.subr.bf16.mxu0 0
  %510 = vmatpush2.bf16.msra.mxu0 0
  %511 = vmatprep.subr.bf16.mxu0 0
  %512 = vmatpush2.bf16.msra.mxu0 0
  %513 = vmatprep.subr.bf16.mxu0 0
  %514 = vmatpush2.bf16.msra.mxu0 0
  %515 = vmatprep.mubr.bf16.mxu0 0
  %516 = vmatmul.mubr.bf16.gmra.mxu0 %v15
  %v517 = vpop.f32.mrf.mxu0
  %v518 = vadd.f32 %v93, %v517
  %v519 = vpop.f32.mrf.mxu0
  %v520 = vadd.f32 %v97, %v519
  %v521 = vpop.f32.mrf.mxu0
  %v522 = vpop.f32.mrf.mxu0
  %523 = vdwg.mxu0
  %524 = vmatprep.subr.bf16.mxu0 %v375
  %525 = vmatpush1.bf16.msra.mxu0 %v374
  %526 = vmatprep.subr.bf16.mxu0 %v367
  %527 = vmatpush1.bf16.msra.mxu0 %v366
  %528 = vmatprep.subr.bf16.mxu0 %v359
  %529 = vmatpush1.bf16.msra.mxu0 %v358
  %530 = vmatprep.subr.bf16.mxu0 %v351
  %531 = vmatpush1.bf16.msra.mxu0 %v350
  %532 = vmatprep.subr.bf16.mxu0 %v343
  %533 = vmatpush1.bf16.msra.mxu0 %v342
  %534 = vmatprep.subr.bf16.mxu0 %v335
  %535 = vmatpush1.bf16.msra.mxu0 %v334
  %536 = vmatprep.subr.bf16.mxu0 %v327
  %537 = vmatpush1.bf16.msra.mxu0 %v326
  %538 = vmatprep.subr.bf16.mxu0 %v319
  %539 = vmatpush1.bf16.msra.mxu0 %v318
  %540 = vmatprep.subr.bf16.mxu0 0
  %541 = vmatpush2.bf16.msra.mxu0 0
  %542 = vmatprep.subr.bf16.mxu0 0
  %543 = vmatpush2.bf16.msra.mxu0 0
  %544 = vmatprep.subr.bf16.mxu0 0
  %545 = vmatpush2.bf16.msra.mxu0 0
  %546 = vmatprep.subr.bf16.mxu0 0
  %547 = vmatpush2.bf16.msra.mxu0 0
  %548 = vmatprep.subr.bf16.mxu0 0
  %549 = vmatpush2.bf16.msra.mxu0 0
  %550 = vmatprep.subr.bf16.mxu0 0
  %551 = vmatpush2.bf16.msra.mxu0 0
  %552 = vmatprep.subr.bf16.mxu0 0
  %553 = vmatpush2.bf16.msra.mxu0 0
  %554 = vmatprep.subr.bf16.mxu0 0
  %555 = vmatpush2.bf16.msra.mxu0 0
  %556 = vmatprep.mubr.bf16.mxu0 0
  %557 = vmatmul.mubr.bf16.gmra.mxu0 %v15
  %v558 = vpop.f32.mrf.mxu0
  %v559 = vadd.f32 %v101, %v558
  %v560 = vpop.f32.mrf.mxu0
  %v561 = vadd.f32 %v105, %v560
  %v562 = vpop.f32.mrf.mxu0
  %v563 = vpop.f32.mrf.mxu0
  %564 = vdwg.mxu0
  %565 = vmatprep.subr.bf16.mxu0 %v377
  %566 = vmatpush1.bf16.msra.mxu0 %v376
  %567 = vmatprep.subr.bf16.mxu0 %v369
  %568 = vmatpush1.bf16.msra.mxu0 %v368
  %569 = vmatprep.subr.bf16.mxu0 %v361
  %570 = vmatpush1.bf16.msra.mxu0 %v360
  %571 = vmatprep.subr.bf16.mxu0 %v353
  %572 = vmatpush1.bf16.msra.mxu0 %v352
  %573 = vmatprep.subr.bf16.mxu0 %v345
  %574 = vmatpush1.bf16.msra.mxu0 %v344
  %575 = vmatprep.subr.bf16.mxu0 %v337
  %576 = vmatpush1.bf16.msra.mxu0 %v336
  %577 = vmatprep.subr.bf16.mxu0 %v329
  %578 = vmatpush1.bf16.msra.mxu0 %v328
  %579 = vmatprep.subr.bf16.mxu0 %v321
  %580 = vmatpush1.bf16.msra.mxu0 %v320
  %581 = vmatprep.subr.bf16.mxu0 0
  %582 = vmatpush2.bf16.msra.mxu0 0
  %583 = vmatprep.subr.bf16.mxu0 0
  %584 = vmatpush2.bf16.msra.mxu0 0
  %585 = vmatprep.subr.bf16.mxu0 0
  %586 = vmatpush2.bf16.msra.mxu0 0
  %587 = vmatprep.subr.bf16.mxu0 0
  %588 = vmatpush2.bf16.msra.mxu0 0
  %589 = vmatprep.subr.bf16.mxu0 0
  %590 = vmatpush2.bf16.msra.mxu0 0
  %591 = vmatprep.subr.bf16.mxu0 0
  %592 = vmatpush2.bf16.msra.mxu0 0
  %593 = vmatprep.subr.bf16.mxu0 0
  %594 = vmatpush2.bf16.msra.mxu0 0
  %595 = vmatprep.subr.bf16.mxu0 0
  %596 = vmatpush2.bf16.msra.mxu0 0
  %597 = vmatprep.mubr.bf16.mxu0 0
  %598 = vmatmul.mubr.bf16.gmra.mxu0 %v15
  %v599 = vpop.f32.mrf.mxu0
  %v600 = vadd.f32 %v109, %v599
  %v601 = vpop.f32.mrf.mxu0
  %v602 = vadd.f32 %v113, %v601
  %v603 = vpop.f32.mrf.mxu0
  %v604 = vpop.f32.mrf.mxu0
  %605 = vdwg.mxu0
  %v606 = vmax.f32 %v477, 0.0
  %v607 = vmax.f32 %v479, 0.0
  %v608 = vmax.f32 %v518, 0.0
  %v609 = vmax.f32 %v520, 0.0
  %v610 = vmax.f32 %v559, 0.0
  %v611 = vmax.f32 %v561, 0.0
  %v612 = vmax.f32 %v600, 0.0
  %v613 = vmax.f32 %v602, 0.0
  %v614 = vpack.c.bf16 %v606, %v606
  %v615 = vpack.c.bf16 %v607, %v607
  %v616 = vpack.c.bf16 %v608, %v608
  %v617 = vpack.c.bf16 %v609, %v609
  %v618 = vpack.c.bf16 %v610, %v610
  %v619 = vpack.c.bf16 %v611, %v611
  %v620 = vpack.c.bf16 %v612, %v612
  %v621 = vpack.c.bf16 %v613, %v613
  %v630 = vcombine.low %v614, %v615
  %v631 = vcombine.low %v616, %v617
  %v632 = vcombine.low %v618, %v619
  %v633 = vcombine.low %v620, %v621
  %v635 = vunpack.c.l.s4 1966171168
  %v636 = vunpack.c.0.s8 %v635
  %v637 = vlaneseq
  %v638 = vshrl.u32 %v637, 7
  %v639 = vsub.s32 %v636, %v638
  %v640 = vrot.slane %v630, %v639
  %v642 = vunpack.c.l.s4 1966171168
  %v643 = vunpack.c.0.s8 %v642
  %v644 = vlaneseq
  %v645 = vshrl.u32 %v644, 7
  %v646 = vsub.s32 %v643, %v645
  %v647 = vrot.slane %v631, %v646
  %v649 = vunpack.c.l.s4 1966171168
  %v650 = vunpack.c.0.s8 %v649
  %v651 = vlaneseq
  %v652 = vshrl.u32 %v651, 7
  %v653 = vsub.s32 %v650, %v652
  %v654 = vrot.slane %v632, %v653
  %v656 = vunpack.c.l.s4 1966171168
  %v657 = vunpack.c.0.s8 %v656
  %v658 = vlaneseq
  %v659 = vshrl.u32 %v658, 7
  %v660 = vsub.s32 %v657, %v659
  %v661 = vrot.slane %v633, %v660
  %v662 = vcombine.low %v640, %v647
  %v663 = vcombine.low %v654, %v661
  %v665 = vunpack.c.l.s4 1966171168
  %v666 = vunpack.c.0.s8 %v665
  %v667 = vlaneseq
  %v668 = vshrl.u32 %v667, 7
  %v669 = vsub.s32 %v666, %v668
  %v670 = vrot.slane %v662, %v669
  %v672 = vunpack.c.l.s4 1966171168
  %v673 = vunpack.c.0.s8 %v672
  %v674 = vlaneseq
  %v675 = vshrl.u32 %v674, 7
  %v676 = vsub.s32 %v673, %v675
  %v677 = vrot.slane %v663, %v676
  %v678 = vcombine.low %v670, %v677
  %680 = vst [vmem:[%s3] sm:$0xff] %v678
  // Predicated region
  $region14: #{conv_decoder_forward.7} parent=0 // pred_check
    _
  $region15: #{conv_decoder_forward.7} parent=0 // pred_check_branch
    %682 = sbr.rel (0) target = $region17
  $region16: #{conv_decoder_forward.7} parent=0 // pred_region
    _
  $region17: #{conv_decoder_forward.7} parent=0 // pred_fallthru
    _
  // Predicated region
  $region18: #{conv_decoder_forward.7} parent=0 // pred_check
    _
  $region19: #{conv_decoder_forward.7} parent=0 // pred_check_branch
    %684 = sbr.rel (0) target = $region21
  $region20: #{conv_decoder_forward.7} parent=0 // pred_region
    _
  $region21: #{conv_decoder_forward.7} parent=0 // pred_fallthru
    _

// kernel: conv_decoder_forward.8
$region0: #{conv_decoder_forward.8}
  #allocation0 [shape = 'u32[]', space=smem, size = 0x4, offset = 0x4, fixed_abs, tag = 'smem constant byte address 0x4 - core index']
  #allocation1 [shape = 'u32[144,128]{1,0:T(1,128)}', space=vmem, size = 0x12000, scoped, tag = 'internal scratch']
  %s0 = inlined_call_operand.vmem [shape: bf16[32,64], index: 0, kind: input, shape index: {}]
  %s1 = inlined_call_operand.vmem [shape: bf16[64,512], index: 1, kind: input, shape index: {}]
  %s2 = inlined_call_operand.vmem [shape: f32[32,512], index: 2, kind: output, shape index: {}]
  %s3 = sld [smem:[#allocation0]]
  $region41: #{conv_decoder_forward.8} parent=0
    _
  %s5 = ssub.s32 1, %s3
  %s6 = scalar_select 0, %s5, %s3
  loop: start=0, step=1, limit=4
  $region2: #{conv_decoder_forward.8} parent=0 // loop_pre_header
    _
  $region3: #{conv_decoder_forward.8} parent=0 // loop_header
    %s8 = sphi 0, %s12
    %p9 = scmp.ge.s32.totalorder %s8, 4
    %s18 = sphi 0, %s20
    %s21 = sphi 0, %s18
    %s22 = sphi 0, %s21
    %s38 = sphi 0, %s22
    %s42 = sphi 0, %s42
    %s44 = sphi 0, %s42
    %s45 = sphi 0, %s44
    %s59 = sphi 0, %s45
    %s65 = sphi 0, %s67
    %s68 = sphi 0, %s65
    %s69 = sphi 0, %s68
    %s85 = sphi 0, %s69
  $region4: #{conv_decoder_forward.8} parent=0 // loop_header_branch
    %11 = sbr.rel (%p9) target = $region8
  $region5: #{conv_decoder_forward.8} parent=0 // loop_body
    %s13 = ssub.s32 %s8, 1
    %s14 = ssub.s32 %s8, 2
    %s15 = sadd.s32 %s8, 1
    %s16 = ssub.s32 %s8, %s15
    %p17 = scmp.eq.s32.totalorder %s16, 0
    %s19 = sadd.s32 %s18, 1
    %s20 = scalar_select %p17, %s18, %s19
    %p23 = pneg %p17
    %p24 = scmp.eq.s32.totalorder %s8, 1
    %p25 = por %p23, %p24
    %p26 = scmp.ne.s32.totalorder %s18, %s21
    %p27 = scmp.eq.s32.totalorder %s8, 0
    %p28 = por %p26, %p27
    %p29 = scmp.ne.s32.totalorder %s18, %s21
    %p30 = scmp.eq.s32.totalorder %s13, 1
    %p31 = por %p29, %p30
    %p32 = scmp.ne.s32.totalorder %s21, %s22
    %p33 = scmp.eq.s32.totalorder %s13, 0
    %p34 = por %p32, %p33
    %p35 = scmp.ne.s32.totalorder %s21, %s22
    %p36 = scmp.eq.s32.totalorder %s14, 1
    %p37 = por %p35, %p36
    %p39 = scmp.ne.s32.totalorder %s22, %s38
    %p40 = scmp.eq.s32.totalorder %s14, 0
    %p41 = por %p39, %p40
    %s43 = sadd.s32 %s42, 1
    %p46 = scmp.eq.s32.totalorder %s8, 1
    %p47 = scmp.ne.s32.totalorder %s42, %s44
    %p48 = scmp.eq.s32.totalorder %s8, 0
    %p49 = por %p47, %p48
    %p50 = scmp.ne.s32.totalorder %s42, %s44
    %p51 = scmp.eq.s32.totalorder %s13, 1
    %p52 = por %p50, %p51
    %p53 = scmp.ne.s32.totalorder %s44, %s45
    %p54 = scmp.eq.s32.totalorder %s13, 0
    %p55 = por %p53, %p54
    %p56 = scmp.ne.s32.totalorder %s44, %s45
    %p57 = scmp.eq.s32.totalorder %s14, 1
    %p58 = por %p56, %p57
    %p60 = scmp.ne.s32.totalorder %s45, %s59
    %p61 = scmp.eq.s32.totalorder %s14, 0
    %p62 = por %p60, %p61
    %s63 = ssub.s32 %s8, %s15
    %p64 = scmp.eq.s32.totalorder %s63, 0
    %s66 = sadd.s32 %s65, 1
    %s67 = scalar_select %p64, %s65, %s66
    %p70 = pneg %p64
    %p71 = scmp.eq.s32.totalorder %s8, 1
    %p72 = por %p70, %p71
    %p73 = scmp.ne.s32.totalorder %s65, %s68
    %p74 = scmp.eq.s32.totalorder %s8, 0
    %p75 = por %p73, %p74
    %p76 = scmp.ne.s32.totalorder %s65, %s68
    %p77 = scmp.eq.s32.totalorder %s13, 1
    %p78 = por %p76, %p77
    %p79 = scmp.ne.s32.totalorder %s68, %s69
    %p80 = scmp.eq.s32.totalorder %s13, 0
    %p81 = por %p79, %p80
    %p82 = scmp.ne.s32.totalorder %s68, %s69
    %p83 = scmp.eq.s32.totalorder %s14, 1
    %p84 = por %p82, %p83
    %p86 = scmp.ne.s32.totalorder %s69, %s85
    %p87 = scmp.eq.s32.totalorder %s14, 0
    %p88 = por %p86, %p87
    %p89 = scmp.le.s32.totalorder 1, %s8
    %p90 = scmp.lt.s32.totalorder %s8, 3
    %p91 = pnand %p89, %p90
    %p92 = pneg %p91
    // Predicated region
    $region9: #{conv_decoder_forward.8} parent=5 // pred_check
      _
    $region10: #{conv_decoder_forward.8} parent=5 // pred_check_branch
      %94 = sbr.rel (%p91) target = $region12
    $region11: #{conv_decoder_forward.8} parent=5 // pred_region
      %s95 = ssub.s32 %s8, 1
      // Predicated region
      $region13: #{conv_decoder_forward.8} parent=11 // pred_check
        %p96 = pneg %p55
      $region14: #{conv_decoder_forward.8} parent=11 // pred_check_branch
        %98 = sbr.rel (%p96) target = $region16
      $region15: #{conv_decoder_forward.8} parent=11 // pred_region
        _
      $region16: #{conv_decoder_forward.8} parent=11 // pred_fallthru
        _
    $region12: #{conv_decoder_forward.8} parent=5 // pred_fallthru
      _
    %p99 = scmp.lt.s32.totalorder %s8, 2
    // Predicated region
    $region17: #{conv_decoder_forward.8} parent=5 // pred_check
      %p100 = pneg %p99
    $region18: #{conv_decoder_forward.8} parent=5 // pred_check_branch
      %102 = sbr.rel (%p100) target = $region20
    $region19: #{conv_decoder_forward.8} parent=5 // pred_region
      // Predicated region
      $region21: #{conv_decoder_forward.8} parent=19 // pred_check
        %p103 = pneg %p28
      $region22: #{conv_decoder_forward.8} parent=19 // pred_check_branch
        %105 = sbr.rel (%p103) target = $region24
      $region23: #{conv_decoder_forward.8} parent=19 // pred_region
        %s106 = smul.u32 2, %s8
        %p107 = scmp.lt.s32.totalorder %s106, 3
        %s108 = scalar_select %p107, %s106, 3
        %s109 = smul.addr %s108, 4
        %s110 = scalar_lea.vmem %s0, %s109
        %s111 = smul.u32 2, %s8
      $region24: #{conv_decoder_forward.8} parent=19 // pred_fallthru
        _
    $region20: #{conv_decoder_forward.8} parent=5 // pred_fallthru
      _
    %p112 = scmp.le.s32.totalorder 1, %s8
    %p113 = scmp.lt.s32.totalorder %s8, 3
    %p114 = pnand %p112, %p113
    %p115 = pneg %p114
    // Predicated region
    $region25: #{conv_decoder_forward.8} parent=5 // pred_check
      _
    $region26: #{conv_decoder_forward.8} parent=5 // pred_check_branch
      %117 = sbr.rel (%p114) target = $region28
    $region27: #{conv_decoder_forward.8} parent=5 // pred_region
      %s118 = ssub.s32 %s8, 1
      %s119 = smul.u32 2, %s13
      %p120 = scmp.lt.s32.totalorder %s119, 3
      %s121 = scalar_select %p120, %s119, 3
      %s122 = smul.addr %s121, 4
      %s123 = scalar_lea.vmem %s0, %s122
      %p124 = pneg %p34
      %p125 = pneg %p31
      %p126 = pneg %p55
      %p127 = pneg %p52
      %p128 = pneg %p81
      %p129 = pneg %p78
      %s130 = smul.u32 2, %s13
      %p131 = scmp.lt.s32.totalorder %s130, 3
      %s132 = scalar_select %p131, %s130, 3
      %s133 = smul.addr %s132, 4
      %s134 = smul.addr %s133, 8
      %s135 = scalar_lea.vmem %s2, %s134
      %s136 = smul.u32 2, %s13
      %p137 = scmp.lt.s32.totalorder %s136, 3
      %s138 = scalar_select %p137, %s136, 3
      %s139 = smul.addr %s138, 4
      %s140 = scalar_lea.vmem %s0, %s139
      %s141 = smul.u32 2, %s13
      %s142 = smul.u32 2, %s13
      %p143 = scmp.lt.s32.totalorder %s142, 3
      %s144 = scalar_select %p143, %s142, 3
      %s145 = smul.addr %s144, 4
      %s146 = smul.addr %s145, 8
      %s147 = scalar_lea.vmem %s2, %s146
      %s148 = smul.u32 2, %s13
      %v150 = vld [vmem:[%s140] sm:$0xf]
      %v151 = vld [vmem:[%s140 + $0x4] sm:$0xf]
      %v152 = vld [vmem:[%s1] sm:$0xff]
      %v153 = vld [vmem:[%s1 + $0x8] sm:$0xff]
      %v154 = vld [vmem:[%s1 + $0x10] sm:$0xff]
      %v155 = vld [vmem:[%s1 + $0x18] sm:$0xff]
      %v156 = vld [vmem:[%s1 + $0x20] sm:$0xff]
      %v157 = vld [vmem:[%s1 + $0x28] sm:$0xff]
      %v158 = vld [vmem:[%s1 + $0x30] sm:$0xff]
      %v159 = vld [vmem:[%s1 + $0x38] sm:$0xff]
      %v160 = vld [vmem:[%s1 + $0x40] sm:$0xff]
      %v161 = vld [vmem:[%s1 + $0x48] sm:$0xff]
      %v162 = vld [vmem:[%s1 + $0x50] sm:$0xff]
      %v163 = vld [vmem:[%s1 + $0x58] sm:$0xff]
      %v164 = vld [vmem:[%s1 + $0x60] sm:$0xff]
      %v165 = vld [vmem:[%s1 + $0x68] sm:$0xff]
      %v166 = vld [vmem:[%s1 + $0x70] sm:$0xff]
      %v167 = vld [vmem:[%s1 + $0x78] sm:$0xff]
      %v170 = vunpack.c.l.b16 %v150
      %v171 = vunpack.c.l.b16 %v151
      %v172 = vpack.c.b16 %v171, %v170
      %v189 = vunpack.c.l.b16 %v152
      %v190 = vunpack.c.h.b16 %v152
      %v191 = vunpack.c.l.b16 %v153
      %v192 = vunpack.c.h.b16 %v153
      %v193 = vunpack.c.l.b16 %v154
      %v194 = vunpack.c.h.b16 %v154
      %v195 = vunpack.c.l.b16 %v155
      %v196 = vunpack.c.h.b16 %v155
      %v197 = vunpack.c.l.b16 %v156
      %v198 = vunpack.c.h.b16 %v156
      %v199 = vunpack.c.l.b16 %v157
      %v200 = vunpack.c.h.b16 %v157
      %v201 = vunpack.c.l.b16 %v158
      %v202 = vunpack.c.h.b16 %v158
      %v203 = vunpack.c.l.b16 %v159
      %v204 = vunpack.c.h.b16 %v159
      %v205 = vunpack.c.l.b16 %v160
      %v206 = vunpack.c.h.b16 %v160
      %v207 = vunpack.c.l.b16 %v161
      %v208 = vunpack.c.h.b16 %v161
      %v209 = vunpack.c.l.b16 %v162
      %v210 = vunpack.c.h.b16 %v162
      %v211 = vunpack.c.l.b16 %v163
      %v212 = vunpack.c.h.b16 %v163
      %v213 = vunpack.c.l.b16 %v164
      %v214 = vunpack.c.h.b16 %v164
      %v215 = vunpack.c.l.b16 %v165
      %v216 = vunpack.c.h.b16 %v165
      %v217 = vunpack.c.l.b16 %v166
      %v218 = vunpack.c.h.b16 %v166
      %v219 = vunpack.c.l.b16 %v167
      %v220 = vunpack.c.h.b16 %v167
      %v221 = vpack.c.b16 %v193, %v189
      %v222 = vpack.c.b16 %v194, %v190
      %v223 = vpack.c.b16 %v195, %v191
      %v224 = vpack.c.b16 %v196, %v192
      %v225 = vpack.c.b16 %v201, %v197
      %v226 = vpack.c.b16 %v202, %v198
      %v227 = vpack.c.b16 %v203, %v199
      %v228 = vpack.c.b16 %v204, %v200
      %v229 = vpack.c.b16 %v209, %v205
      %v230 = vpack.c.b16 %v210, %v206
      %v231 = vpack.c.b16 %v211, %v207
      %v232 = vpack.c.b16 %v212, %v208
      %v233 = vpack.c.b16 %v217, %v213
      %v234 = vpack.c.b16 %v218, %v214
      %v235 = vpack.c.b16 %v219, %v215
      %v236 = vpack.c.b16 %v220, %v216
      %vm253 = vcmask 523264
      %v255 = vsel %vm253, %v172, 0
      %257 = vmatprep.subr.bf16.mxu0 0
      %258 = vmatpush1.bf16.msra.mxu0 0
      %259 = vmatprep.subr.bf16.mxu0 0
      %260 = vmatpush1.bf16.msra.mxu0 0
      %261 = vmatprep.subr.bf16.mxu0 0
      %262 = vmatpush1.bf16.msra.mxu0 0
      %263 = vmatprep.subr.bf16.mxu0 0
      %264 = vmatpush1.bf16.msra.mxu0 0
      %265 = vmatprep.subr.bf16.mxu0 %v234
      %266 = vmatpush1.bf16.msra.mxu0 %v233
      %267 = vmatprep.subr.bf16.mxu0 %v230
      %268 = vmatpush1.bf16.msra.mxu0 %v229
      %269 = vmatprep.subr.bf16.mxu0 %v226
      %270 = vmatpush1.bf16.msra.mxu0 %v225
      %271 = vmatprep.subr.bf16.mxu0 %v222
      %272 = vmatpush1.bf16.msra.mxu0 %v221
      %273 = vmatprep.subr.bf16.mxu0 0
      %274 = vmatpush2.bf16.msra.mxu0 0
      %275 = vmatprep.subr.bf16.mxu0 0
      %276 = vmatpush2.bf16.msra.mxu0 0
      %277 = vmatprep.subr.bf16.mxu0 0
      %278 = vmatpush2.bf16.msra.mxu0 0
      %279 = vmatprep.subr.bf16.mxu0 0
      %280 = vmatpush2.bf16.msra.mxu0 0
      %281 = vmatprep.subr.bf16.mxu0 0
      %282 = vmatpush2.bf16.msra.mxu0 0
      %283 = vmatprep.subr.bf16.mxu0 0
      %284 = vmatpush2.bf16.msra.mxu0 0
      %285 = vmatprep.subr.bf16.mxu0 0
      %286 = vmatpush2.bf16.msra.mxu0 0
      %287 = vmatprep.subr.bf16.mxu0 0
      %288 = vmatpush2.bf16.msra.mxu0 0
      %289 = vmatprep.mubr.bf16.mxu0 0
      %290 = vmatmul.mubr.bf16.gmra.mxu0 %v255
      %v291 = vpop.f32.mrf.mxu0
      %v292 = vadd.f32 0.0, %v291
      %v293 = vpop.f32.mrf.mxu0
      %v294 = vadd.f32 0.0, %v293
      %v295 = vpop.f32.mrf.mxu0
      %v296 = vadd.f32 0.0, %v295
      %v297 = vpop.f32.mrf.mxu0
      %v298 = vadd.f32 0.0, %v297
      %299 = vdwg.mxu0
      %300 = vmatprep.subr.bf16.mxu0 0
      %301 = vmatpush1.bf16.msra.mxu0 0
      %302 = vmatprep.subr.bf16.mxu0 0
      %303 = vmatpush1.bf16.msra.mxu0 0
      %304 = vmatprep.subr.bf16.mxu0 0
      %305 = vmatpush1.bf16.msra.mxu0 0
      %306 = vmatprep.subr.bf16.mxu0 0
      %307 = vmatpush1.bf16.msra.mxu0 0
      %308 = vmatprep.subr.bf16.mxu0 %v236
      %309 = vmatpush1.bf16.msra.mxu0 %v235
      %310 = vmatprep.subr.bf16.mxu0 %v232
      %311 = vmatpush1.bf16.msra.mxu0 %v231
      %312 = vmatprep.subr.bf16.mxu0 %v228
      %313 = vmatpush1.bf16.msra.mxu0 %v227
      %314 = vmatprep.subr.bf16.mxu0 %v224
      %315 = vmatpush1.bf16.msra.mxu0 %v223
      %316 = vmatprep.subr.bf16.mxu0 0
      %317 = vmatpush2.bf16.msra.mxu0 0
      %318 = vmatprep.subr.bf16.mxu0 0
      %319 = vmatpush2.bf16.msra.mxu0 0
      %320 = vmatprep.subr.bf16.mxu0 0
      %321 = vmatpush2.bf16.msra.mxu0 0
      %322 = vmatprep.subr.bf16.mxu0 0
      %323 = vmatpush2.bf16.msra.mxu0 0
      %324 = vmatprep.subr.bf16.mxu0 0
      %325 = vmatpush2.bf16.msra.mxu0 0
      %326 = vmatprep.subr.bf16.mxu0 0
      %327 = vmatpush2.bf16.msra.mxu0 0
      %328 = vmatprep.subr.bf16.mxu0 0
      %329 = vmatpush2.bf16.msra.mxu0 0
      %330 = vmatprep.subr.bf16.mxu0 0
      %331 = vmatpush2.bf16.msra.mxu0 0
      %332 = vmatprep.mubr.bf16.mxu0 0
      %333 = vmatmul.mubr.bf16.gmra.mxu0 %v255
      %v334 = vpop.f32.mrf.mxu0
      %v335 = vadd.f32 0.0, %v334
      %v336 = vpop.f32.mrf.mxu0
      %v337 = vadd.f32 0.0, %v336
      %v338 = vpop.f32.mrf.mxu0
      %v339 = vadd.f32 0.0, %v338
      %v340 = vpop.f32.mrf.mxu0
      %v341 = vadd.f32 0.0, %v340
      %342 = vdwg.mxu0
      %343 = vst [vmem:[%s147] sm:$0xff] %v292
      %344 = vst [vmem:[%s147 + $0x8] sm:$0xff] %v294
      %345 = vst [vmem:[%s147 + $0x10] sm:$0xff] %v335
      %346 = vst [vmem:[%s147 + $0x18] sm:$0xff] %v337
      %347 = vst [vmem:[%s147 + $0x20] sm:$0xff] %v296
      %348 = vst [vmem:[%s147 + $0x28] sm:$0xff] %v298
      %349 = vst [vmem:[%s147 + $0x30] sm:$0xff] %v339
      %350 = vst [vmem:[%s147 + $0x38] sm:$0xff] %v341
      %s351 = smul.u32 2, %s13
      %p352 = scmp.lt.s32.totalorder %s351, 3
      %s353 = scalar_select %p352, %s351, 3
      %s354 = smul.addr %s353, 4
      %s355 = smul.addr %s354, 8
      %s356 = scalar_lea.vmem %s2, %s355
      // Predicated region
      $region29: #{conv_decoder_forward.8} parent=27 // pred_check
        %p357 = pneg %p78
      $region30: #{conv_decoder_forward.8} parent=27 // pred_check_branch
        %359 = sbr.rel (%p357) target = $region32
      $region31: #{conv_decoder_forward.8} parent=27 // pred_region
        %s360 = smul.u32 2, %s13
      $region32: #{conv_decoder_forward.8} parent=27 // pred_fallthru
        _
    $region28: #{conv_decoder_forward.8} parent=5 // pred_fallthru
      _
    %p361 = scmp.le.s32.totalorder 2, %s8
    // Predicated region
    $region33: #{conv_decoder_forward.8} parent=5 // pred_check
      %p362 = pneg %p361
    $region34: #{conv_decoder_forward.8} parent=5 // pred_check_branch
      %364 = sbr.rel (%p362) target = $region36
    $region35: #{conv_decoder_forward.8} parent=5 // pred_region
      %s365 = ssub.s32 %s8, 2
      // Predicated region
      $region37: #{conv_decoder_forward.8} parent=35 // pred_check
        %p366 = pneg %p84
      $region38: #{conv_decoder_forward.8} parent=35 // pred_check_branch
        %368 = sbr.rel (%p366) target = $region40
      $region39: #{conv_decoder_forward.8} parent=35 // pred_region
        %s369 = smul.u32 2, %s14
        %p370 = scmp.lt.s32.totalorder %s369, 3
        %s371 = scalar_select %p370, %s369, 3
        %s372 = smul.addr %s371, 4
        %s373 = smul.addr %s372, 8
        %s374 = scalar_lea.vmem %s2, %s373
      $region40: #{conv_decoder_forward.8} parent=35 // pred_fallthru
        _
    $region36: #{conv_decoder_forward.8} parent=5 // pred_fallthru
      _
  $region6: #{conv_decoder_forward.8} parent=0 // loop_footer
    %s12 = sadd.s32 1, %s8
  $region7: #{conv_decoder_forward.8} parent=0 // loop_footer_branch
    %7 = sbr.rel target = $region3
  $region8: #{conv_decoder_forward.8} parent=0 // loop_exit
    _

// kernel: conv_decoder_forward.9
$region0: #{conv_decoder_forward.9}
  #allocation0 [shape = 'u32[]', space=smem, size = 0x4, offset = 0x4, fixed_abs, tag = 'smem constant byte address 0x4 - core index']
  #allocation1 [shape = 'u32[144,128]{1,0:T(1,128)}', space=vmem, size = 0x12000, scoped, tag = 'internal scratch']
  %s0 = inlined_call_operand.vmem [shape: bf16[128,32], index: 0, kind: input, shape index: {}]
  %s1 = inlined_call_operand.vmem [shape: bf16[32,512], index: 1, kind: input, shape index: {}]
  %s2 = inlined_call_operand.vmem [shape: f32[128,512], index: 2, kind: output, shape index: {}]
  %s3 = sld [smem:[#allocation0]]
  $region41: #{conv_decoder_forward.9} parent=0
    _
  %s5 = ssub.s32 1, %s3
  %s6 = scalar_select 0, %s5, %s3
  loop: start=0, step=1, limit=4
  $region2: #{conv_decoder_forward.9} parent=0 // loop_pre_header
    _
  $region3: #{conv_decoder_forward.9} parent=0 // loop_header
    %s8 = sphi 0, %s12
    %p9 = scmp.ge.s32.totalorder %s8, 4
    %s18 = sphi 0, %s20
    %s21 = sphi 0, %s18
    %s22 = sphi 0, %s21
    %s38 = sphi 0, %s22
    %s42 = sphi 0, %s42
    %s44 = sphi 0, %s42
    %s45 = sphi 0, %s44
    %s59 = sphi 0, %s45
    %s65 = sphi 0, %s67
    %s68 = sphi 0, %s65
    %s69 = sphi 0, %s68
    %s85 = sphi 0, %s69
  $region4: #{conv_decoder_forward.9} parent=0 // loop_header_branch
    %11 = sbr.rel (%p9) target = $region8
  $region5: #{conv_decoder_forward.9} parent=0 // loop_body
    %s13 = ssub.s32 %s8, 1
    %s14 = ssub.s32 %s8, 2
    %s15 = sadd.s32 %s8, 1
    %s16 = ssub.s32 %s8, %s15
    %p17 = scmp.eq.s32.totalorder %s16, 0
    %s19 = sadd.s32 %s18, 1
    %s20 = scalar_select %p17, %s18, %s19
    %p23 = pneg %p17
    %p24 = scmp.eq.s32.totalorder %s8, 1
    %p25 = por %p23, %p24
    %p26 = scmp.ne.s32.totalorder %s18, %s21
    %p27 = scmp.eq.s32.totalorder %s8, 0
    %p28 = por %p26, %p27
    %p29 = scmp.ne.s32.totalorder %s18, %s21
    %p30 = scmp.eq.s32.totalorder %s13, 1
    %p31 = por %p29, %p30
    %p32 = scmp.ne.s32.totalorder %s21, %s22
    %p33 = scmp.eq.s32.totalorder %s13, 0
    %p34 = por %p32, %p33
    %p35 = scmp.ne.s32.totalorder %s21, %s22
    %p36 = scmp.eq.s32.totalorder %s14, 1
    %p37 = por %p35, %p36
    %p39 = scmp.ne.s32.totalorder %s22, %s38
    %p40 = scmp.eq.s32.totalorder %s14, 0
    %p41 = por %p39, %p40
    %s43 = sadd.s32 %s42, 1
    %p46 = scmp.eq.s32.totalorder %s8, 1
    %p47 = scmp.ne.s32.totalorder %s42, %s44
    %p48 = scmp.eq.s32.totalorder %s8, 0
    %p49 = por %p47, %p48
    %p50 = scmp.ne.s32.totalorder %s42, %s44
    %p51 = scmp.eq.s32.totalorder %s13, 1
    %p52 = por %p50, %p51
    %p53 = scmp.ne.s32.totalorder %s44, %s45
    %p54 = scmp.eq.s32.totalorder %s13, 0
    %p55 = por %p53, %p54
    %p56 = scmp.ne.s32.totalorder %s44, %s45
    %p57 = scmp.eq.s32.totalorder %s14, 1
    %p58 = por %p56, %p57
    %p60 = scmp.ne.s32.totalorder %s45, %s59
    %p61 = scmp.eq.s32.totalorder %s14, 0
    %p62 = por %p60, %p61
    %s63 = ssub.s32 %s8, %s15
    %p64 = scmp.eq.s32.totalorder %s63, 0
    %s66 = sadd.s32 %s65, 1
    %s67 = scalar_select %p64, %s65, %s66
    %p70 = pneg %p64
    %p71 = scmp.eq.s32.totalorder %s8, 1
    %p72 = por %p70, %p71
    %p73 = scmp.ne.s32.totalorder %s65, %s68
    %p74 = scmp.eq.s32.totalorder %s8, 0
    %p75 = por %p73, %p74
    %p76 = scmp.ne.s32.totalorder %s65, %s68
    %p77 = scmp.eq.s32.totalorder %s13, 1
    %p78 = por %p76, %p77
    %p79 = scmp.ne.s32.totalorder %s68, %s69
    %p80 = scmp.eq.s32.totalorder %s13, 0
    %p81 = por %p79, %p80
    %p82 = scmp.ne.s32.totalorder %s68, %s69
    %p83 = scmp.eq.s32.totalorder %s14, 1
    %p84 = por %p82, %p83
    %p86 = scmp.ne.s32.totalorder %s69, %s85
    %p87 = scmp.eq.s32.totalorder %s14, 0
    %p88 = por %p86, %p87
    %p89 = scmp.le.s32.totalorder 1, %s8
    %p90 = scmp.lt.s32.totalorder %s8, 3
    %p91 = pnand %p89, %p90
    %p92 = pneg %p91
    // Predicated region
    $region9: #{conv_decoder_forward.9} parent=5 // pred_check
      _
    $region10: #{conv_decoder_forward.9} parent=5 // pred_check_branch
      %94 = sbr.rel (%p91) target = $region12
    $region11: #{conv_decoder_forward.9} parent=5 // pred_region
      %s95 = ssub.s32 %s8, 1
      // Predicated region
      $region13: #{conv_decoder_forward.9} parent=11 // pred_check
        %p96 = pneg %p55
      $region14: #{conv_decoder_forward.9} parent=11 // pred_check_branch
        %98 = sbr.rel (%p96) target = $region16
      $region15: #{conv_decoder_forward.9} parent=11 // pred_region
        _
      $region16: #{conv_decoder_forward.9} parent=11 // pred_fallthru
        _
    $region12: #{conv_decoder_forward.9} parent=5 // pred_fallthru
      _
    %p99 = scmp.lt.s32.totalorder %s8, 2
    // Predicated region
    $region17: #{conv_decoder_forward.9} parent=5 // pred_check
      %p100 = pneg %p99
    $region18: #{conv_decoder_forward.9} parent=5 // pred_check_branch
      %102 = sbr.rel (%p100) target = $region20
    $region19: #{conv_decoder_forward.9} parent=5 // pred_region
      // Predicated region
      $region21: #{conv_decoder_forward.9} parent=19 // pred_check
        %p103 = pneg %p28
      $region22: #{conv_decoder_forward.9} parent=19 // pred_check_branch
        %105 = sbr.rel (%p103) target = $region24
      $region23: #{conv_decoder_forward.9} parent=19 // pred_region
        %s106 = smul.u32 8, %s8
        %p107 = scmp.lt.s32.totalorder %s106, 15
        %s108 = scalar_select %p107, %s106, 15
        %s109 = smul.addr %s108, 4
        %s110 = scalar_lea.vmem %s0, %s109
        %s111 = smul.u32 8, %s8
      $region24: #{conv_decoder_forward.9} parent=19 // pred_fallthru
        _
    $region20: #{conv_decoder_forward.9} parent=5 // pred_fallthru
      _
    %p112 = scmp.le.s32.totalorder 1, %s8
    %p113 = scmp.lt.s32.totalorder %s8, 3
    %p114 = pnand %p112, %p113
    %p115 = pneg %p114
    // Predicated region
    $region25: #{conv_decoder_forward.9} parent=5 // pred_check
      _
    $region26: #{conv_decoder_forward.9} parent=5 // pred_check_branch
      %117 = sbr.rel (%p114) target = $region28
    $region27: #{conv_decoder_forward.9} parent=5 // pred_region
      %s118 = ssub.s32 %s8, 1
      %s119 = smul.u32 8, %s13
      %p120 = scmp.lt.s32.totalorder %s119, 15
      %s121 = scalar_select %p120, %s119, 15
      %s122 = smul.addr %s121, 4
      %s123 = scalar_lea.vmem %s0, %s122
      %p124 = pneg %p34
      %p125 = pneg %p31
      %p126 = pneg %p55
      %p127 = pneg %p52
      %p128 = pneg %p81
      %p129 = pneg %p78
      %s130 = smul.u32 8, %s13
      %p131 = scmp.lt.s32.totalorder %s130, 15
      %s132 = scalar_select %p131, %s130, 15
      %s133 = smul.addr %s132, 4
      %s134 = smul.addr %s133, 8
      %s135 = scalar_lea.vmem %s2, %s134
      %s136 = smul.u32 8, %s13
      %p137 = scmp.lt.s32.totalorder %s136, 15
      %s138 = scalar_select %p137, %s136, 15
      %s139 = smul.addr %s138, 4
      %s140 = scalar_lea.vmem %s0, %s139
      %s141 = smul.u32 8, %s13
      %s142 = smul.u32 8, %s13
      %p143 = scmp.lt.s32.totalorder %s142, 15
      %s144 = scalar_select %p143, %s142, 15
      %s145 = smul.addr %s144, 4
      %s146 = smul.addr %s145, 8
      %s147 = scalar_lea.vmem %s2, %s146
      %s148 = smul.u32 8, %s13
      %v150 = vld [vmem:[%s140] sm:$0xf]
      %v151 = vld [vmem:[%s140 + $0x4] sm:$0xf]
      %v152 = vld [vmem:[%s140 + $0x8] sm:$0xf]
      %v153 = vld [vmem:[%s140 + $0xc] sm:$0xf]
      %v154 = vld [vmem:[%s140 + $0x10] sm:$0xf]
      %v155 = vld [vmem:[%s140 + $0x14] sm:$0xf]
      %v156 = vld [vmem:[%s140 + $0x18] sm:$0xf]
      %v157 = vld [vmem:[%s140 + $0x1c] sm:$0xf]
      %v158 = vld [vmem:[%s1] sm:$0xff]
      %v159 = vld [vmem:[%s1 + $0x8] sm:$0xff]
      %v160 = vld [vmem:[%s1 + $0x10] sm:$0xff]
      %v161 = vld [vmem:[%s1 + $0x18] sm:$0xff]
      %v162 = vld [vmem:[%s1 + $0x20] sm:$0xff]
      %v163 = vld [vmem:[%s1 + $0x28] sm:$0xff]
      %v164 = vld [vmem:[%s1 + $0x30] sm:$0xff]
      %v165 = vld [vmem:[%s1 + $0x38] sm:$0xff]
      %v174 = vunpack.c.l.b16 %v150
      %v175 = vunpack.c.l.b16 %v151
      %v176 = vunpack.c.l.b16 %v152
      %v177 = vunpack.c.l.b16 %v153
      %v178 = vunpack.c.l.b16 %v154
      %v179 = vunpack.c.l.b16 %v155
      %v180 = vunpack.c.l.b16 %v156
      %v181 = vunpack.c.l.b16 %v157
      %v182 = vpack.c.b16 %v175, %v174
      %v183 = vpack.c.b16 %v177, %v176
      %v184 = vpack.c.b16 %v179, %v178
      %v185 = vpack.c.b16 %v181, %v180
      %v194 = vunpack.c.l.b16 %v158
      %v195 = vunpack.c.h.b16 %v158
      %v196 = vunpack.c.l.b16 %v159
      %v197 = vunpack.c.h.b16 %v159
      %v198 = vunpack.c.l.b16 %v160
      %v199 = vunpack.c.h.b16 %v160
      %v200 = vunpack.c.l.b16 %v161
      %v201 = vunpack.c.h.b16 %v161
      %v202 = vunpack.c.l.b16 %v162
      %v203 = vunpack.c.h.b16 %v162
      %v204 = vunpack.c.l.b16 %v163
      %v205 = vunpack.c.h.b16 %v163
      %v206 = vunpack.c.l.b16 %v164
      %v207 = vunpack.c.h.b16 %v164
      %v208 = vunpack.c.l.b16 %v165
      %v209 = vunpack.c.h.b16 %v165
      %v210 = vpack.c.b16 %v198, %v194
      %v211 = vpack.c.b16 %v199, %v195
      %v212 = vpack.c.b16 %v200, %v196
      %v213 = vpack.c.b16 %v201, %v197
      %v214 = vpack.c.b16 %v206, %v202
      %v215 = vpack.c.b16 %v207, %v203
      %v216 = vpack.c.b16 %v208, %v204
      %v217 = vpack.c.b16 %v209, %v205
      %vm226 = vcmask 261120
      %v228 = vsel %vm226, %v182, 0
      %v231 = vsel %vm226, %v183, 0
      %v234 = vsel %vm226, %v184, 0
      %v237 = vsel %vm226, %v185, 0
      %239 = vmatprep.subr.bf16.mxu0 0
      %240 = vmatpush1.bf16.msra.mxu0 0
      %241 = vmatprep.subr.bf16.mxu0 0
      %242 = vmatpush1.bf16.msra.mxu0 0
      %243 = vmatprep.subr.bf16.mxu0 0
      %244 = vmatpush1.bf16.msra.mxu0 0
      %245 = vmatprep.subr.bf16.mxu0 0
      %246 = vmatpush1.bf16.msra.mxu0 0
      %247 = vmatprep.subr.bf16.mxu0 0
      %248 = vmatpush1.bf16.msra.mxu0 0
      %249 = vmatprep.subr.bf16.mxu0 0
      %250 = vmatpush1.bf16.msra.mxu0 0
      %251 = vmatprep.subr.bf16.mxu0 %v215
      %252 = vmatpush1.bf16.msra.mxu0 %v214
      %253 = vmatprep.subr.bf16.mxu0 %v211
      %254 = vmatpush1.bf16.msra.mxu0 %v210
      %255 = vmatprep.subr.bf16.mxu0 0
      %256 = vmatpush2.bf16.msra.mxu0 0
      %257 = vmatprep.subr.bf16.mxu0 0
      %258 = vmatpush2.bf16.msra.mxu0 0
      %259 = vmatprep.subr.bf16.mxu0 0
      %260 = vmatpush2.bf16.msra.mxu0 0
      %261 = vmatprep.subr.bf16.mxu0 0
      %262 = vmatpush2.bf16.msra.mxu0 0
      %263 = vmatprep.subr.bf16.mxu0 0
      %264 = vmatpush2.bf16.msra.mxu0 0
      %265 = vmatprep.subr.bf16.mxu0 0
      %266 = vmatpush2.bf16.msra.mxu0 0
      %267 = vmatprep.subr.bf16.mxu0 0
      %268 = vmatpush2.bf16.msra.mxu0 0
      %269 = vmatprep.subr.bf16.mxu0 0
      %270 = vmatpush2.bf16.msra.mxu0 0
      %271 = vmatprep.mubr.bf16.mxu0 0
      %272 = vmatmul.mubr.bf16.gmra.mxu0 %v228
      %v273 = vpop.f32.mrf.mxu0
      %v274 = vadd.f32 0.0, %v273
      %v275 = vpop.f32.mrf.mxu0
      %v276 = vadd.f32 0.0, %v275
      %v277 = vpop.f32.mrf.mxu0
      %v278 = vadd.f32 0.0, %v277
      %v279 = vpop.f32.mrf.mxu0
      %v280 = vadd.f32 0.0, %v279
      %281 = vmatprep.mubr.bf16.mxu0 0
      %282 = vmatmul.mubr.bf16.gmra.mxu0 %v231
      %v283 = vpop.f32.mrf.mxu0
      %v284 = vadd.f32 0.0, %v283
      %v285 = vpop.f32.mrf.mxu0
      %v286 = vadd.f32 0.0, %v285
      %v287 = vpop.f32.mrf.mxu0
      %v288 = vadd.f32 0.0, %v287
      %v289 = vpop.f32.mrf.mxu0
      %v290 = vadd.f32 0.0, %v289
      %291 = vmatprep.mubr.bf16.mxu0 0
      %292 = vmatmul.mubr.bf16.gmra.mxu0 %v234
      %v293 = vpop.f32.mrf.mxu0
      %v294 = vadd.f32 0.0, %v293
      %v295 = vpop.f32.mrf.mxu0
      %v296 = vadd.f32 0.0, %v295
      %v297 = vpop.f32.mrf.mxu0
      %v298 = vadd.f32 0.0, %v297
      %v299 = vpop.f32.mrf.mxu0
      %v300 = vadd.f32 0.0, %v299
      %301 = vmatprep.mubr.bf16.mxu0 0
      %302 = vmatmul.mubr.bf16.gmra.mxu0 %v237
      %v303 = vpop.f32.mrf.mxu0
      %v304 = vadd.f32 0.0, %v303
      %v305 = vpop.f32.mrf.mxu0
      %v306 = vadd.f32 0.0, %v305
      %v307 = vpop.f32.mrf.mxu0
      %v308 = vadd.f32 0.0, %v307
      %v309 = vpop.f32.mrf.mxu0
      %v310 = vadd.f32 0.0, %v309
      %311 = vdwg.mxu0
      %312 = vmatprep.subr.bf16.mxu0 0
      %313 = vmatpush1.bf16.msra.mxu0 0
      %314 = vmatprep.subr.bf16.mxu0 0
      %315 = vmatpush1.bf16.msra.mxu0 0
      %316 = vmatprep.subr.bf16.mxu0 0
      %317 = vmatpush1.bf16.msra.mxu0 0
      %318 = vmatprep.subr.bf16.mxu0 0
      %319 = vmatpush1.bf16.msra.mxu0 0
      %320 = vmatprep.subr.bf16.mxu0 0
      %321 = vmatpush1.bf16.msra.mxu0 0
      %322 = vmatprep.subr.bf16.mxu0 0
      %323 = vmatpush1.bf16.msra.mxu0 0
      %324 = vmatprep.subr.bf16.mxu0 %v217
      %325 = vmatpush1.bf16.msra.mxu0 %v216
      %326 = vmatprep.subr.bf16.mxu0 %v213
      %327 = vmatpush1.bf16.msra.mxu0 %v212
      %328 = vmatprep.subr.bf16.mxu0 0
      %329 = vmatpush2.bf16.msra.mxu0 0
      %330 = vmatprep.subr.bf16.mxu0 0
      %331 = vmatpush2.bf16.msra.mxu0 0
      %332 = vmatprep.subr.bf16.mxu0 0
      %333 = vmatpush2.bf16.msra.mxu0 0
      %334 = vmatprep.subr.bf16.mxu0 0
      %335 = vmatpush2.bf16.msra.mxu0 0
      %336 = vmatprep.subr.bf16.mxu0 0
      %337 = vmatpush2.bf16.msra.mxu0 0
      %338 = vmatprep.subr.bf16.mxu0 0
      %339 = vmatpush2.bf16.msra.mxu0 0
      %340 = vmatprep.subr.bf16.mxu0 0
      %341 = vmatpush2.bf16.msra.mxu0 0
      %342 = vmatprep.subr.bf16.mxu0 0
      %343 = vmatpush2.bf16.msra.mxu0 0
      %344 = vmatprep.mubr.bf16.mxu0 0
      %345 = vmatmul.mubr.bf16.gmra.mxu0 %v228
      %v346 = vpop.f32.mrf.mxu0
      %v347 = vadd.f32 0.0, %v346
      %v348 = vpop.f32.mrf.mxu0
      %v349 = vadd.f32 0.0, %v348
      %v350 = vpop.f32.mrf.mxu0
      %v351 = vadd.f32 0.0, %v350
      %v352 = vpop.f32.mrf.mxu0
      %v353 = vadd.f32 0.0, %v352
      %354 = vmatprep.mubr.bf16.mxu0 0
      %355 = vmatmul.mubr.bf16.gmra.mxu0 %v231
      %v356 = vpop.f32.mrf.mxu0
      %v357 = vadd.f32 0.0, %v356
      %v358 = vpop.f32.mrf.mxu0
      %v359 = vadd.f32 0.0, %v358
      %v360 = vpop.f32.mrf.mxu0
      %v361 = vadd.f32 0.0, %v360
      %v362 = vpop.f32.mrf.mxu0
      %v363 = vadd.f32 0.0, %v362
      %364 = vmatprep.mubr.bf16.mxu0 0
      %365 = vmatmul.mubr.bf16.gmra.mxu0 %v234
      %v366 = vpop.f32.mrf.mxu0
      %v367 = vadd.f32 0.0, %v366
      %v368 = vpop.f32.mrf.mxu0
      %v369 = vadd.f32 0.0, %v368
      %v370 = vpop.f32.mrf.mxu0
      %v371 = vadd.f32 0.0, %v370
      %v372 = vpop.f32.mrf.mxu0
      %v373 = vadd.f32 0.0, %v372
      %374 = vmatprep.mubr.bf16.mxu0 0
      %375 = vmatmul.mubr.bf16.gmra.mxu0 %v237
      %v376 = vpop.f32.mrf.mxu0
      %v377 = vadd.f32 0.0, %v376
      %v378 = vpop.f32.mrf.mxu0
      %v379 = vadd.f32 0.0, %v378
      %v380 = vpop.f32.mrf.mxu0
      %v381 = vadd.f32 0.0, %v380
      %v382 = vpop.f32.mrf.mxu0
      %v383 = vadd.f32 0.0, %v382
      %384 = vdwg.mxu0
      %385 = vst [vmem:[%s147] sm:$0xff] %v274
      %386 = vst [vmem:[%s147 + $0x8] sm:$0xff] %v276
      %387 = vst [vmem:[%s147 + $0x10] sm:$0xff] %v347
      %388 = vst [vmem:[%s147 + $0x18] sm:$0xff] %v349
      %389 = vst [vmem:[%s147 + $0x20] sm:$0xff] %v278
      %390 = vst [vmem:[%s147 + $0x28] sm:$0xff] %v280
      %391 = vst [vmem:[%s147 + $0x30] sm:$0xff] %v351
      %392 = vst [vmem:[%s147 + $0x38] sm:$0xff] %v353
      %393 = vst [vmem:[%s147 + $0x40] sm:$0xff] %v284
      %394 = vst [vmem:[%s147 + $0x48] sm:$0xff] %v286
      %395 = vst [vmem:[%s147 + $0x50] sm:$0xff] %v357
      %396 = vst [vmem:[%s147 + $0x58] sm:$0xff] %v359
      %397 = vst [vmem:[%s147 + $0x60] sm:$0xff] %v288
      %398 = vst [vmem:[%s147 + $0x68] sm:$0xff] %v290
      %399 = vst [vmem:[%s147 + $0x70] sm:$0xff] %v361
      %400 = vst [vmem:[%s147 + $0x78] sm:$0xff] %v363
      %401 = vst [vmem:[%s147 + $0x80] sm:$0xff] %v294
      %402 = vst [vmem:[%s147 + $0x88] sm:$0xff] %v296
      %403 = vst [vmem:[%s147 + $0x90] sm:$0xff] %v367
      %404 = vst [vmem:[%s147 + $0x98] sm:$0xff] %v369
      %405 = vst [vmem:[%s147 + $0xa0] sm:$0xff] %v298
      %406 = vst [vmem:[%s147 + $0xa8] sm:$0xff] %v300
      %407 = vst [vmem:[%s147 + $0xb0] sm:$0xff] %v371
      %408 = vst [vmem:[%s147 + $0xb8] sm:$0xff] %v373
      %409 = vst [vmem:[%s147 + $0xc0] sm:$0xff] %v304
      %410 = vst [vmem:[%s147 + $0xc8] sm:$0xff] %v306
      %411 = vst [vmem:[%s147 + $0xd0] sm:$0xff] %v377
      %412 = vst [vmem:[%s147 + $0xd8] sm:$0xff] %v379
      %413 = vst [vmem:[%s147 + $0xe0] sm:$0xff] %v308
      %414 = vst [vmem:[%s147 + $0xe8] sm:$0xff] %v310
      %415 = vst [vmem:[%s147 + $0xf0] sm:$0xff] %v381
      %416 = vst [vmem:[%s147 + $0xf8] sm:$0xff] %v383
      %s417 = smul.u32 8, %s13
      %p418 = scmp.lt.s32.totalorder %s417, 15
      %s419 = scalar_select %p418, %s417, 15
      %s420 = smul.addr %s419, 4
      %s421 = smul.addr %s420, 8
      %s422 = scalar_lea.vmem %s2, %s421
      // Predicated region
      $region29: #{conv_decoder_forward.9} parent=27 // pred_check
        %p423 = pneg %p78
      $region30: #{conv_decoder_forward.9} parent=27 // pred_check_branch
        %425 = sbr.rel (%p423) target = $region32
      $region31: #{conv_decoder_forward.9} parent=27 // pred_region
        %s426 = smul.u32 8, %s13
      $region32: #{conv_decoder_forward.9} parent=27 // pred_fallthru
        _
    $region28: #{conv_decoder_forward.9} parent=5 // pred_fallthru
      _
    %p427 = scmp.le.s32.totalorder 2, %s8
    // Predicated region
    $region33: #{conv_decoder_forward.9} parent=5 // pred_check
      %p428 = pneg %p427
    $region34: #{conv_decoder_forward.9} parent=5 // pred_check_branch
      %430 = sbr.rel (%p428) target = $region36
    $region35: #{conv_decoder_forward.9} parent=5 // pred_region
      %s431 = ssub.s32 %s8, 2
      // Predicated region
      $region37: #{conv_decoder_forward.9} parent=35 // pred_check
        %p432 = pneg %p84
      $region38: #{conv_decoder_forward.9} parent=35 // pred_check_branch
        %434 = sbr.rel (%p432) target = $region40
      $region39: #{conv_decoder_forward.9} parent=35 // pred_region
        %s435 = smul.u32 8, %s14
        %p436 = scmp.lt.s32.totalorder %s435, 15
        %s437 = scalar_select %p436, %s435, 15
        %s438 = smul.addr %s437, 4
        %s439 = smul.addr %s438, 8
        %s440 = scalar_lea.vmem %s2, %s439
      $region40: #{conv_decoder_forward.9} parent=35 // pred_fallthru
        _
    $region36: #{conv_decoder_forward.9} parent=5 // pred_fallthru
      _
  $region6: #{conv_decoder_forward.9} parent=0 // loop_footer
    %s12 = sadd.s32 1, %s8
  $region7: #{conv_decoder_forward.9} parent=0 // loop_footer_branch
    %7 = sbr.rel target = $region3
  $region8: #{conv_decoder_forward.9} parent=0 // loop_exit
    _

// kernel: conv_decoder_forward.10
$region0: #{conv_decoder_forward.10}
  #allocation0 [shape = 'u32[]', space=smem, size = 0x4, offset = 0x4, fixed_abs, tag = 'smem constant byte address 0x4 - core index']
  #allocation1 [shape = 'u32[144,128]{1,0:T(1,128)}', space=vmem, size = 0x12000, scoped, tag = 'internal scratch']
  %s0 = inlined_call_operand.vmem [shape: bf16[512,32], index: 0, kind: input, shape index: {}]
  %s1 = inlined_call_operand.vmem [shape: bf16[32,512], index: 1, kind: input, shape index: {}]
  %s2 = inlined_call_operand.vmem [shape: f32[512,512], index: 2, kind: output, shape index: {}]
  %s3 = sld [smem:[#allocation0]]
  $region41: #{conv_decoder_forward.10} parent=0
    _
  %s5 = ssub.s32 1, %s3
  %s6 = scalar_select 0, %s5, %s3
  loop: start=0, step=1, limit=4
  $region2: #{conv_decoder_forward.10} parent=0 // loop_pre_header
    _
  $region3: #{conv_decoder_forward.10} parent=0 // loop_header
    %s8 = sphi 0, %s12
    %p9 = scmp.ge.s32.totalorder %s8, 4
    %s18 = sphi 0, %s20
    %s21 = sphi 0, %s18
    %s22 = sphi 0, %s21
    %s38 = sphi 0, %s22
    %s42 = sphi 0, %s42
    %s44 = sphi 0, %s42
    %s45 = sphi 0, %s44
    %s59 = sphi 0, %s45
    %s65 = sphi 0, %s67
    %s68 = sphi 0, %s65
    %s69 = sphi 0, %s68
    %s85 = sphi 0, %s69
  $region4: #{conv_decoder_forward.10} parent=0 // loop_header_branch
    %11 = sbr.rel (%p9) target = $region8
  $region5: #{conv_decoder_forward.10} parent=0 // loop_body
    %s13 = ssub.s32 %s8, 1
    %s14 = ssub.s32 %s8, 2
    %s15 = sadd.s32 %s8, 1
    %s16 = ssub.s32 %s8, %s15
    %p17 = scmp.eq.s32.totalorder %s16, 0
    %s19 = sadd.s32 %s18, 1
    %s20 = scalar_select %p17, %s18, %s19
    %p23 = pneg %p17
    %p24 = scmp.eq.s32.totalorder %s8, 1
    %p25 = por %p23, %p24
    %p26 = scmp.ne.s32.totalorder %s18, %s21
    %p27 = scmp.eq.s32.totalorder %s8, 0
    %p28 = por %p26, %p27
    %p29 = scmp.ne.s32.totalorder %s18, %s21
    %p30 = scmp.eq.s32.totalorder %s13, 1
    %p31 = por %p29, %p30
    %p32 = scmp.ne.s32.totalorder %s21, %s22
    %p33 = scmp.eq.s32.totalorder %s13, 0
    %p34 = por %p32, %p33
    %p35 = scmp.ne.s32.totalorder %s21, %s22
    %p36 = scmp.eq.s32.totalorder %s14, 1
    %p37 = por %p35, %p36
    %p39 = scmp.ne.s32.totalorder %s22, %s38
    %p40 = scmp.eq.s32.totalorder %s14, 0
    %p41 = por %p39, %p40
    %s43 = sadd.s32 %s42, 1
    %p46 = scmp.eq.s32.totalorder %s8, 1
    %p47 = scmp.ne.s32.totalorder %s42, %s44
    %p48 = scmp.eq.s32.totalorder %s8, 0
    %p49 = por %p47, %p48
    %p50 = scmp.ne.s32.totalorder %s42, %s44
    %p51 = scmp.eq.s32.totalorder %s13, 1
    %p52 = por %p50, %p51
    %p53 = scmp.ne.s32.totalorder %s44, %s45
    %p54 = scmp.eq.s32.totalorder %s13, 0
    %p55 = por %p53, %p54
    %p56 = scmp.ne.s32.totalorder %s44, %s45
    %p57 = scmp.eq.s32.totalorder %s14, 1
    %p58 = por %p56, %p57
    %p60 = scmp.ne.s32.totalorder %s45, %s59
    %p61 = scmp.eq.s32.totalorder %s14, 0
    %p62 = por %p60, %p61
    %s63 = ssub.s32 %s8, %s15
    %p64 = scmp.eq.s32.totalorder %s63, 0
    %s66 = sadd.s32 %s65, 1
    %s67 = scalar_select %p64, %s65, %s66
    %p70 = pneg %p64
    %p71 = scmp.eq.s32.totalorder %s8, 1
    %p72 = por %p70, %p71
    %p73 = scmp.ne.s32.totalorder %s65, %s68
    %p74 = scmp.eq.s32.totalorder %s8, 0
    %p75 = por %p73, %p74
    %p76 = scmp.ne.s32.totalorder %s65, %s68
    %p77 = scmp.eq.s32.totalorder %s13, 1
    %p78 = por %p76, %p77
    %p79 = scmp.ne.s32.totalorder %s68, %s69
    %p80 = scmp.eq.s32.totalorder %s13, 0
    %p81 = por %p79, %p80
    %p82 = scmp.ne.s32.totalorder %s68, %s69
    %p83 = scmp.eq.s32.totalorder %s14, 1
    %p84 = por %p82, %p83
    %p86 = scmp.ne.s32.totalorder %s69, %s85
    %p87 = scmp.eq.s32.totalorder %s14, 0
    %p88 = por %p86, %p87
    %p89 = scmp.le.s32.totalorder 1, %s8
    %p90 = scmp.lt.s32.totalorder %s8, 3
    %p91 = pnand %p89, %p90
    %p92 = pneg %p91
    // Predicated region
    $region9: #{conv_decoder_forward.10} parent=5 // pred_check
      _
    $region10: #{conv_decoder_forward.10} parent=5 // pred_check_branch
      %94 = sbr.rel (%p91) target = $region12
    $region11: #{conv_decoder_forward.10} parent=5 // pred_region
      %s95 = ssub.s32 %s8, 1
      // Predicated region
      $region13: #{conv_decoder_forward.10} parent=11 // pred_check
        %p96 = pneg %p55
      $region14: #{conv_decoder_forward.10} parent=11 // pred_check_branch
        %98 = sbr.rel (%p96) target = $region16
      $region15: #{conv_decoder_forward.10} parent=11 // pred_region
        _
      $region16: #{conv_decoder_forward.10} parent=11 // pred_fallthru
        _
    $region12: #{conv_decoder_forward.10} parent=5 // pred_fallthru
      _
    %p99 = scmp.lt.s32.totalorder %s8, 2
    // Predicated region
    $region17: #{conv_decoder_forward.10} parent=5 // pred_check
      %p100 = pneg %p99
    $region18: #{conv_decoder_forward.10} parent=5 // pred_check_branch
      %102 = sbr.rel (%p100) target = $region20
    $region19: #{conv_decoder_forward.10} parent=5 // pred_region
      // Predicated region
      $region21: #{conv_decoder_forward.10} parent=19 // pred_check
        %p103 = pneg %p28
      $region22: #{conv_decoder_forward.10} parent=19 // pred_check_branch
        %105 = sbr.rel (%p103) target = $region24
      $region23: #{conv_decoder_forward.10} parent=19 // pred_region
        %s106 = smul.u32 32, %s8
        %p107 = scmp.lt.s32.totalorder %s106, 63
        %s108 = scalar_select %p107, %s106, 63
        %s109 = smul.addr %s108, 4
        %s110 = scalar_lea.vmem %s0, %s109
        %s111 = smul.u32 32, %s8
      $region24: #{conv_decoder_forward.10} parent=19 // pred_fallthru
        _
    $region20: #{conv_decoder_forward.10} parent=5 // pred_fallthru
      _
    %p112 = scmp.le.s32.totalorder 1, %s8
    %p113 = scmp.lt.s32.totalorder %s8, 3
    %p114 = pnand %p112, %p113
    %p115 = pneg %p114
    // Predicated region
    $region25: #{conv_decoder_forward.10} parent=5 // pred_check
      _
    $region26: #{conv_decoder_forward.10} parent=5 // pred_check_branch
      %117 = sbr.rel (%p114) target = $region28
    $region27: #{conv_decoder_forward.10} parent=5 // pred_region
      %s118 = ssub.s32 %s8, 1
      %s119 = smul.u32 32, %s13
      %p120 = scmp.lt.s32.totalorder %s119, 63
      %s121 = scalar_select %p120, %s119, 63
      %s122 = smul.addr %s121, 4
      %s123 = scalar_lea.vmem %s0, %s122
      %p124 = pneg %p34
      %p125 = pneg %p31
      %p126 = pneg %p55
      %p127 = pneg %p52
      %p128 = pneg %p81
      %p129 = pneg %p78
      %s130 = smul.u32 32, %s13
      %p131 = scmp.lt.s32.totalorder %s130, 63
      %s132 = scalar_select %p131, %s130, 63
      %s133 = smul.addr %s132, 4
      %s134 = smul.addr %s133, 8
      %s135 = scalar_lea.vmem %s2, %s134
      %s136 = smul.u32 32, %s13
      %p137 = scmp.lt.s32.totalorder %s136, 63
      %s138 = scalar_select %p137, %s136, 63
      %s139 = smul.addr %s138, 4
      %s140 = scalar_lea.vmem %s0, %s139
      %s141 = smul.u32 32, %s13
      %s142 = smul.u32 32, %s13
      %p143 = scmp.lt.s32.totalorder %s142, 63
      %s144 = scalar_select %p143, %s142, 63
      %s145 = smul.addr %s144, 4
      %s146 = smul.addr %s145, 8
      %s147 = scalar_lea.vmem %s2, %s146
      %s148 = smul.u32 32, %s13
      %v150 = vld [vmem:[%s140] sm:$0xf]
      %v151 = vld [vmem:[%s140 + $0x4] sm:$0xf]
      %v152 = vld [vmem:[%s140 + $0x8] sm:$0xf]
      %v153 = vld [vmem:[%s140 + $0xc] sm:$0xf]
      %v154 = vld [vmem:[%s140 + $0x10] sm:$0xf]
      %v155 = vld [vmem:[%s140 + $0x14] sm:$0xf]
      %v156 = vld [vmem:[%s140 + $0x18] sm:$0xf]
      %v157 = vld [vmem:[%s140 + $0x1c] sm:$0xf]
      %v158 = vld [vmem:[%s140 + $0x20] sm:$0xf]
      %v159 = vld [vmem:[%s140 + $0x24] sm:$0xf]
      %v160 = vld [vmem:[%s140 + $0x28] sm:$0xf]
      %v161 = vld [vmem:[%s140 + $0x2c] sm:$0xf]
      %v162 = vld [vmem:[%s140 + $0x30] sm:$0xf]
      %v163 = vld [vmem:[%s140 + $0x34] sm:$0xf]
      %v164 = vld [vmem:[%s140 + $0x38] sm:$0xf]
      %v165 = vld [vmem:[%s140 + $0x3c] sm:$0xf]
      %v166 = vld [vmem:[%s140 + $0x40] sm:$0xf]
      %v167 = vld [vmem:[%s140 + $0x44] sm:$0xf]
      %v168 = vld [vmem:[%s140 + $0x48] sm:$0xf]
      %v169 = vld [vmem:[%s140 + $0x4c] sm:$0xf]
      %v170 = vld [vmem:[%s140 + $0x50] sm:$0xf]
      %v171 = vld [vmem:[%s140 + $0x54] sm:$0xf]
      %v172 = vld [vmem:[%s140 + $0x58] sm:$0xf]
      %v173 = vld [vmem:[%s140 + $0x5c] sm:$0xf]
      %v174 = vld [vmem:[%s140 + $0x60] sm:$0xf]
      %v175 = vld [vmem:[%s140 + $0x64] sm:$0xf]
      %v176 = vld [vmem:[%s140 + $0x68] sm:$0xf]
      %v177 = vld [vmem:[%s140 + $0x6c] sm:$0xf]
      %v178 = vld [vmem:[%s140 + $0x70] sm:$0xf]
      %v179 = vld [vmem:[%s140 + $0x74] sm:$0xf]
      %v180 = vld [vmem:[%s140 + $0x78] sm:$0xf]
      %v181 = vld [vmem:[%s140 + $0x7c] sm:$0xf]
      %v182 = vld [vmem:[%s1] sm:$0xff]
      %v183 = vld [vmem:[%s1 + $0x8] sm:$0xff]
      %v184 = vld [vmem:[%s1 + $0x10] sm:$0xff]
      %v185 = vld [vmem:[%s1 + $0x18] sm:$0xff]
      %v186 = vld [vmem:[%s1 + $0x20] sm:$0xff]
      %v187 = vld [vmem:[%s1 + $0x28] sm:$0xff]
      %v188 = vld [vmem:[%s1 + $0x30] sm:$0xff]
      %v189 = vld [vmem:[%s1 + $0x38] sm:$0xff]
      %v222 = vunpack.c.l.b16 %v150
      %v223 = vunpack.c.l.b16 %v151
      %v224 = vunpack.c.l.b16 %v152
      %v225 = vunpack.c.l.b16 %v153
      %v226 = vunpack.c.l.b16 %v154
      %v227 = vunpack.c.l.b16 %v155
      %v228 = vunpack.c.l.b16 %v156
      %v229 = vunpack.c.l.b16 %v157
      %v230 = vunpack.c.l.b16 %v158
      %v231 = vunpack.c.l.b16 %v159
      %v232 = vunpack.c.l.b16 %v160
      %v233 = vunpack.c.l.b16 %v161
      %v234 = vunpack.c.l.b16 %v162
      %v235 = vunpack.c.l.b16 %v163
      %v236 = vunpack.c.l.b16 %v164
      %v237 = vunpack.c.l.b16 %v165
      %v238 = vunpack.c.l.b16 %v166
      %v239 = vunpack.c.l.b16 %v167
      %v240 = vunpack.c.l.b16 %v168
      %v241 = vunpack.c.l.b16 %v169
      %v242 = vunpack.c.l.b16 %v170
      %v243 = vunpack.c.l.b16 %v171
      %v244 = vunpack.c.l.b16 %v172
      %v245 = vunpack.c.l.b16 %v173
      %v246 = vunpack.c.l.b16 %v174
      %v247 = vunpack.c.l.b16 %v175
      %v248 = vunpack.c.l.b16 %v176
      %v249 = vunpack.c.l.b16 %v177
      %v250 = vunpack.c.l.b16 %v178
      %v251 = vunpack.c.l.b16 %v179
      %v252 = vunpack.c.l.b16 %v180
      %v253 = vunpack.c.l.b16 %v181
      %v254 = vpack.c.b16 %v223, %v222
      %v255 = vpack.c.b16 %v225, %v224
      %v256 = vpack.c.b16 %v227, %v226
      %v257 = vpack.c.b16 %v229, %v228
      %v258 = vpack.c.b16 %v231, %v230
      %v259 = vpack.c.b16 %v233, %v232
      %v260 = vpack.c.b16 %v235, %v234
      %v261 = vpack.c.b16 %v237, %v236
      %v262 = vpack.c.b16 %v239, %v238
      %v263 = vpack.c.b16 %v241, %v240
      %v264 = vpack.c.b16 %v243, %v242
      %v265 = vpack.c.b16 %v245, %v244
      %v266 = vpack.c.b16 %v247, %v246
      %v267 = vpack.c.b16 %v249, %v248
      %v268 = vpack.c.b16 %v251, %v250
      %v269 = vpack.c.b16 %v253, %v252
      %v278 = vunpack.c.l.b16 %v182
      %v279 = vunpack.c.h.b16 %v182
      %v280 = vunpack.c.l.b16 %v183
      %v281 = vunpack.c.h.b16 %v183
      %v282 = vunpack.c.l.b16 %v184
      %v283 = vunpack.c.h.b16 %v184
      %v284 = vunpack.c.l.b16 %v185
      %v285 = vunpack.c.h.b16 %v185
      %v286 = vunpack.c.l.b16 %v186
      %v287 = vunpack.c.h.b16 %v186
      %v288 = vunpack.c.l.b16 %v187
      %v289 = vunpack.c.h.b16 %v187
      %v290 = vunpack.c.l.b16 %v188
      %v291 = vunpack.c.h.b16 %v188
      %v292 = vunpack.c.l.b16 %v189
      %v293 = vunpack.c.h.b16 %v189
      %v294 = vpack.c.b16 %v282, %v278
      %v295 = vpack.c.b16 %v283, %v279
      %v296 = vpack.c.b16 %v284, %v280
      %v297 = vpack.c.b16 %v285, %v281
      %v298 = vpack.c.b16 %v290, %v286
      %v299 = vpack.c.b16 %v291, %v287
      %v300 = vpack.c.b16 %v292, %v288
      %v301 = vpack.c.b16 %v293, %v289
      %vm310 = vcmask 261120
      %v312 = vsel %vm310, %v254, 0
      %v315 = vsel %vm310, %v255, 0
      %v318 = vsel %vm310, %v256, 0
      %v321 = vsel %vm310, %v257, 0
      %v324 = vsel %vm310, %v258, 0
      %v327 = vsel %vm310, %v259, 0
      %v330 = vsel %vm310, %v260, 0
      %v333 = vsel %vm310, %v261, 0
      %v336 = vsel %vm310, %v262, 0
      %v339 = vsel %vm310, %v263, 0
      %v342 = vsel %vm310, %v264, 0
      %v345 = vsel %vm310, %v265, 0
      %v348 = vsel %vm310, %v266, 0
      %v351 = vsel %vm310, %v267, 0
      %v354 = vsel %vm310, %v268, 0
      %v357 = vsel %vm310, %v269, 0
      %359 = vmatprep.subr.bf16.mxu0 0
      %360 = vmatpush1.bf16.msra.mxu0 0
      %361 = vmatprep.subr.bf16.mxu0 0
      %362 = vmatpush1.bf16.msra.mxu0 0
      %363 = vmatprep.subr.bf16.mxu0 0
      %364 = vmatpush1.bf16.msra.mxu0 0
      %365 = vmatprep.subr.bf16.mxu0 0
      %366 = vmatpush1.bf16.msra.mxu0 0
      %367 = vmatprep.subr.bf16.mxu0 0
      %368 = vmatpush1.bf16.msra.mxu0 0
      %369 = vmatprep.subr.bf16.mxu0 0
      %370 = vmatpush1.bf16.msra.mxu0 0
      %371 = vmatprep.subr.bf16.mxu0 %v299
      %372 = vmatpush1.bf16.msra.mxu0 %v298
      %373 = vmatprep.subr.bf16.mxu0 %v295
      %374 = vmatpush1.bf16.msra.mxu0 %v294
      %375 = vmatprep.subr.bf16.mxu0 0
      %376 = vmatpush2.bf16.msra.mxu0 0
      %377 = vmatprep.subr.bf16.mxu0 0
      %378 = vmatpush2.bf16.msra.mxu0 0
      %379 = vmatprep.subr.bf16.mxu0 0
      %380 = vmatpush2.bf16.msra.mxu0 0
      %381 = vmatprep.subr.bf16.mxu0 0
      %382 = vmatpush2.bf16.msra.mxu0 0
      %383 = vmatprep.subr.bf16.mxu0 0
      %384 = vmatpush2.bf16.msra.mxu0 0
      %385 = vmatprep.subr.bf16.mxu0 0
      %386 = vmatpush2.bf16.msra.mxu0 0
      %387 = vmatprep.subr.bf16.mxu0 0
      %388 = vmatpush2.bf16.msra.mxu0 0
      %389 = vmatprep.subr.bf16.mxu0 0
      %390 = vmatpush2.bf16.msra.mxu0 0
      %391 = vmatprep.mubr.bf16.mxu0 0
      %392 = vmatmul.mubr.bf16.gmra.mxu0 %v312
      %v393 = vpop.f32.mrf.mxu0
      %v394 = vadd.f32 0.0, %v393
      %v395 = vpop.f32.mrf.mxu0
      %v396 = vadd.f32 0.0, %v395
      %v397 = vpop.f32.mrf.mxu0
      %v398 = vadd.f32 0.0, %v397
      %v399 = vpop.f32.mrf.mxu0
      %v400 = vadd.f32 0.0, %v399
      %401 = vmatprep.mubr.bf16.mxu0 0
      %402 = vmatmul.mubr.bf16.gmra.mxu0 %v315
      %v403 = vpop.f32.mrf.mxu0
      %v404 = vadd.f32 0.0, %v403
      %v405 = vpop.f32.mrf.mxu0
      %v406 = vadd.f32 0.0, %v405
      %v407 = vpop.f32.mrf.mxu0
      %v408 = vadd.f32 0.0, %v407
      %v409 = vpop.f32.mrf.mxu0
      %v410 = vadd.f32 0.0, %v409
      %411 = vmatprep.mubr.bf16.mxu0 0
      %412 = vmatmul.mubr.bf16.gmra.mxu0 %v318
      %v413 = vpop.f32.mrf.mxu0
      %v414 = vadd.f32 0.0, %v413
      %v415 = vpop.f32.mrf.mxu0
      %v416 = vadd.f32 0.0, %v415
      %v417 = vpop.f32.mrf.mxu0
      %v418 = vadd.f32 0.0, %v417
      %v419 = vpop.f32.mrf.mxu0
      %v420 = vadd.f32 0.0, %v419
      %421 = vmatprep.mubr.bf16.mxu0 0
      %422 = vmatmul.mubr.bf16.gmra.mxu0 %v321
      %v423 = vpop.f32.mrf.mxu0
      %v424 = vadd.f32 0.0, %v423
      %v425 = vpop.f32.mrf.mxu0
      %v426 = vadd.f32 0.0, %v425
      %v427 = vpop.f32.mrf.mxu0
      %v428 = vadd.f32 0.0, %v427
      %v429 = vpop.f32.mrf.mxu0
      %v430 = vadd.f32 0.0, %v429
      %431 = vmatprep.mubr.bf16.mxu0 0
      %432 = vmatmul.mubr.bf16.gmra.mxu0 %v324
      %v433 = vpop.f32.mrf.mxu0
      %v434 = vadd.f32 0.0, %v433
      %v435 = vpop.f32.mrf.mxu0
      %v436 = vadd.f32 0.0, %v435
      %v437 = vpop.f32.mrf.mxu0
      %v438 = vadd.f32 0.0, %v437
      %v439 = vpop.f32.mrf.mxu0
      %v440 = vadd.f32 0.0, %v439
      %441 = vmatprep.mubr.bf16.mxu0 0
      %442 = vmatmul.mubr.bf16.gmra.mxu0 %v327
      %v443 = vpop.f32.mrf.mxu0
      %v444 = vadd.f32 0.0, %v443
      %v445 = vpop.f32.mrf.mxu0
      %v446 = vadd.f32 0.0, %v445
      %v447 = vpop.f32.mrf.mxu0
      %v448 = vadd.f32 0.0, %v447
      %v449 = vpop.f32.mrf.mxu0
      %v450 = vadd.f32 0.0, %v449
      %451 = vmatprep.mubr.bf16.mxu0 0
      %452 = vmatmul.mubr.bf16.gmra.mxu0 %v330
      %v453 = vpop.f32.mrf.mxu0
      %v454 = vadd.f32 0.0, %v453
      %v455 = vpop.f32.mrf.mxu0
      %v456 = vadd.f32 0.0, %v455
      %v457 = vpop.f32.mrf.mxu0
      %v458 = vadd.f32 0.0, %v457
      %v459 = vpop.f32.mrf.mxu0
      %v460 = vadd.f32 0.0, %v459
      %461 = vmatprep.mubr.bf16.mxu0 0
      %462 = vmatmul.mubr.bf16.gmra.mxu0 %v333
      %v463 = vpop.f32.mrf.mxu0
      %v464 = vadd.f32 0.0, %v463
      %v465 = vpop.f32.mrf.mxu0
      %v466 = vadd.f32 0.0, %v465
      %v467 = vpop.f32.mrf.mxu0
      %v468 = vadd.f32 0.0, %v467
      %v469 = vpop.f32.mrf.mxu0
      %v470 = vadd.f32 0.0, %v469
      %471 = vmatprep.mubr.bf16.mxu0 0
      %472 = vmatmul.mubr.bf16.gmra.mxu0 %v336
      %v473 = vpop.f32.mrf.mxu0
      %v474 = vadd.f32 0.0, %v473
      %v475 = vpop.f32.mrf.mxu0
      %v476 = vadd.f32 0.0, %v475
      %v477 = vpop.f32.mrf.mxu0
      %v478 = vadd.f32 0.0, %v477
      %v479 = vpop.f32.mrf.mxu0
      %v480 = vadd.f32 0.0, %v479
      %481 = vmatprep.mubr.bf16.mxu0 0
      %482 = vmatmul.mubr.bf16.gmra.mxu0 %v339
      %v483 = vpop.f32.mrf.mxu0
      %v484 = vadd.f32 0.0, %v483
      %v485 = vpop.f32.mrf.mxu0
      %v486 = vadd.f32 0.0, %v485
      %v487 = vpop.f32.mrf.mxu0
      %v488 = vadd.f32 0.0, %v487
      %v489 = vpop.f32.mrf.mxu0
      %v490 = vadd.f32 0.0, %v489
      %491 = vmatprep.mubr.bf16.mxu0 0
      %492 = vmatmul.mubr.bf16.gmra.mxu0 %v342
      %v493 = vpop.f32.mrf.mxu0
      %v494 = vadd.f32 0.0, %v493
      %v495 = vpop.f32.mrf.mxu0
      %v496 = vadd.f32 0.0, %v495
      %v497 = vpop.f32.mrf.mxu0
      %v498 = vadd.f32 0.0, %v497
      %v499 = vpop.f32.mrf.mxu0
      %v500 = vadd.f32 0.0, %v499
      %501 = vmatprep.mubr.bf16.mxu0 0
      %502 = vmatmul.mubr.bf16.gmra.mxu0 %v345
      %v503 = vpop.f32.mrf.mxu0
      %v504 = vadd.f32 0.0, %v503
      %v505 = vpop.f32.mrf.mxu0
      %v506 = vadd.f32 0.0, %v505
      %v507 = vpop.f32.mrf.mxu0
      %v508 = vadd.f32 0.0, %v507
      %v509 = vpop.f32.mrf.mxu0
      %v510 = vadd.f32 0.0, %v509
      %511 = vmatprep.mubr.bf16.mxu0 0
      %512 = vmatmul.mubr.bf16.gmra.mxu0 %v348
      %v513 = vpop.f32.mrf.mxu0
      %v514 = vadd.f32 0.0, %v513
      %v515 = vpop.f32.mrf.mxu0
      %v516 = vadd.f32 0.0, %v515
      %v517 = vpop.f32.mrf.mxu0
      %v518 = vadd.f32 0.0, %v517
      %v519 = vpop.f32.mrf.mxu0
      %v520 = vadd.f32 0.0, %v519
      %521 = vmatprep.mubr.bf16.mxu0 0
      %522 = vmatmul.mubr.bf16.gmra.mxu0 %v351
      %v523 = vpop.f32.mrf.mxu0
      %v524 = vadd.f32 0.0, %v523
      %v525 = vpop.f32.mrf.mxu0
      %v526 = vadd.f32 0.0, %v525
      %v527 = vpop.f32.mrf.mxu0
      %v528 = vadd.f32 0.0, %v527
      %v529 = vpop.f32.mrf.mxu0
      %v530 = vadd.f32 0.0, %v529
      %531 = vmatprep.mubr.bf16.mxu0 0
      %532 = vmatmul.mubr.bf16.gmra.mxu0 %v354
      %v533 = vpop.f32.mrf.mxu0
      %v534 = vadd.f32 0.0, %v533
      %v535 = vpop.f32.mrf.mxu0
      %v536 = vadd.f32 0.0, %v535
      %v537 = vpop.f32.mrf.mxu0
      %v538 = vadd.f32 0.0, %v537
      %v539 = vpop.f32.mrf.mxu0
      %v540 = vadd.f32 0.0, %v539
      %541 = vmatprep.mubr.bf16.mxu0 0
      %542 = vmatmul.mubr.bf16.gmra.mxu0 %v357
      %v543 = vpop.f32.mrf.mxu0
      %v544 = vadd.f32 0.0, %v543
      %v545 = vpop.f32.mrf.mxu0
      %v546 = vadd.f32 0.0, %v545
      %v547 = vpop.f32.mrf.mxu0
      %v548 = vadd.f32 0.0, %v547
      %v549 = vpop.f32.mrf.mxu0
      %v550 = vadd.f32 0.0, %v549
      %551 = vdwg.mxu0
      %552 = vmatprep.subr.bf16.mxu0 0
      %553 = vmatpush1.bf16.msra.mxu0 0
      %554 = vmatprep.subr.bf16.mxu0 0
      %555 = vmatpush1.bf16.msra.mxu0 0
      %556 = vmatprep.subr.bf16.mxu0 0
      %557 = vmatpush1.bf16.msra.mxu0 0
      %558 = vmatprep.subr.bf16.mxu0 0
      %559 = vmatpush1.bf16.msra.mxu0 0
      %560 = vmatprep.subr.bf16.mxu0 0
      %561 = vmatpush1.bf16.msra.mxu0 0
      %562 = vmatprep.subr.bf16.mxu0 0
      %563 = vmatpush1.bf16.msra.mxu0 0
      %564 = vmatprep.subr.bf16.mxu0 %v301
      %565 = vmatpush1.bf16.msra.mxu0 %v300
      %566 = vmatprep.subr.bf16.mxu0 %v297
      %567 = vmatpush1.bf16.msra.mxu0 %v296
      %568 = vmatprep.subr.bf16.mxu0 0
      %569 = vmatpush2.bf16.msra.mxu0 0
      %570 = vmatprep.subr.bf16.mxu0 0
      %571 = vmatpush2.bf16.msra.mxu0 0
      %572 = vmatprep.subr.bf16.mxu0 0
      %573 = vmatpush2.bf16.msra.mxu0 0
      %574 = vmatprep.subr.bf16.mxu0 0
      %575 = vmatpush2.bf16.msra.mxu0 0
      %576 = vmatprep.subr.bf16.mxu0 0
      %577 = vmatpush2.bf16.msra.mxu0 0
      %578 = vmatprep.subr.bf16.mxu0 0
      %579 = vmatpush2.bf16.msra.mxu0 0
      %580 = vmatprep.subr.bf16.mxu0 0
      %581 = vmatpush2.bf16.msra.mxu0 0
      %582 = vmatprep.subr.bf16.mxu0 0
      %583 = vmatpush2.bf16.msra.mxu0 0
      %584 = vmatprep.mubr.bf16.mxu0 0
      %585 = vmatmul.mubr.bf16.gmra.mxu0 %v312
      %v586 = vpop.f32.mrf.mxu0
      %v587 = vadd.f32 0.0, %v586
      %v588 = vpop.f32.mrf.mxu0
      %v589 = vadd.f32 0.0, %v588
      %v590 = vpop.f32.mrf.mxu0
      %v591 = vadd.f32 0.0, %v590
      %v592 = vpop.f32.mrf.mxu0
      %v593 = vadd.f32 0.0, %v592
      %594 = vmatprep.mubr.bf16.mxu0 0
      %595 = vmatmul.mubr.bf16.gmra.mxu0 %v315
      %v596 = vpop.f32.mrf.mxu0
      %v597 = vadd.f32 0.0, %v596
      %v598 = vpop.f32.mrf.mxu0
      %v599 = vadd.f32 0.0, %v598
      %v600 = vpop.f32.mrf.mxu0
      %v601 = vadd.f32 0.0, %v600
      %v602 = vpop.f32.mrf.mxu0
      %v603 = vadd.f32 0.0, %v602
      %604 = vmatprep.mubr.bf16.mxu0 0
      %605 = vmatmul.mubr.bf16.gmra.mxu0 %v318
      %v606 = vpop.f32.mrf.mxu0
      %v607 = vadd.f32 0.0, %v606
      %v608 = vpop.f32.mrf.mxu0
      %v609 = vadd.f32 0.0, %v608
      %v610 = vpop.f32.mrf.mxu0
      %v611 = vadd.f32 0.0, %v610
      %v612 = vpop.f32.mrf.mxu0
      %v613 = vadd.f32 0.0, %v612
      %614 = vmatprep.mubr.bf16.mxu0 0
      %615 = vmatmul.mubr.bf16.gmra.mxu0 %v321
      %v616 = vpop.f32.mrf.mxu0
      %v617 = vadd.f32 0.0, %v616
      %v618 = vpop.f32.mrf.mxu0
      %v619 = vadd.f32 0.0, %v618
      %v620 = vpop.f32.mrf.mxu0
      %v621 = vadd.f32 0.0, %v620
      %v622 = vpop.f32.mrf.mxu0
      %v623 = vadd.f32 0.0, %v622
      %624 = vmatprep.mubr.bf16.mxu0 0
      %625 = vmatmul.mubr.bf16.gmra.mxu0 %v324
      %v626 = vpop.f32.mrf.mxu0
      %v627 = vadd.f32 0.0, %v626
      %v628 = vpop.f32.mrf.mxu0
      %v629 = vadd.f32 0.0, %v628
      %v630 = vpop.f32.mrf.mxu0
      %v631 = vadd.f32 0.0, %v630
      %v632 = vpop.f32.mrf.mxu0
      %v633 = vadd.f32 0.0, %v632
      %634 = vmatprep.mubr.bf16.mxu0 0
      %635 = vmatmul.mubr.bf16.gmra.mxu0 %v327
      %v636 = vpop.f32.mrf.mxu0
      %v637 = vadd.f32 0.0, %v636
      %v638 = vpop.f32.mrf.mxu0
      %v639 = vadd.f32 0.0, %v638
      %v640 = vpop.f32.mrf.mxu0
      %v641 = vadd.f32 0.0, %v640
      %v642 = vpop.f32.mrf.mxu0
      %v643 = vadd.f32 0.0, %v642
      %644 = vmatprep.mubr.bf16.mxu0 0
      %645 = vmatmul.mubr.bf16.gmra.mxu0 %v330
      %v646 = vpop.f32.mrf.mxu0
      %v647 = vadd.f32 0.0, %v646
      %v648 = vpop.f32.mrf.mxu0
      %v649 = vadd.f32 0.0, %v648
      %v650 = vpop.f32.mrf.mxu0
      %v651 = vadd.f32 0.0, %v650
      %v652 = vpop.f32.mrf.mxu0
      %v653 = vadd.f32 0.0, %v652
      %654 = vmatprep.mubr.bf16.mxu0 0
      %655 = vmatmul.mubr.bf16.gmra.mxu0 %v333
      %v656 = vpop.f32.mrf.mxu0
      %v657 = vadd.f32 0.0, %v656
      %v658 = vpop.f32.mrf.mxu0
      %v659 = vadd.f32 0.0, %v658
      %v660 = vpop.f32.mrf.mxu0
      %v661 = vadd.f32 0.0, %v660
      %v662 = vpop.f32.mrf.mxu0
      %v663 = vadd.f32 0.0, %v662
      %664 = vmatprep.mubr.bf16.mxu0 0
      %665 = vmatmul.mubr.bf16.gmra.mxu0 %v336
      %v666 = vpop.f32.mrf.mxu0
      %v667 = vadd.f32 0.0, %v666
      %v668 = vpop.f32.mrf.mxu0
      %v669 = vadd.f32 0.0, %v668
      %v670 = vpop.f32.mrf.mxu0
      %v671 = vadd.f32 0.0, %v670
      %v672 = vpop.f32.mrf.mxu0
      %v673 = vadd.f32 0.0, %v672
      %674 = vmatprep.mubr.bf16.mxu0 0
      %675 = vmatmul.mubr.bf16.gmra.mxu0 %v339
      %v676 = vpop.f32.mrf.mxu0
      %v677 = vadd.f32 0.0, %v676
      %v678 = vpop.f32.mrf.mxu0
      %v679 = vadd.f32 0.0, %v678
      %v680 = vpop.f32.mrf.mxu0
      %v681 = vadd.f32 0.0, %v680
      %v682 = vpop.f32.mrf.mxu0
      %v683 = vadd.f32 0.0, %v682
      %684 = vmatprep.mubr.bf16.mxu0 0
      %685 = vmatmul.mubr.bf16.gmra.mxu0 %v342
      %v686 = vpop.f32.mrf.mxu0
      %v687 = vadd.f32 0.0, %v686
      %v688 = vpop.f32.mrf.mxu0
      %v689 = vadd.f32 0.0, %v688
      %v690 = vpop.f32.mrf.mxu0
      %v691 = vadd.f32 0.0, %v690
      %v692 = vpop.f32.mrf.mxu0
      %v693 = vadd.f32 0.0, %v692
      %694 = vmatprep.mubr.bf16.mxu0 0
      %695 = vmatmul.mubr.bf16.gmra.mxu0 %v345
      %v696 = vpop.f32.mrf.mxu0
      %v697 = vadd.f32 0.0, %v696
      %v698 = vpop.f32.mrf.mxu0
      %v699 = vadd.f32 0.0, %v698
      %v700 = vpop.f32.mrf.mxu0
      %v701 = vadd.f32 0.0, %v700
      %v702 = vpop.f32.mrf.mxu0
      %v703 = vadd.f32 0.0, %v702
      %704 = vmatprep.mubr.bf16.mxu0 0
      %705 = vmatmul.mubr.bf16.gmra.mxu0 %v348
      %v706 = vpop.f32.mrf.mxu0
      %v707 = vadd.f32 0.0, %v706
      %v708 = vpop.f32.mrf.mxu0
      %v709 = vadd.f32 0.0, %v708
      %v710 = vpop.f32.mrf.mxu0
      %v711 = vadd.f32 0.0, %v710
      %v712 = vpop.f32.mrf.mxu0
      %v713 = vadd.f32 0.0, %v712
      %714 = vmatprep.mubr.bf16.mxu0 0
      %715 = vmatmul.mubr.bf16.gmra.mxu0 %v351
      %v716 = vpop.f32.mrf.mxu0
      %v717 = vadd.f32 0.0, %v716
      %v718 = vpop.f32.mrf.mxu0
      %v719 = vadd.f32 0.0, %v718
      %v720 = vpop.f32.mrf.mxu0
      %v721 = vadd.f32 0.0, %v720
      %v722 = vpop.f32.mrf.mxu0
      %v723 = vadd.f32 0.0, %v722
      %724 = vmatprep.mubr.bf16.mxu0 0
      %725 = vmatmul.mubr.bf16.gmra.mxu0 %v354
      %v726 = vpop.f32.mrf.mxu0
      %v727 = vadd.f32 0.0, %v726
      %v728 = vpop.f32.mrf.mxu0
      %v729 = vadd.f32 0.0, %v728
      %v730 = vpop.f32.mrf.mxu0
      %v731 = vadd.f32 0.0, %v730
      %v732 = vpop.f32.mrf.mxu0
      %v733 = vadd.f32 0.0, %v732
      %734 = vmatprep.mubr.bf16.mxu0 0
      %735 = vmatmul.mubr.bf16.gmra.mxu0 %v357
      %v736 = vpop.f32.mrf.mxu0
      %v737 = vadd.f32 0.0, %v736
      %v738 = vpop.f32.mrf.mxu0
      %v739 = vadd.f32 0.0, %v738
      %v740 = vpop.f32.mrf.mxu0
      %v741 = vadd.f32 0.0, %v740
      %v742 = vpop.f32.mrf.mxu0
      %v743 = vadd.f32 0.0, %v742
      %744 = vdwg.mxu0
      %745 = vst [vmem:[%s147] sm:$0xff] %v394
      %746 = vst [vmem:[%s147 + $0x8] sm:$0xff] %v396
      %747 = vst [vmem:[%s147 + $0x10] sm:$0xff] %v587
      %748 = vst [vmem:[%s147 + $0x18] sm:$0xff] %v589
      %749 = vst [vmem:[%s147 + $0x20] sm:$0xff] %v398
      %750 = vst [vmem:[%s147 + $0x28] sm:$0xff] %v400
      %751 = vst [vmem:[%s147 + $0x30] sm:$0xff] %v591
      %752 = vst [vmem:[%s147 + $0x38] sm:$0xff] %v593
      %753 = vst [vmem:[%s147 + $0x40] sm:$0xff] %v404
      %754 = vst [vmem:[%s147 + $0x48] sm:$0xff] %v406
      %755 = vst [vmem:[%s147 + $0x50] sm:$0xff] %v597
      %756 = vst [vmem:[%s147 + $0x58] sm:$0xff] %v599
      %757 = vst [vmem:[%s147 + $0x60] sm:$0xff] %v408
      %758 = vst [vmem:[%s147 + $0x68] sm:$0xff] %v410
      %759 = vst [vmem:[%s147 + $0x70] sm:$0xff] %v601
      %760 = vst [vmem:[%s147 + $0x78] sm:$0xff] %v603
      %761 = vst [vmem:[%s147 + $0x80] sm:$0xff] %v414
      %762 = vst [vmem:[%s147 + $0x88] sm:$0xff] %v416
      %763 = vst [vmem:[%s147 + $0x90] sm:$0xff] %v607
      %764 = vst [vmem:[%s147 + $0x98] sm:$0xff] %v609
      %765 = vst [vmem:[%s147 + $0xa0] sm:$0xff] %v418
      %766 = vst [vmem:[%s147 + $0xa8] sm:$0xff] %v420
      %767 = vst [vmem:[%s147 + $0xb0] sm:$0xff] %v611
      %768 = vst [vmem:[%s147 + $0xb8] sm:$0xff] %v613
      %769 = vst [vmem:[%s147 + $0xc0] sm:$0xff] %v424
      %770 = vst [vmem:[%s147 + $0xc8] sm:$0xff] %v426
      %771 = vst [vmem:[%s147 + $0xd0] sm:$0xff] %v617
      %772 = vst [vmem:[%s147 + $0xd8] sm:$0xff] %v619
      %773 = vst [vmem:[%s147 + $0xe0] sm:$0xff] %v428
      %774 = vst [vmem:[%s147 + $0xe8] sm:$0xff] %v430
      %775 = vst [vmem:[%s147 + $0xf0] sm:$0xff] %v621
      %776 = vst [vmem:[%s147 + $0xf8] sm:$0xff] %v623
      %777 = vst [vmem:[%s147 + $0x100] sm:$0xff] %v434
      %778 = vst [vmem:[%s147 + $0x108] sm:$0xff] %v436
      %779 = vst [vmem:[%s147 + $0x110] sm:$0xff] %v627
      %780 = vst [vmem:[%s147 + $0x118] sm:$0xff] %v629
      %781 = vst [vmem:[%s147 + $0x120] sm:$0xff] %v438
      %782 = vst [vmem:[%s147 + $0x128] sm:$0xff] %v440
      %783 = vst [vmem:[%s147 + $0x130] sm:$0xff] %v631
      %784 = vst [vmem:[%s147 + $0x138] sm:$0xff] %v633
      %785 = vst [vmem:[%s147 + $0x140] sm:$0xff] %v444
      %786 = vst [vmem:[%s147 + $0x148] sm:$0xff] %v446
      %787 = vst [vmem:[%s147 + $0x150] sm:$0xff] %v637
      %788 = vst [vmem:[%s147 + $0x158] sm:$0xff] %v639
      %789 = vst [vmem:[%s147 + $0x160] sm:$0xff] %v448
      %790 = vst [vmem:[%s147 + $0x168] sm:$0xff] %v450
      %791 = vst [vmem:[%s147 + $0x170] sm:$0xff] %v641
      %792 = vst [vmem:[%s147 + $0x178] sm:$0xff] %v643
      %793 = vst [vmem:[%s147 + $0x180] sm:$0xff] %v454
      %794 = vst [vmem:[%s147 + $0x188] sm:$0xff] %v456
      %795 = vst [vmem:[%s147 + $0x190] sm:$0xff] %v647
      %796 = vst [vmem:[%s147 + $0x198] sm:$0xff] %v649
      %797 = vst [vmem:[%s147 + $0x1a0] sm:$0xff] %v458
      %798 = vst [vmem:[%s147 + $0x1a8] sm:$0xff] %v460
      %799 = vst [vmem:[%s147 + $0x1b0] sm:$0xff] %v651
      %800 = vst [vmem:[%s147 + $0x1b8] sm:$0xff] %v653
      %801 = vst [vmem:[%s147 + $0x1c0] sm:$0xff] %v464
      %802 = vst [vmem:[%s147 + $0x1c8] sm:$0xff] %v466
      %803 = vst [vmem:[%s147 + $0x1d0] sm:$0xff] %v657
      %804 = vst [vmem:[%s147 + $0x1d8] sm:$0xff] %v659
      %805 = vst [vmem:[%s147 + $0x1e0] sm:$0xff] %v468
      %806 = vst [vmem:[%s147 + $0x1e8] sm:$0xff] %v470
      %807 = vst [vmem:[%s147 + $0x1f0] sm:$0xff] %v661
      %808 = vst [vmem:[%s147 + $0x1f8] sm:$0xff] %v663
      %809 = vst [vmem:[%s147 + $0x200] sm:$0xff] %v474
      %810 = vst [vmem:[%s147 + $0x208] sm:$0xff] %v476
      %811 = vst [vmem:[%s147 + $0x210] sm:$0xff] %v667
      %812 = vst [vmem:[%s147 + $0x218] sm:$0xff] %v669
      %813 = vst [vmem:[%s147 + $0x220] sm:$0xff] %v478
      %814 = vst [vmem:[%s147 + $0x228] sm:$0xff] %v480
      %815 = vst [vmem:[%s147 + $0x230] sm:$0xff] %v671
      %816 = vst [vmem:[%s147 + $0x238] sm:$0xff] %v673
      %817 = vst [vmem:[%s147 + $0x240] sm:$0xff] %v484
      %818 = vst [vmem:[%s147 + $0x248] sm:$0xff] %v486
      %819 = vst [vmem:[%s147 + $0x250] sm:$0xff] %v677
      %820 = vst [vmem:[%s147 + $0x258] sm:$0xff] %v679
      %821 = vst [vmem:[%s147 + $0x260] sm:$0xff] %v488
      %822 = vst [vmem:[%s147 + $0x268] sm:$0xff] %v490
      %823 = vst [vmem:[%s147 + $0x270] sm:$0xff] %v681
      %824 = vst [vmem:[%s147 + $0x278] sm:$0xff] %v683
      %825 = vst [vmem:[%s147 + $0x280] sm:$0xff] %v494
      %826 = vst [vmem:[%s147 + $0x288] sm:$0xff] %v496
      %827 = vst [vmem:[%s147 + $0x290] sm:$0xff] %v687
      %828 = vst [vmem:[%s147 + $0x298] sm:$0xff] %v689
      %829 = vst [vmem:[%s147 + $0x2a0] sm:$0xff] %v498
      %830 = vst [vmem:[%s147 + $0x2a8] sm:$0xff] %v500
      %831 = vst [vmem:[%s147 + $0x2b0] sm:$0xff] %v691
      %832 = vst [vmem:[%s147 + $0x2b8] sm:$0xff] %v693
      %833 = vst [vmem:[%s147 + $0x2c0] sm:$0xff] %v504
      %834 = vst [vmem:[%s147 + $0x2c8] sm:$0xff] %v506
      %835 = vst [vmem:[%s147 + $0x2d0] sm:$0xff] %v697
      %836 = vst [vmem:[%s147 + $0x2d8] sm:$0xff] %v699
      %837 = vst [vmem:[%s147 + $0x2e0] sm:$0xff] %v508
      %838 = vst [vmem:[%s147 + $0x2e8] sm:$0xff] %v510
      %839 = vst [vmem:[%s147 + $0x2f0] sm:$0xff] %v701
      %840 = vst [vmem:[%s147 + $0x2f8] sm:$0xff] %v703
      %841 = vst [vmem:[%s147 + $0x300] sm:$0xff] %v514
      %842 = vst [vmem:[%s147 + $0x308] sm:$0xff] %v516
      %843 = vst [vmem:[%s147 + $0x310] sm:$0xff] %v707
      %844 = vst [vmem:[%s147 + $0x318] sm:$0xff] %v709
      %845 = vst [vmem:[%s147 + $0x320] sm:$0xff] %v518
      %846 = vst [vmem:[%s147 + $0x328] sm:$0xff] %v520
      %847 = vst [vmem:[%s147 + $0x330] sm:$0xff] %v711
      %848 = vst [vmem:[%s147 + $0x338] sm:$0xff] %v713
      %849 = vst [vmem:[%s147 + $0x340] sm:$0xff] %v524
      %850 = vst [vmem:[%s147 + $0x348] sm:$0xff] %v526
      %851 = vst [vmem:[%s147 + $0x350] sm:$0xff] %v717
      %852 = vst [vmem:[%s147 + $0x358] sm:$0xff] %v719
      %853 = vst [vmem:[%s147 + $0x360] sm:$0xff] %v528
      %854 = vst [vmem:[%s147 + $0x368] sm:$0xff] %v530
      %855 = vst [vmem:[%s147 + $0x370] sm:$0xff] %v721
      %856 = vst [vmem:[%s147 + $0x378] sm:$0xff] %v723
      %857 = vst [vmem:[%s147 + $0x380] sm:$0xff] %v534
      %858 = vst [vmem:[%s147 + $0x388] sm:$0xff] %v536
      %859 = vst [vmem:[%s147 + $0x390] sm:$0xff] %v727
      %860 = vst [vmem:[%s147 + $0x398] sm:$0xff] %v729
      %861 = vst [vmem:[%s147 + $0x3a0] sm:$0xff] %v538
      %862 = vst [vmem:[%s147 + $0x3a8] sm:$0xff] %v540
      %863 = vst [vmem:[%s147 + $0x3b0] sm:$0xff] %v731
      %864 = vst [vmem:[%s147 + $0x3b8] sm:$0xff] %v733
      %865 = vst [vmem:[%s147 + $0x3c0] sm:$0xff] %v544
      %866 = vst [vmem:[%s147 + $0x3c8] sm:$0xff] %v546
      %867 = vst [vmem:[%s147 + $0x3d0] sm:$0xff] %v737
      %868 = vst [vmem:[%s147 + $0x3d8] sm:$0xff] %v739
      %869 = vst [vmem:[%s147 + $0x3e0] sm:$0xff] %v548
      %870 = vst [vmem:[%s147 + $0x3e8] sm:$0xff] %v550
      %871 = vst [vmem:[%s147 + $0x3f0] sm:$0xff] %v741
      %872 = vst [vmem:[%s147 + $0x3f8] sm:$0xff] %v743
      %s873 = smul.u32 32, %s13
      %p874 = scmp.lt.s32.totalorder %s873, 63
      %s875 = scalar_select %p874, %s873, 63
      %s876 = smul.addr %s875, 4
      %s877 = smul.addr %s876, 8
      %s878 = scalar_lea.vmem %s2, %s877
      // Predicated region
      $region29: #{conv_decoder_forward.10} parent=27 // pred_check
        %p879 = pneg %p78
      $region30: #{conv_decoder_forward.10} parent=27 // pred_check_branch
        %881 = sbr.rel (%p879) target = $region32
      $region31: #{conv_decoder_forward.10} parent=27 // pred_region
        %s882 = smul.u32 32, %s13
      $region32: #{conv_decoder_forward.10} parent=27 // pred_fallthru
        _
    $region28: #{conv_decoder_forward.10} parent=5 // pred_fallthru
      _
    %p883 = scmp.le.s32.totalorder 2, %s8
    // Predicated region
    $region33: #{conv_decoder_forward.10} parent=5 // pred_check
      %p884 = pneg %p883
    $region34: #{conv_decoder_forward.10} parent=5 // pred_check_branch
      %886 = sbr.rel (%p884) target = $region36
    $region35: #{conv_decoder_forward.10} parent=5 // pred_region
      %s887 = ssub.s32 %s8, 2
      // Predicated region
      $region37: #{conv_decoder_forward.10} parent=35 // pred_check
        %p888 = pneg %p84
      $region38: #{conv_decoder_forward.10} parent=35 // pred_check_branch
        %890 = sbr.rel (%p888) target = $region40
      $region39: #{conv_decoder_forward.10} parent=35 // pred_region
        %s891 = smul.u32 32, %s14
        %p892 = scmp.lt.s32.totalorder %s891, 63
        %s893 = scalar_select %p892, %s891, 63
        %s894 = smul.addr %s893, 4
        %s895 = smul.addr %s894, 8
        %s896 = scalar_lea.vmem %s2, %s895
      $region40: #{conv_decoder_forward.10} parent=35 // pred_fallthru
        _
    $region36: #{conv_decoder_forward.10} parent=5 // pred_fallthru
      _
  $region6: #{conv_decoder_forward.10} parent=0 // loop_footer
    %s12 = sadd.s32 1, %s8
  $region7: #{conv_decoder_forward.10} parent=0 // loop_footer_branch
    %7 = sbr.rel target = $region3
  $region8: #{conv_decoder_forward.10} parent=0 // loop_exit
    _

// kernel: conv_decoder_forward.11
$region0: #{conv_decoder_forward.11}
  #allocation0 [shape = 'u32[]', space=smem, size = 0x4, offset = 0x4, fixed_abs, tag = 'smem constant byte address 0x4 - core index']
  #allocation1 [shape = 'u32[144,128]{1,0:T(1,128)}', space=vmem, size = 0x12000, scoped, tag = 'internal scratch']
  %s0 = inlined_call_operand.vmem [shape: bf16[2048,32], index: 0, kind: input, shape index: {}]
  %s1 = inlined_call_operand.vmem [shape: bf16[32,48], index: 1, kind: input, shape index: {}]
  %s2 = inlined_call_operand.vmem [shape: f32[2048,48], index: 2, kind: output, shape index: {}]
  %s3 = sld [smem:[#allocation0]]
  $region41: #{conv_decoder_forward.11} parent=0
    _
  %s5 = ssub.s32 1, %s3
  %s6 = scalar_select 0, %s5, %s3
  loop: start=0, step=1, limit=4
  $region2: #{conv_decoder_forward.11} parent=0 // loop_pre_header
    _
  $region3: #{conv_decoder_forward.11} parent=0 // loop_header
    %s8 = sphi 0, %s12
    %p9 = scmp.ge.s32.totalorder %s8, 4
    %s18 = sphi 0, %s20
    %s21 = sphi 0, %s18
    %s22 = sphi 0, %s21
    %s38 = sphi 0, %s22
    %s42 = sphi 0, %s42
    %s44 = sphi 0, %s42
    %s45 = sphi 0, %s44
    %s59 = sphi 0, %s45
    %s65 = sphi 0, %s67
    %s68 = sphi 0, %s65
    %s69 = sphi 0, %s68
    %s85 = sphi 0, %s69
  $region4: #{conv_decoder_forward.11} parent=0 // loop_header_branch
    %11 = sbr.rel (%p9) target = $region8
  $region5: #{conv_decoder_forward.11} parent=0 // loop_body
    %s13 = ssub.s32 %s8, 1
    %s14 = ssub.s32 %s8, 2
    %s15 = sadd.s32 %s8, 1
    %s16 = ssub.s32 %s8, %s15
    %p17 = scmp.eq.s32.totalorder %s16, 0
    %s19 = sadd.s32 %s18, 1
    %s20 = scalar_select %p17, %s18, %s19
    %p23 = pneg %p17
    %p24 = scmp.eq.s32.totalorder %s8, 1
    %p25 = por %p23, %p24
    %p26 = scmp.ne.s32.totalorder %s18, %s21
    %p27 = scmp.eq.s32.totalorder %s8, 0
    %p28 = por %p26, %p27
    %p29 = scmp.ne.s32.totalorder %s18, %s21
    %p30 = scmp.eq.s32.totalorder %s13, 1
    %p31 = por %p29, %p30
    %p32 = scmp.ne.s32.totalorder %s21, %s22
    %p33 = scmp.eq.s32.totalorder %s13, 0
    %p34 = por %p32, %p33
    %p35 = scmp.ne.s32.totalorder %s21, %s22
    %p36 = scmp.eq.s32.totalorder %s14, 1
    %p37 = por %p35, %p36
    %p39 = scmp.ne.s32.totalorder %s22, %s38
    %p40 = scmp.eq.s32.totalorder %s14, 0
    %p41 = por %p39, %p40
    %s43 = sadd.s32 %s42, 1
    %p46 = scmp.eq.s32.totalorder %s8, 1
    %p47 = scmp.ne.s32.totalorder %s42, %s44
    %p48 = scmp.eq.s32.totalorder %s8, 0
    %p49 = por %p47, %p48
    %p50 = scmp.ne.s32.totalorder %s42, %s44
    %p51 = scmp.eq.s32.totalorder %s13, 1
    %p52 = por %p50, %p51
    %p53 = scmp.ne.s32.totalorder %s44, %s45
    %p54 = scmp.eq.s32.totalorder %s13, 0
    %p55 = por %p53, %p54
    %p56 = scmp.ne.s32.totalorder %s44, %s45
    %p57 = scmp.eq.s32.totalorder %s14, 1
    %p58 = por %p56, %p57
    %p60 = scmp.ne.s32.totalorder %s45, %s59
    %p61 = scmp.eq.s32.totalorder %s14, 0
    %p62 = por %p60, %p61
    %s63 = ssub.s32 %s8, %s15
    %p64 = scmp.eq.s32.totalorder %s63, 0
    %s66 = sadd.s32 %s65, 1
    %s67 = scalar_select %p64, %s65, %s66
    %p70 = pneg %p64
    %p71 = scmp.eq.s32.totalorder %s8, 1
    %p72 = por %p70, %p71
    %p73 = scmp.ne.s32.totalorder %s65, %s68
    %p74 = scmp.eq.s32.totalorder %s8, 0
    %p75 = por %p73, %p74
    %p76 = scmp.ne.s32.totalorder %s65, %s68
    %p77 = scmp.eq.s32.totalorder %s13, 1
    %p78 = por %p76, %p77
    %p79 = scmp.ne.s32.totalorder %s68, %s69
    %p80 = scmp.eq.s32.totalorder %s13, 0
    %p81 = por %p79, %p80
    %p82 = scmp.ne.s32.totalorder %s68, %s69
    %p83 = scmp.eq.s32.totalorder %s14, 1
    %p84 = por %p82, %p83
    %p86 = scmp.ne.s32.totalorder %s69, %s85
    %p87 = scmp.eq.s32.totalorder %s14, 0
    %p88 = por %p86, %p87
    %p89 = scmp.le.s32.totalorder 1, %s8
    %p90 = scmp.lt.s32.totalorder %s8, 3
    %p91 = pnand %p89, %p90
    %p92 = pneg %p91
    // Predicated region
    $region9: #{conv_decoder_forward.11} parent=5 // pred_check
      _
    $region10: #{conv_decoder_forward.11} parent=5 // pred_check_branch
      %94 = sbr.rel (%p91) target = $region12
    $region11: #{conv_decoder_forward.11} parent=5 // pred_region
      %s95 = ssub.s32 %s8, 1
      // Predicated region
      $region13: #{conv_decoder_forward.11} parent=11 // pred_check
        %p96 = pneg %p55
      $region14: #{conv_decoder_forward.11} parent=11 // pred_check_branch
        %98 = sbr.rel (%p96) target = $region16
      $region15: #{conv_decoder_forward.11} parent=11 // pred_region
        _
      $region16: #{conv_decoder_forward.11} parent=11 // pred_fallthru
        _
    $region12: #{conv_decoder_forward.11} parent=5 // pred_fallthru
      _
    %p99 = scmp.lt.s32.totalorder %s8, 2
    // Predicated region
    $region17: #{conv_decoder_forward.11} parent=5 // pred_check
      %p100 = pneg %p99
    $region18: #{conv_decoder_forward.11} parent=5 // pred_check_branch
      %102 = sbr.rel (%p100) target = $region20
    $region19: #{conv_decoder_forward.11} parent=5 // pred_region
      // Predicated region
      $region21: #{conv_decoder_forward.11} parent=19 // pred_check
        %p103 = pneg %p28
      $region22: #{conv_decoder_forward.11} parent=19 // pred_check_branch
        %105 = sbr.rel (%p103) target = $region24
      $region23: #{conv_decoder_forward.11} parent=19 // pred_region
        %s106 = smul.u32 128, %s8
        %p107 = scmp.lt.s32.totalorder %s106, 255
        %s108 = scalar_select %p107, %s106, 255
        %s109 = smul.addr %s108, 4
        %s110 = scalar_lea.vmem %s0, %s109
        %s111 = smul.u32 128, %s8
      $region24: #{conv_decoder_forward.11} parent=19 // pred_fallthru
        _
    $region20: #{conv_decoder_forward.11} parent=5 // pred_fallthru
      _
    %p112 = scmp.le.s32.totalorder 1, %s8
    %p113 = scmp.lt.s32.totalorder %s8, 3
    %p114 = pnand %p112, %p113
    %p115 = pneg %p114
    // Predicated region
    $region25: #{conv_decoder_forward.11} parent=5 // pred_check
      _
    $region26: #{conv_decoder_forward.11} parent=5 // pred_check_branch
      %117 = sbr.rel (%p114) target = $region28
    $region27: #{conv_decoder_forward.11} parent=5 // pred_region
      %s118 = ssub.s32 %s8, 1
      %s119 = smul.u32 128, %s13
      %p120 = scmp.lt.s32.totalorder %s119, 255
      %s121 = scalar_select %p120, %s119, 255
      %s122 = smul.addr %s121, 4
      %s123 = scalar_lea.vmem %s0, %s122
      %p124 = pneg %p34
      %p125 = pneg %p31
      %p126 = pneg %p55
      %p127 = pneg %p52
      %p128 = pneg %p81
      %p129 = pneg %p78
      %s130 = smul.u32 128, %s13
      %p131 = scmp.lt.s32.totalorder %s130, 255
      %s132 = scalar_select %p131, %s130, 255
      %s133 = smul.addr %s132, 8
      %s134 = scalar_lea.vmem %s2, %s133
      %s135 = smul.u32 128, %s13
      %p136 = scmp.lt.s32.totalorder %s135, 255
      %s137 = scalar_select %p136, %s135, 255
      %s138 = smul.addr %s137, 4
      %s139 = scalar_lea.vmem %s0, %s138
      %s140 = smul.u32 128, %s13
      %s141 = smul.u32 128, %s13
      %p142 = scmp.lt.s32.totalorder %s141, 255
      %s143 = scalar_select %p142, %s141, 255
      %s144 = smul.addr %s143, 8
      %s145 = scalar_lea.vmem %s2, %s144
      %s146 = smul.u32 128, %s13
      %v148 = vld [vmem:[%s139] sm:$0xf]
      %v149 = vld [vmem:[%s139 + $0x4] sm:$0xf]
      %v150 = vld [vmem:[%s139 + $0x8] sm:$0xf]
      %v151 = vld [vmem:[%s139 + $0xc] sm:$0xf]
      %v152 = vld [vmem:[%s139 + $0x10] sm:$0xf]
      %v153 = vld [vmem:[%s139 + $0x14] sm:$0xf]
      %v154 = vld [vmem:[%s139 + $0x18] sm:$0xf]
      %v155 = vld [vmem:[%s139 + $0x1c] sm:$0xf]
      %v156 = vld [vmem:[%s139 + $0x20] sm:$0xf]
      %v157 = vld [vmem:[%s139 + $0x24] sm:$0xf]
      %v158 = vld [vmem:[%s139 + $0x28] sm:$0xf]
      %v159 = vld [vmem:[%s139 + $0x2c] sm:$0xf]
      %v160 = vld [vmem:[%s139 + $0x30] sm:$0xf]
      %v161 = vld [vmem:[%s139 + $0x34] sm:$0xf]
      %v162 = vld [vmem:[%s139 + $0x38] sm:$0xf]
      %v163 = vld [vmem:[%s139 + $0x3c] sm:$0xf]
      %v164 = vld [vmem:[%s139 + $0x40] sm:$0xf]
      %v165 = vld [vmem:[%s139 + $0x44] sm:$0xf]
      %v166 = vld [vmem:[%s139 + $0x48] sm:$0xf]
      %v167 = vld [vmem:[%s139 + $0x4c] sm:$0xf]
      %v168 = vld [vmem:[%s139 + $0x50] sm:$0xf]
      %v169 = vld [vmem:[%s139 + $0x54] sm:$0xf]
      %v170 = vld [vmem:[%s139 + $0x58] sm:$0xf]
      %v171 = vld [vmem:[%s139 + $0x5c] sm:$0xf]
      %v172 = vld [vmem:[%s139 + $0x60] sm:$0xf]
      %v173 = vld [vmem:[%s139 + $0x64] sm:$0xf]
      %v174 = vld [vmem:[%s139 + $0x68] sm:$0xf]
      %v175 = vld [vmem:[%s139 + $0x6c] sm:$0xf]
      %v176 = vld [vmem:[%s139 + $0x70] sm:$0xf]
      %v177 = vld [vmem:[%s139 + $0x74] sm:$0xf]
      %v178 = vld [vmem:[%s139 + $0x78] sm:$0xf]
      %v179 = vld [vmem:[%s139 + $0x7c] sm:$0xf]
      %v180 = vld [vmem:[%s139 + $0x80] sm:$0xf]
      %v181 = vld [vmem:[%s139 + $0x84] sm:$0xf]
      %v182 = vld [vmem:[%s139 + $0x88] sm:$0xf]
      %v183 = vld [vmem:[%s139 + $0x8c] sm:$0xf]
      %v184 = vld [vmem:[%s139 + $0x90] sm:$0xf]
      %v185 = vld [vmem:[%s139 + $0x94] sm:$0xf]
      %v186 = vld [vmem:[%s139 + $0x98] sm:$0xf]
      %v187 = vld [vmem:[%s139 + $0x9c] sm:$0xf]
      %v188 = vld [vmem:[%s139 + $0xa0] sm:$0xf]
      %v189 = vld [vmem:[%s139 + $0xa4] sm:$0xf]
      %v190 = vld [vmem:[%s139 + $0xa8] sm:$0xf]
      %v191 = vld [vmem:[%s139 + $0xac] sm:$0xf]
      %v192 = vld [vmem:[%s139 + $0xb0] sm:$0xf]
      %v193 = vld [vmem:[%s139 + $0xb4] sm:$0xf]
      %v194 = vld [vmem:[%s139 + $0xb8] sm:$0xf]
      %v195 = vld [vmem:[%s139 + $0xbc] sm:$0xf]
      %v196 = vld [vmem:[%s139 + $0xc0] sm:$0xf]
      %v197 = vld [vmem:[%s139 + $0xc4] sm:$0xf]
      %v198 = vld [vmem:[%s139 + $0xc8] sm:$0xf]
      %v199 = vld [vmem:[%s139 + $0xcc] sm:$0xf]
      %v200 = vld [vmem:[%s139 + $0xd0] sm:$0xf]
      %v201 = vld [vmem:[%s139 + $0xd4] sm:$0xf]
      %v202 = vld [vmem:[%s139 + $0xd8] sm:$0xf]
      %v203 = vld [vmem:[%s139 + $0xdc] sm:$0xf]
      %v204 = vld [vmem:[%s139 + $0xe0] sm:$0xf]
      %v205 = vld [vmem:[%s139 + $0xe4] sm:$0xf]
      %v206 = vld [vmem:[%s139 + $0xe8] sm:$0xf]
      %v207 = vld [vmem:[%s139 + $0xec] sm:$0xf]
      %v208 = vld [vmem:[%s139 + $0xf0] sm:$0xf]
      %v209 = vld [vmem:[%s139 + $0xf4] sm:$0xf]
      %v210 = vld [vmem:[%s139 + $0xf8] sm:$0xf]
      %v211 = vld [vmem:[%s139 + $0xfc] sm:$0xf]
      %v212 = vld [vmem:[%s139 + $0x100] sm:$0xf]
      %v213 = vld [vmem:[%s139 + $0x104] sm:$0xf]
      %v214 = vld [vmem:[%s139 + $0x108] sm:$0xf]
      %v215 = vld [vmem:[%s139 + $0x10c] sm:$0xf]
      %v216 = vld [vmem:[%s139 + $0x110] sm:$0xf]
      %v217 = vld [vmem:[%s139 + $0x114] sm:$0xf]
      %v218 = vld [vmem:[%s139 + $0x118] sm:$0xf]
      %v219 = vld [vmem:[%s139 + $0x11c] sm:$0xf]
      %v220 = vld [vmem:[%s139 + $0x120] sm:$0xf]
      %v221 = vld [vmem:[%s139 + $0x124] sm:$0xf]
      %v222 = vld [vmem:[%s139 + $0x128] sm:$0xf]
      %v223 = vld [vmem:[%s139 + $0x12c] sm:$0xf]
      %v224 = vld [vmem:[%s139 + $0x130] sm:$0xf]
      %v225 = vld [vmem:[%s139 + $0x134] sm:$0xf]
      %v226 = vld [vmem:[%s139 + $0x138] sm:$0xf]
      %v227 = vld [vmem:[%s139 + $0x13c] sm:$0xf]
      %v228 = vld [vmem:[%s139 + $0x140] sm:$0xf]
      %v229 = vld [vmem:[%s139 + $0x144] sm:$0xf]
      %v230 = vld [vmem:[%s139 + $0x148] sm:$0xf]
      %v231 = vld [vmem:[%s139 + $0x14c] sm:$0xf]
      %v232 = vld [vmem:[%s139 + $0x150] sm:$0xf]
      %v233 = vld [vmem:[%s139 + $0x154] sm:$0xf]
      %v234 = vld [vmem:[%s139 + $0x158] sm:$0xf]
      %v235 = vld [vmem:[%s139 + $0x15c] sm:$0xf]
      %v236 = vld [vmem:[%s139 + $0x160] sm:$0xf]
      %v237 = vld [vmem:[%s139 + $0x164] sm:$0xf]
      %v238 = vld [vmem:[%s139 + $0x168] sm:$0xf]
      %v239 = vld [vmem:[%s139 + $0x16c] sm:$0xf]
      %v240 = vld [vmem:[%s139 + $0x170] sm:$0xf]
      %v241 = vld [vmem:[%s139 + $0x174] sm:$0xf]
      %v242 = vld [vmem:[%s139 + $0x178] sm:$0xf]
      %v243 = vld [vmem:[%s139 + $0x17c] sm:$0xf]
      %v244 = vld [vmem:[%s139 + $0x180] sm:$0xf]
      %v245 = vld [vmem:[%s139 + $0x184] sm:$0xf]
      %v246 = vld [vmem:[%s139 + $0x188] sm:$0xf]
      %v247 = vld [vmem:[%s139 + $0x18c] sm:$0xf]
      %v248 = vld [vmem:[%s139 + $0x190] sm:$0xf]
      %v249 = vld [vmem:[%s139 + $0x194] sm:$0xf]
      %v250 = vld [vmem:[%s139 + $0x198] sm:$0xf]
      %v251 = vld [vmem:[%s139 + $0x19c] sm:$0xf]
      %v252 = vld [vmem:[%s139 + $0x1a0] sm:$0xf]
      %v253 = vld [vmem:[%s139 + $0x1a4] sm:$0xf]
      %v254 = vld [vmem:[%s139 + $0x1a8] sm:$0xf]
      %v255 = vld [vmem:[%s139 + $0x1ac] sm:$0xf]
      %v256 = vld [vmem:[%s139 + $0x1b0] sm:$0xf]
      %v257 = vld [vmem:[%s139 + $0x1b4] sm:$0xf]
      %v258 = vld [vmem:[%s139 + $0x1b8] sm:$0xf]
      %v259 = vld [vmem:[%s139 + $0x1bc] sm:$0xf]
      %v260 = vld [vmem:[%s139 + $0x1c0] sm:$0xf]
      %v261 = vld [vmem:[%s139 + $0x1c4] sm:$0xf]
      %v262 = vld [vmem:[%s139 + $0x1c8] sm:$0xf]
      %v263 = vld [vmem:[%s139 + $0x1cc] sm:$0xf]
      %v264 = vld [vmem:[%s139 + $0x1d0] sm:$0xf]
      %v265 = vld [vmem:[%s139 + $0x1d4] sm:$0xf]
      %v266 = vld [vmem:[%s139 + $0x1d8] sm:$0xf]
      %v267 = vld [vmem:[%s139 + $0x1dc] sm:$0xf]
      %v268 = vld [vmem:[%s139 + $0x1e0] sm:$0xf]
      %v269 = vld [vmem:[%s139 + $0x1e4] sm:$0xf]
      %v270 = vld [vmem:[%s139 + $0x1e8] sm:$0xf]
      %v271 = vld [vmem:[%s139 + $0x1ec] sm:$0xf]
      %v272 = vld [vmem:[%s139 + $0x1f0] sm:$0xf]
      %v273 = vld [vmem:[%s139 + $0x1f4] sm:$0xf]
      %v274 = vld [vmem:[%s139 + $0x1f8] sm:$0xf]
      %v275 = vld [vmem:[%s139 + $0x1fc] sm:$0xf]
      %v276 = vld [vmem:[%s1] sm:$0xf]
      %v277 = vld [vmem:[%s1 + $0x4] sm:$0xf]
      %v278 = vld [vmem:[%s1 + $0x8] sm:$0xf]
      %v279 = vld [vmem:[%s1 + $0xc] sm:$0xf]
      %v408 = vunpack.c.l.b16 %v148
      %v409 = vunpack.c.l.b16 %v149
      %v410 = vunpack.c.l.b16 %v150
      %v411 = vunpack.c.l.b16 %v151
      %v412 = vunpack.c.l.b16 %v152
      %v413 = vunpack.c.l.b16 %v153
      %v414 = vunpack.c.l.b16 %v154
      %v415 = vunpack.c.l.b16 %v155
      %v416 = vunpack.c.l.b16 %v156
      %v417 = vunpack.c.l.b16 %v157
      %v418 = vunpack.c.l.b16 %v158
      %v419 = vunpack.c.l.b16 %v159
      %v420 = vunpack.c.l.b16 %v160
      %v421 = vunpack.c.l.b16 %v161
      %v422 = vunpack.c.l.b16 %v162
      %v423 = vunpack.c.l.b16 %v163
      %v424 = vunpack.c.l.b16 %v164
      %v425 = vunpack.c.l.b16 %v165
      %v426 = vunpack.c.l.b16 %v166
      %v427 = vunpack.c.l.b16 %v167
      %v428 = vunpack.c.l.b16 %v168
      %v429 = vunpack.c.l.b16 %v169
      %v430 = vunpack.c.l.b16 %v170
      %v431 = vunpack.c.l.b16 %v171
      %v432 = vunpack.c.l.b16 %v172
      %v433 = vunpack.c.l.b16 %v173
      %v434 = vunpack.c.l.b16 %v174
      %v435 = vunpack.c.l.b16 %v175
      %v436 = vunpack.c.l.b16 %v176
      %v437 = vunpack.c.l.b16 %v177
      %v438 = vunpack.c.l.b16 %v178
      %v439 = vunpack.c.l.b16 %v179
      %v440 = vunpack.c.l.b16 %v180
      %v441 = vunpack.c.l.b16 %v181
      %v442 = vunpack.c.l.b16 %v182
      %v443 = vunpack.c.l.b16 %v183
      %v444 = vunpack.c.l.b16 %v184
      %v445 = vunpack.c.l.b16 %v185
      %v446 = vunpack.c.l.b16 %v186
      %v447 = vunpack.c.l.b16 %v187
      %v448 = vunpack.c.l.b16 %v188
      %v449 = vunpack.c.l.b16 %v189
      %v450 = vunpack.c.l.b16 %v190
      %v451 = vunpack.c.l.b16 %v191
      %v452 = vunpack.c.l.b16 %v192
      %v453 = vunpack.c.l.b16 %v193
      %v454 = vunpack.c.l.b16 %v194
      %v455 = vunpack.c.l.b16 %v195
      %v456 = vunpack.c.l.b16 %v196
      %v457 = vunpack.c.l.b16 %v197
      %v458 = vunpack.c.l.b16 %v198
      %v459 = vunpack.c.l.b16 %v199
      %v460 = vunpack.c.l.b16 %v200
      %v461 = vunpack.c.l.b16 %v201
      %v462 = vunpack.c.l.b16 %v202
      %v463 = vunpack.c.l.b16 %v203
      %v464 = vunpack.c.l.b16 %v204
      %v465 = vunpack.c.l.b16 %v205
      %v466 = vunpack.c.l.b16 %v206
      %v467 = vunpack.c.l.b16 %v207
      %v468 = vunpack.c.l.b16 %v208
      %v469 = vunpack.c.l.b16 %v209
      %v470 = vunpack.c.l.b16 %v210
      %v471 = vunpack.c.l.b16 %v211
      %v472 = vunpack.c.l.b16 %v212
      %v473 = vunpack.c.l.b16 %v213
      %v474 = vunpack.c.l.b16 %v214
      %v475 = vunpack.c.l.b16 %v215
      %v476 = vunpack.c.l.b16 %v216
      %v477 = vunpack.c.l.b16 %v217
      %v478 = vunpack.c.l.b16 %v218
      %v479 = vunpack.c.l.b16 %v219
      %v480 = vunpack.c.l.b16 %v220
      %v481 = vunpack.c.l.b16 %v221
      %v482 = vunpack.c.l.b16 %v222
      %v483 = vunpack.c.l.b16 %v223
      %v484 = vunpack.c.l.b16 %v224
      %v485 = vunpack.c.l.b16 %v225
      %v486 = vunpack.c.l.b16 %v226
      %v487 = vunpack.c.l.b16 %v227
      %v488 = vunpack.c.l.b16 %v228
      %v489 = vunpack.c.l.b16 %v229
      %v490 = vunpack.c.l.b16 %v230
      %v491 = vunpack.c.l.b16 %v231
      %v492 = vunpack.c.l.b16 %v232
      %v493 = vunpack.c.l.b16 %v233
      %v494 = vunpack.c.l.b16 %v234
      %v495 = vunpack.c.l.b16 %v235
      %v496 = vunpack.c.l.b16 %v236
      %v497 = vunpack.c.l.b16 %v237
      %v498 = vunpack.c.l.b16 %v238
      %v499 = vunpack.c.l.b16 %v239
      %v500 = vunpack.c.l.b16 %v240
      %v501 = vunpack.c.l.b16 %v241
      %v502 = vunpack.c.l.b16 %v242
      %v503 = vunpack.c.l.b16 %v243
      %v504 = vunpack.c.l.b16 %v244
      %v505 = vunpack.c.l.b16 %v245
      %v506 = vunpack.c.l.b16 %v246
      %v507 = vunpack.c.l.b16 %v247
      %v508 = vunpack.c.l.b16 %v248
      %v509 = vunpack.c.l.b16 %v249
      %v510 = vunpack.c.l.b16 %v250
      %v511 = vunpack.c.l.b16 %v251
      %v512 = vunpack.c.l.b16 %v252
      %v513 = vunpack.c.l.b16 %v253
      %v514 = vunpack.c.l.b16 %v254
      %v515 = vunpack.c.l.b16 %v255
      %v516 = vunpack.c.l.b16 %v256
      %v517 = vunpack.c.l.b16 %v257
      %v518 = vunpack.c.l.b16 %v258
      %v519 = vunpack.c.l.b16 %v259
      %v520 = vunpack.c.l.b16 %v260
      %v521 = vunpack.c.l.b16 %v261
      %v522 = vunpack.c.l.b16 %v262
      %v523 = vunpack.c.l.b16 %v263
      %v524 = vunpack.c.l.b16 %v264
      %v525 = vunpack.c.l.b16 %v265
      %v526 = vunpack.c.l.b16 %v266
      %v527 = vunpack.c.l.b16 %v267
      %v528 = vunpack.c.l.b16 %v268
      %v529 = vunpack.c.l.b16 %v269
      %v530 = vunpack.c.l.b16 %v270
      %v531 = vunpack.c.l.b16 %v271
      %v532 = vunpack.c.l.b16 %v272
      %v533 = vunpack.c.l.b16 %v273
      %v534 = vunpack.c.l.b16 %v274
      %v535 = vunpack.c.l.b16 %v275
      %v536 = vpack.c.b16 %v409, %v408
      %v537 = vpack.c.b16 %v411, %v410
      %v538 = vpack.c.b16 %v413, %v412
      %v539 = vpack.c.b16 %v415, %v414
      %v540 = vpack.c.b16 %v417, %v416
      %v541 = vpack.c.b16 %v419, %v418
      %v542 = vpack.c.b16 %v421, %v420
      %v543 = vpack.c.b16 %v423, %v422
      %v544 = vpack.c.b16 %v425, %v424
      %v545 = vpack.c.b16 %v427, %v426
      %v546 = vpack.c.b16 %v429, %v428
      %v547 = vpack.c.b16 %v431, %v430
      %v548 = vpack.c.b16 %v433, %v432
      %v549 = vpack.c.b16 %v435, %v434
      %v550 = vpack.c.b16 %v437, %v436
      %v551 = vpack.c.b16 %v439, %v438
      %v552 = vpack.c.b16 %v441, %v440
      %v553 = vpack.c.b16 %v443, %v442
      %v554 = vpack.c.b16 %v445, %v444
      %v555 = vpack.c.b16 %v447, %v446
      %v556 = vpack.c.b16 %v449, %v448
      %v557 = vpack.c.b16 %v451, %v450
      %v558 = vpack.c.b16 %v453, %v452
      %v559 = vpack.c.b16 %v455, %v454
      %v560 = vpack.c.b16 %v457, %v456
      %v561 = vpack.c.b16 %v459, %v458
      %v562 = vpack.c.b16 %v461, %v460
      %v563 = vpack.c.b16 %v463, %v462
      %v564 = vpack.c.b16 %v465, %v464
      %v565 = vpack.c.b16 %v467, %v466
      %v566 = vpack.c.b16 %v469, %v468
      %v567 = vpack.c.b16 %v471, %v470
      %v568 = vpack.c.b16 %v473, %v472
      %v569 = vpack.c.b16 %v475, %v474
      %v570 = vpack.c.b16 %v477, %v476
      %v571 = vpack.c.b16 %v479, %v478
      %v572 = vpack.c.b16 %v481, %v480
      %v573 = vpack.c.b16 %v483, %v482
      %v574 = vpack.c.b16 %v485, %v484
      %v575 = vpack.c.b16 %v487, %v486
      %v576 = vpack.c.b16 %v489, %v488
      %v577 = vpack.c.b16 %v491, %v490
      %v578 = vpack.c.b16 %v493, %v492
      %v579 = vpack.c.b16 %v495, %v494
      %v580 = vpack.c.b16 %v497, %v496
      %v581 = vpack.c.b16 %v499, %v498
      %v582 = vpack.c.b16 %v501, %v500
      %v583 = vpack.c.b16 %v503, %v502
      %v584 = vpack.c.b16 %v505, %v504
      %v585 = vpack.c.b16 %v507, %v506
      %v586 = vpack.c.b16 %v509, %v508
      %v587 = vpack.c.b16 %v511, %v510
      %v588 = vpack.c.b16 %v513, %v512
      %v589 = vpack.c.b16 %v515, %v514
      %v590 = vpack.c.b16 %v517, %v516
      %v591 = vpack.c.b16 %v519, %v518
      %v592 = vpack.c.b16 %v521, %v520
      %v593 = vpack.c.b16 %v523, %v522
      %v594 = vpack.c.b16 %v525, %v524
      %v595 = vpack.c.b16 %v527, %v526
      %v596 = vpack.c.b16 %v529, %v528
      %v597 = vpack.c.b16 %v531, %v530
      %v598 = vpack.c.b16 %v533, %v532
      %v599 = vpack.c.b16 %v535, %v534
      %v604 = vunpack.c.l.b16 %v276
      %v605 = vunpack.c.l.b16 %v277
      %v606 = vunpack.c.l.b16 %v278
      %v607 = vunpack.c.l.b16 %v279
      %v608 = vpack.c.b16 %v605, %v604
      %v609 = vpack.c.b16 %v607, %v606
      %vm612 = vcmask 261120
      %v614 = vsel %vm612, %v536, 0
      %v617 = vsel %vm612, %v537, 0
      %v620 = vsel %vm612, %v538, 0
      %v623 = vsel %vm612, %v539, 0
      %v626 = vsel %vm612, %v540, 0
      %v629 = vsel %vm612, %v541, 0
      %v632 = vsel %vm612, %v542, 0
      %v635 = vsel %vm612, %v543, 0
      %v638 = vsel %vm612, %v544, 0
      %v641 = vsel %vm612, %v545, 0
      %v644 = vsel %vm612, %v546, 0
      %v647 = vsel %vm612, %v547, 0
      %v650 = vsel %vm612, %v548, 0
      %v653 = vsel %vm612, %v549, 0
      %v656 = vsel %vm612, %v550, 0
      %v659 = vsel %vm612, %v551, 0
      %v662 = vsel %vm612, %v552, 0
      %v665 = vsel %vm612, %v553, 0
      %v668 = vsel %vm612, %v554, 0
      %v671 = vsel %vm612, %v555, 0
      %v674 = vsel %vm612, %v556, 0
      %v677 = vsel %vm612, %v557, 0
      %v680 = vsel %vm612, %v558, 0
      %v683 = vsel %vm612, %v559, 0
      %v686 = vsel %vm612, %v560, 0
      %v689 = vsel %vm612, %v561, 0
      %v692 = vsel %vm612, %v562, 0
      %v695 = vsel %vm612, %v563, 0
      %v698 = vsel %vm612, %v564, 0
      %v701 = vsel %vm612, %v565, 0
      %v704 = vsel %vm612, %v566, 0
      %v707 = vsel %vm612, %v567, 0
      %v710 = vsel %vm612, %v568, 0
      %v713 = vsel %vm612, %v569, 0
      %v716 = vsel %vm612, %v570, 0
      %v719 = vsel %vm612, %v571, 0
      %v722 = vsel %vm612, %v572, 0
      %v725 = vsel %vm612, %v573, 0
      %v728 = vsel %vm612, %v574, 0
      %v731 = vsel %vm612, %v575, 0
      %v734 = vsel %vm612, %v576, 0
      %v737 = vsel %vm612, %v577, 0
      %v740 = vsel %vm612, %v578, 0
      %v743 = vsel %vm612, %v579, 0
      %v746 = vsel %vm612, %v580, 0
      %v749 = vsel %vm612, %v581, 0
      %v752 = vsel %vm612, %v582, 0
      %v755 = vsel %vm612, %v583, 0
      %v758 = vsel %vm612, %v584, 0
      %v761 = vsel %vm612, %v585, 0
      %v764 = vsel %vm612, %v586, 0
      %v767 = vsel %vm612, %v587, 0
      %v770 = vsel %vm612, %v588, 0
      %v773 = vsel %vm612, %v589, 0
      %v776 = vsel %vm612, %v590, 0
      %v779 = vsel %vm612, %v591, 0
      %v782 = vsel %vm612, %v592, 0
      %v785 = vsel %vm612, %v593, 0
      %v788 = vsel %vm612, %v594, 0
      %v791 = vsel %vm612, %v595, 0
      %v794 = vsel %vm612, %v596, 0
      %v797 = vsel %vm612, %v597, 0
      %v800 = vsel %vm612, %v598, 0
      %v803 = vsel %vm612, %v599, 0
      %805 = vmatprep.subr.bf16.mxu0 0
      %806 = vmatpush1.bf16.msra.mxu0 0
      %807 = vmatprep.subr.bf16.mxu0 0
      %808 = vmatpush1.bf16.msra.mxu0 0
      %809 = vmatprep.subr.bf16.mxu0 0
      %810 = vmatpush1.bf16.msra.mxu0 0
      %811 = vmatprep.subr.bf16.mxu0 0
      %812 = vmatpush1.bf16.msra.mxu0 0
      %813 = vmatprep.subr.bf16.mxu0 0
      %814 = vmatpush1.bf16.msra.mxu0 0
      %815 = vmatprep.subr.bf16.mxu0 0
      %816 = vmatpush1.bf16.msra.mxu0 0
      %817 = vmatprep.subr.bf16.mxu0 0
      %818 = vmatpush1.bf16.msra.mxu0 %v609
      %819 = vmatprep.subr.bf16.mxu0 0
      %820 = vmatpush1.bf16.msra.mxu0 %v608
      %821 = vmatprep.subr.bf16.mxu0 0
      %822 = vmatpush2.bf16.msra.mxu0 0
      %823 = vmatprep.subr.bf16.mxu0 0
      %824 = vmatpush2.bf16.msra.mxu0 0
      %825 = vmatprep.subr.bf16.mxu0 0
      %826 = vmatpush2.bf16.msra.mxu0 0
      %827 = vmatprep.subr.bf16.mxu0 0
      %828 = vmatpush2.bf16.msra.mxu0 0
      %829 = vmatprep.subr.bf16.mxu0 0
      %830 = vmatpush2.bf16.msra.mxu0 0
      %831 = vmatprep.subr.bf16.mxu0 0
      %832 = vmatpush2.bf16.msra.mxu0 0
      %833 = vmatprep.subr.bf16.mxu0 0
      %834 = vmatpush2.bf16.msra.mxu0 0
      %835 = vmatprep.subr.bf16.mxu0 0
      %836 = vmatpush2.bf16.msra.mxu0 0
      %837 = vmatprep.mubr.bf16.mxu0 0
      %838 = vmatmul.mubr.bf16.gmra.mxu0 %v614
      %v839 = vpop.f32.mrf.mxu0
      %v840 = vadd.f32 0.0, %v839
      %v841 = vpop.f32.mrf.mxu0
      %v842 = vpop.f32.mrf.mxu0
      %v843 = vadd.f32 0.0, %v842
      %v844 = vpop.f32.mrf.mxu0
      %845 = vmatprep.mubr.bf16.mxu0 0
      %846 = vmatmul.mubr.bf16.gmra.mxu0 %v617
      %v847 = vpop.f32.mrf.mxu0
      %v848 = vadd.f32 0.0, %v847
      %v849 = vpop.f32.mrf.mxu0
      %v850 = vpop.f32.mrf.mxu0
      %v851 = vadd.f32 0.0, %v850
      %v852 = vpop.f32.mrf.mxu0
      %853 = vmatprep.mubr.bf16.mxu0 0
      %854 = vmatmul.mubr.bf16.gmra.mxu0 %v620
      %v855 = vpop.f32.mrf.mxu0
      %v856 = vadd.f32 0.0, %v855
      %v857 = vpop.f32.mrf.mxu0
      %v858 = vpop.f32.mrf.mxu0
      %v859 = vadd.f32 0.0, %v858
      %v860 = vpop.f32.mrf.mxu0
      %861 = vmatprep.mubr.bf16.mxu0 0
      %862 = vmatmul.mubr.bf16.gmra.mxu0 %v623
      %v863 = vpop.f32.mrf.mxu0
      %v864 = vadd.f32 0.0, %v863
      %v865 = vpop.f32.mrf.mxu0
      %v866 = vpop.f32.mrf.mxu0
      %v867 = vadd.f32 0.0, %v866
      %v868 = vpop.f32.mrf.mxu0
      %869 = vmatprep.mubr.bf16.mxu0 0
      %870 = vmatmul.mubr.bf16.gmra.mxu0 %v626
      %v871 = vpop.f32.mrf.mxu0
      %v872 = vadd.f32 0.0, %v871
      %v873 = vpop.f32.mrf.mxu0
      %v874 = vpop.f32.mrf.mxu0
      %v875 = vadd.f32 0.0, %v874
      %v876 = vpop.f32.mrf.mxu0
      %877 = vmatprep.mubr.bf16.mxu0 0
      %878 = vmatmul.mubr.bf16.gmra.mxu0 %v629
      %v879 = vpop.f32.mrf.mxu0
      %v880 = vadd.f32 0.0, %v879
      %v881 = vpop.f32.mrf.mxu0
      %v882 = vpop.f32.mrf.mxu0
      %v883 = vadd.f32 0.0, %v882
      %v884 = vpop.f32.mrf.mxu0
      %885 = vmatprep.mubr.bf16.mxu0 0
      %886 = vmatmul.mubr.bf16.gmra.mxu0 %v632
      %v887 = vpop.f32.mrf.mxu0
      %v888 = vadd.f32 0.0, %v887
      %v889 = vpop.f32.mrf.mxu0
      %v890 = vpop.f32.mrf.mxu0
      %v891 = vadd.f32 0.0, %v890
      %v892 = vpop.f32.mrf.mxu0
      %893 = vmatprep.mubr.bf16.mxu0 0
      %894 = vmatmul.mubr.bf16.gmra.mxu0 %v635
      %v895 = vpop.f32.mrf.mxu0
      %v896 = vadd.f32 0.0, %v895
      %v897 = vpop.f32.mrf.mxu0
      %v898 = vpop.f32.mrf.mxu0
      %v899 = vadd.f32 0.0, %v898
      %v900 = vpop.f32.mrf.mxu0
      %901 = vmatprep.mubr.bf16.mxu0 0
      %902 = vmatmul.mubr.bf16.gmra.mxu0 %v638
      %v903 = vpop.f32.mrf.mxu0
      %v904 = vadd.f32 0.0, %v903
      %v905 = vpop.f32.mrf.mxu0
      %v906 = vpop.f32.mrf.mxu0
      %v907 = vadd.f32 0.0, %v906
      %v908 = vpop.f32.mrf.mxu0
      %909 = vmatprep.mubr.bf16.mxu0 0
      %910 = vmatmul.mubr.bf16.gmra.mxu0 %v641
      %v911 = vpop.f32.mrf.mxu0
      %v912 = vadd.f32 0.0, %v911
      %v913 = vpop.f32.mrf.mxu0
      %v914 = vpop.f32.mrf.mxu0
      %v915 = vadd.f32 0.0, %v914
      %v916 = vpop.f32.mrf.mxu0
      %917 = vmatprep.mubr.bf16.mxu0 0
      %918 = vmatmul.mubr.bf16.gmra.mxu0 %v644
      %v919 = vpop.f32.mrf.mxu0
      %v920 = vadd.f32 0.0, %v919
      %v921 = vpop.f32.mrf.mxu0
      %v922 = vpop.f32.mrf.mxu0
      %v923 = vadd.f32 0.0, %v922
      %v924 = vpop.f32.mrf.mxu0
      %925 = vmatprep.mubr.bf16.mxu0 0
      %926 = vmatmul.mubr.bf16.gmra.mxu0 %v647
      %v927 = vpop.f32.mrf.mxu0
      %v928 = vadd.f32 0.0, %v927
      %v929 = vpop.f32.mrf.mxu0
      %v930 = vpop.f32.mrf.mxu0
      %v931 = vadd.f32 0.0, %v930
      %v932 = vpop.f32.mrf.mxu0
      %933 = vmatprep.mubr.bf16.mxu0 0
      %934 = vmatmul.mubr.bf16.gmra.mxu0 %v650
      %v935 = vpop.f32.mrf.mxu0
      %v936 = vadd.f32 0.0, %v935
      %v937 = vpop.f32.mrf.mxu0
      %v938 = vpop.f32.mrf.mxu0
      %v939 = vadd.f32 0.0, %v938
      %v940 = vpop.f32.mrf.mxu0
      %941 = vmatprep.mubr.bf16.mxu0 0
      %942 = vmatmul.mubr.bf16.gmra.mxu0 %v653
      %v943 = vpop.f32.mrf.mxu0
      %v944 = vadd.f32 0.0, %v943
      %v945 = vpop.f32.mrf.mxu0
      %v946 = vpop.f32.mrf.mxu0
      %v947 = vadd.f32 0.0, %v946
      %v948 = vpop.f32.mrf.mxu0
      %949 = vmatprep.mubr.bf16.mxu0 0
      %950 = vmatmul.mubr.bf16.gmra.mxu0 %v656
      %v951 = vpop.f32.mrf.mxu0
      %v952 = vadd.f32 0.0, %v951
      %v953 = vpop.f32.mrf.mxu0
      %v954 = vpop.f32.mrf.mxu0
      %v955 = vadd.f32 0.0, %v954
      %v956 = vpop.f32.mrf.mxu0
      %957 = vmatprep.mubr.bf16.mxu0 0
      %958 = vmatmul.mubr.bf16.gmra.mxu0 %v659
      %v959 = vpop.f32.mrf.mxu0
      %v960 = vadd.f32 0.0, %v959
      %v961 = vpop.f32.mrf.mxu0
      %v962 = vpop.f32.mrf.mxu0
      %v963 = vadd.f32 0.0, %v962
      %v964 = vpop.f32.mrf.mxu0
      %965 = vmatprep.mubr.bf16.mxu0 0
      %966 = vmatmul.mubr.bf16.gmra.mxu0 %v662
      %v967 = vpop.f32.mrf.mxu0
      %v968 = vadd.f32 0.0, %v967
      %v969 = vpop.f32.mrf.mxu0
      %v970 = vpop.f32.mrf.mxu0
      %v971 = vadd.f32 0.0, %v970
      %v972 = vpop.f32.mrf.mxu0
      %973 = vmatprep.mubr.bf16.mxu0 0
      %974 = vmatmul.mubr.bf16.gmra.mxu0 %v665
      %v975 = vpop.f32.mrf.mxu0
      %v976 = vadd.f32 0.0, %v975
      %v977 = vpop.f32.mrf.mxu0
      %v978 = vpop.f32.mrf.mxu0
      %v979 = vadd.f32 0.0, %v978
      %v980 = vpop.f32.mrf.mxu0
      %981 = vmatprep.mubr.bf16.mxu0 0
      %982 = vmatmul.mubr.bf16.gmra.mxu0 %v668
      %v983 = vpop.f32.mrf.mxu0
      %v984 = vadd.f32 0.0, %v983
      %v985 = vpop.f32.mrf.mxu0
      %v986 = vpop.f32.mrf.mxu0
      %v987 = vadd.f32 0.0, %v986
      %v988 = vpop.f32.mrf.mxu0
      %989 = vmatprep.mubr.bf16.mxu0 0
      %990 = vmatmul.mubr.bf16.gmra.mxu0 %v671
      %v991 = vpop.f32.mrf.mxu0
      %v992 = vadd.f32 0.0, %v991
      %v993 = vpop.f32.mrf.mxu0
      %v994 = vpop.f32.mrf.mxu0
      %v995 = vadd.f32 0.0, %v994
      %v996 = vpop.f32.mrf.mxu0
      %997 = vmatprep.mubr.bf16.mxu0 0
      %998 = vmatmul.mubr.bf16.gmra.mxu0 %v674
      %v999 = vpop.f32.mrf.mxu0
      %v1000 = vadd.f32 0.0, %v999
      %v1001 = vpop.f32.mrf.mxu0
      %v1002 = vpop.f32.mrf.mxu0
      %v1003 = vadd.f32 0.0, %v1002
      %v1004 = vpop.f32.mrf.mxu0
      %1005 = vmatprep.mubr.bf16.mxu0 0
      %1006 = vmatmul.mubr.bf16.gmra.mxu0 %v677
      %v1007 = vpop.f32.mrf.mxu0
      %v1008 = vadd.f32 0.0, %v1007
      %v1009 = vpop.f32.mrf.mxu0
      %v1010 = vpop.f32.mrf.mxu0
      %v1011 = vadd.f32 0.0, %v1010
      %v1012 = vpop.f32.mrf.mxu0
      %1013 = vmatprep.mubr.bf16.mxu0 0
      %1014 = vmatmul.mubr.bf16.gmra.mxu0 %v680
      %v1015 = vpop.f32.mrf.mxu0
      %v1016 = vadd.f32 0.0, %v1015
      %v1017 = vpop.f32.mrf.mxu0
      %v1018 = vpop.f32.mrf.mxu0
      %v1019 = vadd.f32 0.0, %v1018
      %v1020 = vpop.f32.mrf.mxu0
      %1021 = vmatprep.mubr.bf16.mxu0 0
      %1022 = vmatmul.mubr.bf16.gmra.mxu0 %v683
      %v1023 = vpop.f32.mrf.mxu0
      %v1024 = vadd.f32 0.0, %v1023
      %v1025 = vpop.f32.mrf.mxu0
      %v1026 = vpop.f32.mrf.mxu0
      %v1027 = vadd.f32 0.0, %v1026
      %v1028 = vpop.f32.mrf.mxu0
      %1029 = vmatprep.mubr.bf16.mxu0 0
      %1030 = vmatmul.mubr.bf16.gmra.mxu0 %v686
      %v1031 = vpop.f32.mrf.mxu0
      %v1032 = vadd.f32 0.0, %v1031
      %v1033 = vpop.f32.mrf.mxu0
      %v1034 = vpop.f32.mrf.mxu0
      %v1035 = vadd.f32 0.0, %v1034
      %v1036 = vpop.f32.mrf.mxu0
      %1037 = vmatprep.mubr.bf16.mxu0 0
      %1038 = vmatmul.mubr.bf16.gmra.mxu0 %v689
      %v1039 = vpop.f32.mrf.mxu0
      %v1040 = vadd.f32 0.0, %v1039
      %v1041 = vpop.f32.mrf.mxu0
      %v1042 = vpop.f32.mrf.mxu0
      %v1043 = vadd.f32 0.0, %v1042
      %v1044 = vpop.f32.mrf.mxu0
      %1045 = vmatprep.mubr.bf16.mxu0 0
      %1046 = vmatmul.mubr.bf16.gmra.mxu0 %v692
      %v1047 = vpop.f32.mrf.mxu0
      %v1048 = vadd.f32 0.0, %v1047
      %v1049 = vpop.f32.mrf.mxu0
      %v1050 = vpop.f32.mrf.mxu0
      %v1051 = vadd.f32 0.0, %v1050
      %v1052 = vpop.f32.mrf.mxu0
      %1053 = vmatprep.mubr.bf16.mxu0 0
      %1054 = vmatmul.mubr.bf16.gmra.mxu0 %v695
      %v1055 = vpop.f32.mrf.mxu0
      %v1056 = vadd.f32 0.0, %v1055
      %v1057 = vpop.f32.mrf.mxu0
      %v1058 = vpop.f32.mrf.mxu0
      %v1059 = vadd.f32 0.0, %v1058
      %v1060 = vpop.f32.mrf.mxu0
      %1061 = vmatprep.mubr.bf16.mxu0 0
      %1062 = vmatmul.mubr.bf16.gmra.mxu0 %v698
      %v1063 = vpop.f32.mrf.mxu0
      %v1064 = vadd.f32 0.0, %v1063
      %v1065 = vpop.f32.mrf.mxu0
      %v1066 = vpop.f32.mrf.mxu0
      %v1067 = vadd.f32 0.0, %v1066
      %v1068 = vpop.f32.mrf.mxu0
      %1069 = vmatprep.mubr.bf16.mxu0 0
      %1070 = vmatmul.mubr.bf16.gmra.mxu0 %v701
      %v1071 = vpop.f32.mrf.mxu0
      %v1072 = vadd.f32 0.0, %v1071
      %v1073 = vpop.f32.mrf.mxu0
      %v1074 = vpop.f32.mrf.mxu0
      %v1075 = vadd.f32 0.0, %v1074
      %v1076 = vpop.f32.mrf.mxu0
      %1077 = vmatprep.mubr.bf16.mxu0 0
      %1078 = vmatmul.mubr.bf16.gmra.mxu0 %v704
      %v1079 = vpop.f32.mrf.mxu0
      %v1080 = vadd.f32 0.0, %v1079
      %v1081 = vpop.f32.mrf.mxu0
      %v1082 = vpop.f32.mrf.mxu0
      %v1083 = vadd.f32 0.0, %v1082
      %v1084 = vpop.f32.mrf.mxu0
      %1085 = vmatprep.mubr.bf16.mxu0 0
      %1086 = vmatmul.mubr.bf16.gmra.mxu0 %v707
      %v1087 = vpop.f32.mrf.mxu0
      %v1088 = vadd.f32 0.0, %v1087
      %v1089 = vpop.f32.mrf.mxu0
      %v1090 = vpop.f32.mrf.mxu0
      %v1091 = vadd.f32 0.0, %v1090
      %v1092 = vpop.f32.mrf.mxu0
      %1093 = vmatprep.mubr.bf16.mxu0 0
      %1094 = vmatmul.mubr.bf16.gmra.mxu0 %v710
      %v1095 = vpop.f32.mrf.mxu0
      %v1096 = vadd.f32 0.0, %v1095
      %v1097 = vpop.f32.mrf.mxu0
      %v1098 = vpop.f32.mrf.mxu0
      %v1099 = vadd.f32 0.0, %v1098
      %v1100 = vpop.f32.mrf.mxu0
      %1101 = vmatprep.mubr.bf16.mxu0 0
      %1102 = vmatmul.mubr.bf16.gmra.mxu0 %v713
      %v1103 = vpop.f32.mrf.mxu0
      %v1104 = vadd.f32 0.0, %v1103
      %v1105 = vpop.f32.mrf.mxu0
      %v1106 = vpop.f32.mrf.mxu0
      %v1107 = vadd.f32 0.0, %v1106
      %v1108 = vpop.f32.mrf.mxu0
      %1109 = vmatprep.mubr.bf16.mxu0 0
      %1110 = vmatmul.mubr.bf16.gmra.mxu0 %v716
      %v1111 = vpop.f32.mrf.mxu0
      %v1112 = vadd.f32 0.0, %v1111
      %v1113 = vpop.f32.mrf.mxu0
      %v1114 = vpop.f32.mrf.mxu0
      %v1115 = vadd.f32 0.0, %v1114
      %v1116 = vpop.f32.mrf.mxu0
      %1117 = vmatprep.mubr.bf16.mxu0 0
      %1118 = vmatmul.mubr.bf16.gmra.mxu0 %v719
      %v1119 = vpop.f32.mrf.mxu0
      %v1120 = vadd.f32 0.0, %v1119
      %v1121 = vpop.f32.mrf.mxu0
      %v1122 = vpop.f32.mrf.mxu0
      %v1123 = vadd.f32 0.0, %v1122
      %v1124 = vpop.f32.mrf.mxu0
      %1125 = vmatprep.mubr.bf16.mxu0 0
      %1126 = vmatmul.mubr.bf16.gmra.mxu0 %v722
      %v1127 = vpop.f32.mrf.mxu0
      %v1128 = vadd.f32 0.0, %v1127
      %v1129 = vpop.f32.mrf.mxu0
      %v1130 = vpop.f32.mrf.mxu0
      %v1131 = vadd.f32 0.0, %v1130
      %v1132 = vpop.f32.mrf.mxu0
      %1133 = vmatprep.mubr.bf16.mxu0 0
      %1134 = vmatmul.mubr.bf16.gmra.mxu0 %v725
      %v1135 = vpop.f32.mrf.mxu0
      %v1136 = vadd.f32 0.0, %v1135
      %v1137 = vpop.f32.mrf.mxu0
      %v1138 = vpop.f32.mrf.mxu0
      %v1139 = vadd.f32 0.0, %v1138
      %v1140 = vpop.f32.mrf.mxu0
      %1141 = vmatprep.mubr.bf16.mxu0 0
      %1142 = vmatmul.mubr.bf16.gmra.mxu0 %v728
      %v1143 = vpop.f32.mrf.mxu0
      %v1144 = vadd.f32 0.0, %v1143
      %v1145 = vpop.f32.mrf.mxu0
      %v1146 = vpop.f32.mrf.mxu0
      %v1147 = vadd.f32 0.0, %v1146
      %v1148 = vpop.f32.mrf.mxu0
      %1149 = vmatprep.mubr.bf16.mxu0 0
      %1150 = vmatmul.mubr.bf16.gmra.mxu0 %v731
      %v1151 = vpop.f32.mrf.mxu0
      %v1152 = vadd.f32 0.0, %v1151
      %v1153 = vpop.f32.mrf.mxu0
      %v1154 = vpop.f32.mrf.mxu0
      %v1155 = vadd.f32 0.0, %v1154
      %v1156 = vpop.f32.mrf.mxu0
      %1157 = vmatprep.mubr.bf16.mxu0 0
      %1158 = vmatmul.mubr.bf16.gmra.mxu0 %v734
      %v1159 = vpop.f32.mrf.mxu0
      %v1160 = vadd.f32 0.0, %v1159
      %v1161 = vpop.f32.mrf.mxu0
      %v1162 = vpop.f32.mrf.mxu0
      %v1163 = vadd.f32 0.0, %v1162
      %v1164 = vpop.f32.mrf.mxu0
      %1165 = vmatprep.mubr.bf16.mxu0 0
      %1166 = vmatmul.mubr.bf16.gmra.mxu0 %v737
      %v1167 = vpop.f32.mrf.mxu0
      %v1168 = vadd.f32 0.0, %v1167
      %v1169 = vpop.f32.mrf.mxu0
      %v1170 = vpop.f32.mrf.mxu0
      %v1171 = vadd.f32 0.0, %v1170
      %v1172 = vpop.f32.mrf.mxu0
      %1173 = vmatprep.mubr.bf16.mxu0 0
      %1174 = vmatmul.mubr.bf16.gmra.mxu0 %v740
      %v1175 = vpop.f32.mrf.mxu0
      %v1176 = vadd.f32 0.0, %v1175
      %v1177 = vpop.f32.mrf.mxu0
      %v1178 = vpop.f32.mrf.mxu0
      %v1179 = vadd.f32 0.0, %v1178
      %v1180 = vpop.f32.mrf.mxu0
      %1181 = vmatprep.mubr.bf16.mxu0 0
      %1182 = vmatmul.mubr.bf16.gmra.mxu0 %v743
      %v1183 = vpop.f32.mrf.mxu0
      %v1184 = vadd.f32 0.0, %v1183
      %v1185 = vpop.f32.mrf.mxu0
      %v1186 = vpop.f32.mrf.mxu0
      %v1187 = vadd.f32 0.0, %v1186
      %v1188 = vpop.f32.mrf.mxu0
      %1189 = vmatprep.mubr.bf16.mxu0 0
      %1190 = vmatmul.mubr.bf16.gmra.mxu0 %v746
      %v1191 = vpop.f32.mrf.mxu0
      %v1192 = vadd.f32 0.0, %v1191
      %v1193 = vpop.f32.mrf.mxu0
      %v1194 = vpop.f32.mrf.mxu0
      %v1195 = vadd.f32 0.0, %v1194
      %v1196 = vpop.f32.mrf.mxu0
      %1197 = vmatprep.mubr.bf16.mxu0 0
      %1198 = vmatmul.mubr.bf16.gmra.mxu0 %v749
      %v1199 = vpop.f32.mrf.mxu0
      %v1200 = vadd.f32 0.0, %v1199
      %v1201 = vpop.f32.mrf.mxu0
      %v1202 = vpop.f32.mrf.mxu0
      %v1203 = vadd.f32 0.0, %v1202
      %v1204 = vpop.f32.mrf.mxu0
      %1205 = vmatprep.mubr.bf16.mxu0 0
      %1206 = vmatmul.mubr.bf16.gmra.mxu0 %v752
      %v1207 = vpop.f32.mrf.mxu0
      %v1208 = vadd.f32 0.0, %v1207
      %v1209 = vpop.f32.mrf.mxu0
      %v1210 = vpop.f32.mrf.mxu0
      %v1211 = vadd.f32 0.0, %v1210
      %v1212 = vpop.f32.mrf.mxu0
      %1213 = vmatprep.mubr.bf16.mxu0 0
      %1214 = vmatmul.mubr.bf16.gmra.mxu0 %v755
      %v1215 = vpop.f32.mrf.mxu0
      %v1216 = vadd.f32 0.0, %v1215
      %v1217 = vpop.f32.mrf.mxu0
      %v1218 = vpop.f32.mrf.mxu0
      %v1219 = vadd.f32 0.0, %v1218
      %v1220 = vpop.f32.mrf.mxu0
      %1221 = vmatprep.mubr.bf16.mxu0 0
      %1222 = vmatmul.mubr.bf16.gmra.mxu0 %v758
      %v1223 = vpop.f32.mrf.mxu0
      %v1224 = vadd.f32 0.0, %v1223
      %v1225 = vpop.f32.mrf.mxu0
      %v1226 = vpop.f32.mrf.mxu0
      %v1227 = vadd.f32 0.0, %v1226
      %v1228 = vpop.f32.mrf.mxu0
      %1229 = vmatprep.mubr.bf16.mxu0 0
      %1230 = vmatmul.mubr.bf16.gmra.mxu0 %v761
      %v1231 = vpop.f32.mrf.mxu0
      %v1232 = vadd.f32 0.0, %v1231
      %v1233 = vpop.f32.mrf.mxu0
      %v1234 = vpop.f32.mrf.mxu0
      %v1235 = vadd.f32 0.0, %v1234
      %v1236 = vpop.f32.mrf.mxu0
      %1237 = vmatprep.mubr.bf16.mxu0 0
      %1238 = vmatmul.mubr.bf16.gmra.mxu0 %v764
      %v1239 = vpop.f32.mrf.mxu0
      %v1240 = vadd.f32 0.0, %v1239
      %v1241 = vpop.f32.mrf.mxu0
      %v1242 = vpop.f32.mrf.mxu0
      %v1243 = vadd.f32 0.0, %v1242
      %v1244 = vpop.f32.mrf.mxu0
      %1245 = vmatprep.mubr.bf16.mxu0 0
      %1246 = vmatmul.mubr.bf16.gmra.mxu0 %v767
      %v1247 = vpop.f32.mrf.mxu0
      %v1248 = vadd.f32 0.0, %v1247
      %v1249 = vpop.f32.mrf.mxu0
      %v1250 = vpop.f32.mrf.mxu0
      %v1251 = vadd.f32 0.0, %v1250
      %v1252 = vpop.f32.mrf.mxu0
      %1253 = vmatprep.mubr.bf16.mxu0 0
      %1254 = vmatmul.mubr.bf16.gmra.mxu0 %v770
      %v1255 = vpop.f32.mrf.mxu0
      %v1256 = vadd.f32 0.0, %v1255
      %v1257 = vpop.f32.mrf.mxu0
      %v1258 = vpop.f32.mrf.mxu0
      %v1259 = vadd.f32 0.0, %v1258
      %v1260 = vpop.f32.mrf.mxu0
      %1261 = vmatprep.mubr.bf16.mxu0 0
      %1262 = vmatmul.mubr.bf16.gmra.mxu0 %v773
      %v1263 = vpop.f32.mrf.mxu0
      %v1264 = vadd.f32 0.0, %v1263
      %v1265 = vpop.f32.mrf.mxu0
      %v1266 = vpop.f32.mrf.mxu0
      %v1267 = vadd.f32 0.0, %v1266
      %v1268 = vpop.f32.mrf.mxu0
      %1269 = vmatprep.mubr.bf16.mxu0 0
      %1270 = vmatmul.mubr.bf16.gmra.mxu0 %v776
      %v1271 = vpop.f32.mrf.mxu0
      %v1272 = vadd.f32 0.0, %v1271
      %v1273 = vpop.f32.mrf.mxu0
      %v1274 = vpop.f32.mrf.mxu0
      %v1275 = vadd.f32 0.0, %v1274
      %v1276 = vpop.f32.mrf.mxu0
      %1277 = vmatprep.mubr.bf16.mxu0 0
      %1278 = vmatmul.mubr.bf16.gmra.mxu0 %v779
      %v1279 = vpop.f32.mrf.mxu0
      %v1280 = vadd.f32 0.0, %v1279
      %v1281 = vpop.f32.mrf.mxu0
      %v1282 = vpop.f32.mrf.mxu0
      %v1283 = vadd.f32 0.0, %v1282
      %v1284 = vpop.f32.mrf.mxu0
      %1285 = vmatprep.mubr.bf16.mxu0 0
      %1286 = vmatmul.mubr.bf16.gmra.mxu0 %v782
      %v1287 = vpop.f32.mrf.mxu0
      %v1288 = vadd.f32 0.0, %v1287
      %v1289 = vpop.f32.mrf.mxu0
      %v1290 = vpop.f32.mrf.mxu0
      %v1291 = vadd.f32 0.0, %v1290
      %v1292 = vpop.f32.mrf.mxu0
      %1293 = vmatprep.mubr.bf16.mxu0 0
      %1294 = vmatmul.mubr.bf16.gmra.mxu0 %v785
      %v1295 = vpop.f32.mrf.mxu0
      %v1296 = vadd.f32 0.0, %v1295
      %v1297 = vpop.f32.mrf.mxu0
      %v1298 = vpop.f32.mrf.mxu0
      %v1299 = vadd.f32 0.0, %v1298
      %v1300 = vpop.f32.mrf.mxu0
      %1301 = vmatprep.mubr.bf16.mxu0 0
      %1302 = vmatmul.mubr.bf16.gmra.mxu0 %v788
      %v1303 = vpop.f32.mrf.mxu0
      %v1304 = vadd.f32 0.0, %v1303
      %v1305 = vpop.f32.mrf.mxu0
      %v1306 = vpop.f32.mrf.mxu0
      %v1307 = vadd.f32 0.0, %v1306
      %v1308 = vpop.f32.mrf.mxu0
      %1309 = vmatprep.mubr.bf16.mxu0 0
      %1310 = vmatmul.mubr.bf16.gmra.mxu0 %v791
      %v1311 = vpop.f32.mrf.mxu0
      %v1312 = vadd.f32 0.0, %v1311
      %v1313 = vpop.f32.mrf.mxu0
      %v1314 = vpop.f32.mrf.mxu0
      %v1315 = vadd.f32 0.0, %v1314
      %v1316 = vpop.f32.mrf.mxu0
      %1317 = vmatprep.mubr.bf16.mxu0 0
      %1318 = vmatmul.mubr.bf16.gmra.mxu0 %v794
      %v1319 = vpop.f32.mrf.mxu0
      %v1320 = vadd.f32 0.0, %v1319
      %v1321 = vpop.f32.mrf.mxu0
      %v1322 = vpop.f32.mrf.mxu0
      %v1323 = vadd.f32 0.0, %v1322
      %v1324 = vpop.f32.mrf.mxu0
      %1325 = vmatprep.mubr.bf16.mxu0 0
      %1326 = vmatmul.mubr.bf16.gmra.mxu0 %v797
      %v1327 = vpop.f32.mrf.mxu0
      %v1328 = vadd.f32 0.0, %v1327
      %v1329 = vpop.f32.mrf.mxu0
      %v1330 = vpop.f32.mrf.mxu0
      %v1331 = vadd.f32 0.0, %v1330
      %v1332 = vpop.f32.mrf.mxu0
      %1333 = vmatprep.mubr.bf16.mxu0 0
      %1334 = vmatmul.mubr.bf16.gmra.mxu0 %v800
      %v1335 = vpop.f32.mrf.mxu0
      %v1336 = vadd.f32 0.0, %v1335
      %v1337 = vpop.f32.mrf.mxu0
      %v1338 = vpop.f32.mrf.mxu0
      %v1339 = vadd.f32 0.0, %v1338
      %v1340 = vpop.f32.mrf.mxu0
      %1341 = vmatprep.mubr.bf16.mxu0 0
      %1342 = vmatmul.mubr.bf16.gmra.mxu0 %v803
      %v1343 = vpop.f32.mrf.mxu0
      %v1344 = vadd.f32 0.0, %v1343
      %v1345 = vpop.f32.mrf.mxu0
      %v1346 = vpop.f32.mrf.mxu0
      %v1347 = vadd.f32 0.0, %v1346
      %v1348 = vpop.f32.mrf.mxu0
      %1349 = vdwg.mxu0
      %vm1350 = vcmask 392192
      %1351 = vst.msk [vmem:[%s145] sm:$0xff] %vm1350, %v840
      %1352 = vst.msk [vmem:[%s145 + $0x8] sm:$0xff] %vm1350, %v843
      %1353 = vst.msk [vmem:[%s145 + $0x10] sm:$0xff] %vm1350, %v848
      %1354 = vst.msk [vmem:[%s145 + $0x18] sm:$0xff] %vm1350, %v851
      %1355 = vst.msk [vmem:[%s145 + $0x20] sm:$0xff] %vm1350, %v856
      %1356 = vst.msk [vmem:[%s145 + $0x28] sm:$0xff] %vm1350, %v859
      %1357 = vst.msk [vmem:[%s145 + $0x30] sm:$0xff] %vm1350, %v864
      %1358 = vst.msk [vmem:[%s145 + $0x38] sm:$0xff] %vm1350, %v867
      %1359 = vst.msk [vmem:[%s145 + $0x40] sm:$0xff] %vm1350, %v872
      %1360 = vst.msk [vmem:[%s145 + $0x48] sm:$0xff] %vm1350, %v875
      %1361 = vst.msk [vmem:[%s145 + $0x50] sm:$0xff] %vm1350, %v880
      %1362 = vst.msk [vmem:[%s145 + $0x58] sm:$0xff] %vm1350, %v883
      %1363 = vst.msk [vmem:[%s145 + $0x60] sm:$0xff] %vm1350, %v888
      %1364 = vst.msk [vmem:[%s145 + $0x68] sm:$0xff] %vm1350, %v891
      %1365 = vst.msk [vmem:[%s145 + $0x70] sm:$0xff] %vm1350, %v896
      %1366 = vst.msk [vmem:[%s145 + $0x78] sm:$0xff] %vm1350, %v899
      %1367 = vst.msk [vmem:[%s145 + $0x80] sm:$0xff] %vm1350, %v904
      %1368 = vst.msk [vmem:[%s145 + $0x88] sm:$0xff] %vm1350, %v907
      %1369 = vst.msk [vmem:[%s145 + $0x90] sm:$0xff] %vm1350, %v912
      %1370 = vst.msk [vmem:[%s145 + $0x98] sm:$0xff] %vm1350, %v915
      %1371 = vst.msk [vmem:[%s145 + $0xa0] sm:$0xff] %vm1350, %v920
      %1372 = vst.msk [vmem:[%s145 + $0xa8] sm:$0xff] %vm1350, %v923
      %1373 = vst.msk [vmem:[%s145 + $0xb0] sm:$0xff] %vm1350, %v928
      %1374 = vst.msk [vmem:[%s145 + $0xb8] sm:$0xff] %vm1350, %v931
      %1375 = vst.msk [vmem:[%s145 + $0xc0] sm:$0xff] %vm1350, %v936
      %1376 = vst.msk [vmem:[%s145 + $0xc8] sm:$0xff] %vm1350, %v939
      %1377 = vst.msk [vmem:[%s145 + $0xd0] sm:$0xff] %vm1350, %v944
      %1378 = vst.msk [vmem:[%s145 + $0xd8] sm:$0xff] %vm1350, %v947
      %1379 = vst.msk [vmem:[%s145 + $0xe0] sm:$0xff] %vm1350, %v952
      %1380 = vst.msk [vmem:[%s145 + $0xe8] sm:$0xff] %vm1350, %v955
      %1381 = vst.msk [vmem:[%s145 + $0xf0] sm:$0xff] %vm1350, %v960
      %1382 = vst.msk [vmem:[%s145 + $0xf8] sm:$0xff] %vm1350, %v963
      %1383 = vst.msk [vmem:[%s145 + $0x100] sm:$0xff] %vm1350, %v968
      %1384 = vst.msk [vmem:[%s145 + $0x108] sm:$0xff] %vm1350, %v971
      %1385 = vst.msk [vmem:[%s145 + $0x110] sm:$0xff] %vm1350, %v976
      %1386 = vst.msk [vmem:[%s145 + $0x118] sm:$0xff] %vm1350, %v979
      %1387 = vst.msk [vmem:[%s145 + $0x120] sm:$0xff] %vm1350, %v984
      %1388 = vst.msk [vmem:[%s145 + $0x128] sm:$0xff] %vm1350, %v987
      %1389 = vst.msk [vmem:[%s145 + $0x130] sm:$0xff] %vm1350, %v992
      %1390 = vst.msk [vmem:[%s145 + $0x138] sm:$0xff] %vm1350, %v995
      %1391 = vst.msk [vmem:[%s145 + $0x140] sm:$0xff] %vm1350, %v1000
      %1392 = vst.msk [vmem:[%s145 + $0x148] sm:$0xff] %vm1350, %v1003
      %1393 = vst.msk [vmem:[%s145 + $0x150] sm:$0xff] %vm1350, %v1008
      %1394 = vst.msk [vmem:[%s145 + $0x158] sm:$0xff] %vm1350, %v1011
      %1395 = vst.msk [vmem:[%s145 + $0x160] sm:$0xff] %vm1350, %v1016
      %1396 = vst.msk [vmem:[%s145 + $0x168] sm:$0xff] %vm1350, %v1019
      %1397 = vst.msk [vmem:[%s145 + $0x170] sm:$0xff] %vm1350, %v1024
      %1398 = vst.msk [vmem:[%s145 + $0x178] sm:$0xff] %vm1350, %v1027
      %1399 = vst.msk [vmem:[%s145 + $0x180] sm:$0xff] %vm1350, %v1032
      %1400 = vst.msk [vmem:[%s145 + $0x188] sm:$0xff] %vm1350, %v1035
      %1401 = vst.msk [vmem:[%s145 + $0x190] sm:$0xff] %vm1350, %v1040
      %1402 = vst.msk [vmem:[%s145 + $0x198] sm:$0xff] %vm1350, %v1043
      %1403 = vst.msk [vmem:[%s145 + $0x1a0] sm:$0xff] %vm1350, %v1048
      %1404 = vst.msk [vmem:[%s145 + $0x1a8] sm:$0xff] %vm1350, %v1051
      %1405 = vst.msk [vmem:[%s145 + $0x1b0] sm:$0xff] %vm1350, %v1056
      %1406 = vst.msk [vmem:[%s145 + $0x1b8] sm:$0xff] %vm1350, %v1059
      %1407 = vst.msk [vmem:[%s145 + $0x1c0] sm:$0xff] %vm1350, %v1064
      %1408 = vst.msk [vmem:[%s145 + $0x1c8] sm:$0xff] %vm1350, %v1067
      %1409 = vst.msk [vmem:[%s145 + $0x1d0] sm:$0xff] %vm1350, %v1072
      %1410 = vst.msk [vmem:[%s145 + $0x1d8] sm:$0xff] %vm1350, %v1075
      %1411 = vst.msk [vmem:[%s145 + $0x1e0] sm:$0xff] %vm1350, %v1080
      %1412 = vst.msk [vmem:[%s145 + $0x1e8] sm:$0xff] %vm1350, %v1083
      %1413 = vst.msk [vmem:[%s145 + $0x1f0] sm:$0xff] %vm1350, %v1088
      %1414 = vst.msk [vmem:[%s145 + $0x1f8] sm:$0xff] %vm1350, %v1091
      %1415 = vst.msk [vmem:[%s145 + $0x200] sm:$0xff] %vm1350, %v1096
      %1416 = vst.msk [vmem:[%s145 + $0x208] sm:$0xff] %vm1350, %v1099
      %1417 = vst.msk [vmem:[%s145 + $0x210] sm:$0xff] %vm1350, %v1104
      %1418 = vst.msk [vmem:[%s145 + $0x218] sm:$0xff] %vm1350, %v1107
      %1419 = vst.msk [vmem:[%s145 + $0x220] sm:$0xff] %vm1350, %v1112
      %1420 = vst.msk [vmem:[%s145 + $0x228] sm:$0xff] %vm1350, %v1115
      %1421 = vst.msk [vmem:[%s145 + $0x230] sm:$0xff] %vm1350, %v1120
      %1422 = vst.msk [vmem:[%s145 + $0x238] sm:$0xff] %vm1350, %v1123
      %1423 = vst.msk [vmem:[%s145 + $0x240] sm:$0xff] %vm1350, %v1128
      %1424 = vst.msk [vmem:[%s145 + $0x248] sm:$0xff] %vm1350, %v1131
      %1425 = vst.msk [vmem:[%s145 + $0x250] sm:$0xff] %vm1350, %v1136
      %1426 = vst.msk [vmem:[%s145 + $0x258] sm:$0xff] %vm1350, %v1139
      %1427 = vst.msk [vmem:[%s145 + $0x260] sm:$0xff] %vm1350, %v1144
      %1428 = vst.msk [vmem:[%s145 + $0x268] sm:$0xff] %vm1350, %v1147
      %1429 = vst.msk [vmem:[%s145 + $0x270] sm:$0xff] %vm1350, %v1152
      %1430 = vst.msk [vmem:[%s145 + $0x278] sm:$0xff] %vm1350, %v1155
      %1431 = vst.msk [vmem:[%s145 + $0x280] sm:$0xff] %vm1350, %v1160
      %1432 = vst.msk [vmem:[%s145 + $0x288] sm:$0xff] %vm1350, %v1163
      %1433 = vst.msk [vmem:[%s145 + $0x290] sm:$0xff] %vm1350, %v1168
      %1434 = vst.msk [vmem:[%s145 + $0x298] sm:$0xff] %vm1350, %v1171
      %1435 = vst.msk [vmem:[%s145 + $0x2a0] sm:$0xff] %vm1350, %v1176
      %1436 = vst.msk [vmem:[%s145 + $0x2a8] sm:$0xff] %vm1350, %v1179
      %1437 = vst.msk [vmem:[%s145 + $0x2b0] sm:$0xff] %vm1350, %v1184
      %1438 = vst.msk [vmem:[%s145 + $0x2b8] sm:$0xff] %vm1350, %v1187
      %1439 = vst.msk [vmem:[%s145 + $0x2c0] sm:$0xff] %vm1350, %v1192
      %1440 = vst.msk [vmem:[%s145 + $0x2c8] sm:$0xff] %vm1350, %v1195
      %1441 = vst.msk [vmem:[%s145 + $0x2d0] sm:$0xff] %vm1350, %v1200
      %1442 = vst.msk [vmem:[%s145 + $0x2d8] sm:$0xff] %vm1350, %v1203
      %1443 = vst.msk [vmem:[%s145 + $0x2e0] sm:$0xff] %vm1350, %v1208
      %1444 = vst.msk [vmem:[%s145 + $0x2e8] sm:$0xff] %vm1350, %v1211
      %1445 = vst.msk [vmem:[%s145 + $0x2f0] sm:$0xff] %vm1350, %v1216
      %1446 = vst.msk [vmem:[%s145 + $0x2f8] sm:$0xff] %vm1350, %v1219
      %1447 = vst.msk [vmem:[%s145 + $0x300] sm:$0xff] %vm1350, %v1224
      %1448 = vst.msk [vmem:[%s145 + $0x308] sm:$0xff] %vm1350, %v1227
      %1449 = vst.msk [vmem:[%s145 + $0x310] sm:$0xff] %vm1350, %v1232
      %1450 = vst.msk [vmem:[%s145 + $0x318] sm:$0xff] %vm1350, %v1235
      %1451 = vst.msk [vmem:[%s145 + $0x320] sm:$0xff] %vm1350, %v1240
      %1452 = vst.msk [vmem:[%s145 + $0x328] sm:$0xff] %vm1350, %v1243
      %1453 = vst.msk [vmem:[%s145 + $0x330] sm:$0xff] %vm1350, %v1248
      %1454 = vst.msk [vmem:[%s145 + $0x338] sm:$0xff] %vm1350, %v1251
      %1455 = vst.msk [vmem:[%s145 + $0x340] sm:$0xff] %vm1350, %v1256
      %1456 = vst.msk [vmem:[%s145 + $0x348] sm:$0xff] %vm1350, %v1259
      %1457 = vst.msk [vmem:[%s145 + $0x350] sm:$0xff] %vm1350, %v1264
      %1458 = vst.msk [vmem:[%s145 + $0x358] sm:$0xff] %vm1350, %v1267
      %1459 = vst.msk [vmem:[%s145 + $0x360] sm:$0xff] %vm1350, %v1272
      %1460 = vst.msk [vmem:[%s145 + $0x368] sm:$0xff] %vm1350, %v1275
      %1461 = vst.msk [vmem:[%s145 + $0x370] sm:$0xff] %vm1350, %v1280
      %1462 = vst.msk [vmem:[%s145 + $0x378] sm:$0xff] %vm1350, %v1283
      %1463 = vst.msk [vmem:[%s145 + $0x380] sm:$0xff] %vm1350, %v1288
      %1464 = vst.msk [vmem:[%s145 + $0x388] sm:$0xff] %vm1350, %v1291
      %1465 = vst.msk [vmem:[%s145 + $0x390] sm:$0xff] %vm1350, %v1296
      %1466 = vst.msk [vmem:[%s145 + $0x398] sm:$0xff] %vm1350, %v1299
      %1467 = vst.msk [vmem:[%s145 + $0x3a0] sm:$0xff] %vm1350, %v1304
      %1468 = vst.msk [vmem:[%s145 + $0x3a8] sm:$0xff] %vm1350, %v1307
      %1469 = vst.msk [vmem:[%s145 + $0x3b0] sm:$0xff] %vm1350, %v1312
      %1470 = vst.msk [vmem:[%s145 + $0x3b8] sm:$0xff] %vm1350, %v1315
      %1471 = vst.msk [vmem:[%s145 + $0x3c0] sm:$0xff] %vm1350, %v1320
      %1472 = vst.msk [vmem:[%s145 + $0x3c8] sm:$0xff] %vm1350, %v1323
      %1473 = vst.msk [vmem:[%s145 + $0x3d0] sm:$0xff] %vm1350, %v1328
      %1474 = vst.msk [vmem:[%s145 + $0x3d8] sm:$0xff] %vm1350, %v1331
      %1475 = vst.msk [vmem:[%s145 + $0x3e0] sm:$0xff] %vm1350, %v1336
      %1476 = vst.msk [vmem:[%s145 + $0x3e8] sm:$0xff] %vm1350, %v1339
      %1477 = vst.msk [vmem:[%s145 + $0x3f0] sm:$0xff] %vm1350, %v1344
      %1478 = vst.msk [vmem:[%s145 + $0x3f8] sm:$0xff] %vm1350, %v1347
      %s1479 = smul.u32 128, %s13
      %p1480 = scmp.lt.s32.totalorder %s1479, 255
      %s1481 = scalar_select %p1480, %s1479, 255
      %s1482 = smul.addr %s1481, 8
      %s1483 = scalar_lea.vmem %s2, %s1482
      // Predicated region
      $region29: #{conv_decoder_forward.11} parent=27 // pred_check
        %p1484 = pneg %p78
      $region30: #{conv_decoder_forward.11} parent=27 // pred_check_branch
        %1486 = sbr.rel (%p1484) target = $region32
      $region31: #{conv_decoder_forward.11} parent=27 // pred_region
        %s1487 = smul.u32 128, %s13
      $region32: #{conv_decoder_forward.11} parent=27 // pred_fallthru
        _
    $region28: #{conv_decoder_forward.11} parent=5 // pred_fallthru
      _
    %p1488 = scmp.le.s32.totalorder 2, %s8
    // Predicated region
    $region33: #{conv_decoder_forward.11} parent=5 // pred_check
      %p1489 = pneg %p1488
    $region34: #{conv_decoder_forward.11} parent=5 // pred_check_branch
      %1491 = sbr.rel (%p1489) target = $region36
    $region35: #{conv_decoder_forward.11} parent=5 // pred_region
      %s1492 = ssub.s32 %s8, 2
      // Predicated region
      $region37: #{conv_decoder_forward.11} parent=35 // pred_check
        %p1493 = pneg %p84
      $region38: #{conv_decoder_forward.11} parent=35 // pred_check_branch
        %1495 = sbr.rel (%p1493) target = $region40
      $region39: #{conv_decoder_forward.11} parent=35 // pred_region
        %s1496 = smul.u32 128, %s14
        %p1497 = scmp.lt.s32.totalorder %s1496, 255
        %s1498 = scalar_select %p1497, %s1496, 255
        %s1499 = smul.addr %s1498, 8
        %s1500 = scalar_lea.vmem %s2, %s1499
      $region40: #{conv_decoder_forward.11} parent=35 // pred_fallthru
        _
    $region36: #{conv_decoder_forward.11} parent=5 // pred_fallthru
      _
  $region6: #{conv_decoder_forward.11} parent=0 // loop_footer
    %s12 = sadd.s32 1, %s8
  $region7: #{conv_decoder_forward.11} parent=0 // loop_footer_branch
    %7 = sbr.rel target = $region3
  $region8: #{conv_decoder_forward.11} parent=0 // loop_exit
    _

</llo_original>
